<compile_context>
chip_gen: v7x
topology: tpu7x:2x2x1
jax: 0.10.0
libtpu: 0.0.40
codegen_flags: <defaults>
</compile_context>

<pallas_src>
import functools

import jax
import jax.numpy as jnp
from jax.experimental import pallas as pl
from jax.experimental.pallas import tpu as pltpu

# ----------------------- small, module-consistent sizes -----------------------
B = 2          # batch of graphs (state.shape[0])
N = 8          # n_agents (nodes per fully-connected graph, state.shape[1])
D_STATE = 16   # d_state
D_ACTION = 4   # d_action
HID = 32       # hidden_dim
MLP = 128      # hard-coded 128-wide layers in actor/value/gate heads
H1 = 2         # gat1 heads (concat=True  -> 2*HID features)
H2 = 1         # gat2 heads (concat=False -> HID features)
LANES = 128    # lane width of the output tile / state padding
W_LANES = 256  # lane width of the parameter slabs (for the [aw1|gw1] fusion)

PARAM_NAMES = (
    "wl1", "bl1", "wr1", "br1", "att1", "bias1",     # GATv2Conv #1
    "wl2", "bl2", "wr2", "br2", "att2", "bias2",     # GATv2Conv #2
    "aw1", "ab1", "aw2", "ab2", "aw3", "ab3",        # actor_head
    "vw1", "vb1", "vw2", "vb2", "vw3", "vb3",        # value_head
    "gw1", "gb1", "gw2", "gb2",                      # att_pool gate_nn
)

# ----------------------------- slab layouts ------------------------------------
# Weight slab (bf16, 256 lanes).  Entries are (name, rows, cols-read-by-kernel);
# real data sits at the top-left of each region, the rest is zero.  All row
# offsets / counts are multiples of 16 (bf16 sublane packing).
_W_LAYOUT = (
    ("w_gat1",   128, 128),       # [wl1 | wr1], real rows 0:16 (K padded to 128)
    ("att1_blk", 2 * HID, H1),    # block-diag: col h = att1[h] in rows h*32:(h+1)*32
    ("w_gat2",   2 * HID, 2 * HID),  # [wl2 | wr2]
    ("att2_col", HID, 1),         # att2 as a (32,1) column
    ("aw1gw1",   HID, 2 * MLP),   # [aw1 | gw1]  (256 lanes)
    ("aw2",      MLP, MLP),
    ("aw3",      MLP, LANES),     # real cols 0:4, zero-padded -> lane-dense output
    ("vw1",      HID, MLP),
    ("vw2",      MLP, MLP),
    ("vw3",      MLP, LANES),     # real col 0
    ("gw2",      MLP, 1),
)
W_OFF = {}
_off = 0
for _name, _r, _c in _W_LAYOUT:
    W_OFF[_name] = (_off, _r, _c)
    _off += _r
W_ROWS = _off                      # 992
assert W_ROWS % 16 == 0 and all(v[0] % 16 == 0 for v in W_OFF.values())

# Bias slab (f32, 256 lanes): one row per vector (name, cols-read-by-kernel).
_B_LAYOUT = (
    ("b_gat1", 2 * 2 * HID),   # [bl1 | br1]
    ("bias1",  2 * HID),
    ("b_gat2", 2 * HID),       # [bl2 | br2]
    ("bias2",  HID),
    ("ab1gb1", 2 * MLP),       # [ab1 | gb1]
    ("ab2",    MLP),
    ("ab3",    LANES),         # real cols 0:4
    ("vb1",    MLP),
    ("vb2",    MLP),
    ("vb3",    LANES),         # real col 0
    ("gb2",    1),
)
B_OFF = {name: (i, c) for i, (name, c) in enumerate(_B_LAYOUT)}
B_ROWS = ((len(_B_LAYOUT) + 7) // 8) * 8   # 16


# ------------------------------ math helpers ---------------------------------
def _gelu(x):
    # exact (erf-based) GELU, matching torch F.gelu default
    return 0.5 * x * (1.0 + jax.lax.erf(x * 0.7071067811865476))


def _leaky_relu(x, slope=0.2):
    return jnp.where(x > 0, x, slope * x)


def _layer_norm(x, eps=1e-5):
    mu = jnp.mean(x, axis=-1, keepdims=True)
    var = jnp.mean(jnp.square(x - mu), axis=-1, keepdims=True)
    return (x - mu) * jax.lax.rsqrt(var + eps)


# --------------------------------- kernel ------------------------------------
def _make_kernel(b, n, out_rows):
    bn = b * n

    def kernel(x_ref, w_ref, p_ref, out_ref):
        # ---- slab accessors (static offsets -> zero-cost ref views) ----
        def W(name):
            off, r, c = W_OFF[name]
            return w_ref[off:off + r, :c]

        def Bv(name):
            row, c = B_OFF[name]
            return p_ref[row:row + 1, :c]

        def dot(a, w):
            # bf16 MXU operands, f32 accumulation; elementwise math stays f32.
            return jnp.dot(a.astype(jnp.bfloat16), w,
                           preferred_element_type=jnp.float32)

        x = x_ref[...]                                      # (bn, 128) f32, real cols 0:16

        # ---------- gat1: ONE fused [wl1|wr1] dot (K zero-padded to 128) ----------
        glr = dot(x, W("w_gat1")) + Bv("b_gat1")            # (bn, 128) = [gl(h0|h1)|gr(h0|h1)]
        gl = glr[:, :2 * HID]                               # heads stacked on lanes
        gr = glr[:, 2 * HID:]
        glb = gl.reshape(b, n, 2 * HID)
        grb = gr.reshape(b, n, 2 * HID)

        # dense GATv2 attention over the fully-connected graph, both heads at once
        s = _leaky_relu(grb[:, :, None, :] + glb[:, None, :, :])     # (b, n, n, 64)
        logits = dot(s.reshape(bn * n, 2 * HID), W("att1_blk"))      # MXU: (b*n*n, 2)
        logits = logits.reshape(b, n, n, H1)
        m = jnp.max(logits, axis=2, keepdims=True)
        e = jnp.exp(logits - m)
        alpha = e * pl.reciprocal(jnp.sum(e, axis=2, keepdims=True), approx=True)

        heads = []
        for h in range(H1):                                  # MXU aggregation per head
            a_h = alpha[..., h].astype(jnp.bfloat16)                     # (b, n, n)
            g_h = glb[..., h * HID:(h + 1) * HID].astype(jnp.bfloat16)   # (b, n, 32)
            heads.append(jnp.einsum("bij,bjd->bid", a_h, g_h,
                                    preferred_element_type=jnp.float32))
        h1 = jnp.concatenate(heads, axis=-1).reshape(bn, 2 * HID)        # (bn, 64)
        h1 = _gelu(h1 + Bv("bias1"))
        h1 = _layer_norm(h1)                                  # F.layer_norm, no affine

        # ---------- gat2: ONE fused [wl2|wr2] dot ----------
        glr2 = dot(h1, W("w_gat2")) + Bv("b_gat2")            # (bn, 64) = [gl2 | gr2]
        gl2b = glr2[:, :HID].reshape(b, n, HID)
        gr2b = glr2[:, HID:].reshape(b, n, HID)
        s2 = _leaky_relu(gr2b[:, :, None, :] + gl2b[:, None, :, :])      # (b, n, n, 32)
        lg2 = dot(s2.reshape(bn * n, HID), W("att2_col")).reshape(b, n, n)
        m2 = jnp.max(lg2, axis=2, keepdims=True)
        e2 = jnp.exp(lg2 - m2)
        al2 = e2 * pl.reciprocal(jnp.sum(e2, axis=2, keepdims=True), approx=True)
        o2 = jnp.einsum("bij,bjd->bid", al2.astype(jnp.bfloat16),
                        gl2b.astype(jnp.bfloat16),
                        preferred_element_type=jnp.float32)
        node = _gelu(o2.reshape(bn, HID) + Bv("bias2"))       # (bn, 32)

        # ---------- fused actor-layer1 | gate-layer1 (one 256-lane dot) ----------
        ag = _gelu(dot(node, W("aw1gw1")) + Bv("ab1gb1"))     # (bn, 256)
        a1 = ag[:, :MLP]                                      # actor hidden
        g1 = ag[:, MLP:]                                      # gate hidden

        # ---------- AttentionalAggregation: softmax over the n nodes per graph ----------
        gate = dot(g1, W("gw2")) + Bv("gb2")                  # (bn, 1)
        gateb = gate.reshape(b, n, 1)
        mg = jnp.max(gateb, axis=1, keepdims=True)
        eg = jnp.exp(gateb - mg)
        wg = eg / jnp.sum(eg, axis=1, keepdims=True)          # exact recip (tiny, value path)
        emb = jnp.sum(wg * node.reshape(b, n, HID), axis=1)   # (b, 32)

        # ---------- value head (vw3/vb3 lane-padded to 128 -> dense store) ----------
        v = _gelu(dot(emb, W("vw1")) + Bv("vb1"))
        v = _gelu(dot(v, W("vw2")) + Bv("vb2"))
        val = dot(v, W("vw3")) + Bv("vb3")                    # (b, 128)

        # ---------- actor head (aw3/ab3 lane-padded to 128 -> dense store) ----------
        a2 = _gelu(dot(a1, W("aw2")) + Bv("ab2"))
        act = dot(a2, W("aw3")) + Bv("ab3")                   # (bn, 128)

        # ---------- single merged lane-dense output block ----------
        parts = [act, val]
        tail = out_rows - bn - b
        if tail:
            parts.append(jnp.zeros((tail, LANES), jnp.float32))
        out_ref[...] = jnp.concatenate(parts, axis=0)

    return kernel


# ---------------------------- parameter packing --------------------------------
def pack_params(p):
    """Pack the 28 named parameters into one bf16 weight slab + one f32 bias slab.

    Call ONCE per parameter set (not in the per-step hot path)."""
    w = jnp.zeros((W_ROWS, W_LANES), jnp.float32)

    def put(w, name, arr, r0=0, c0=0):
        arr = jnp.asarray(arr, jnp.float32)
        off = W_OFF[name][0]
        return w.at[off + r0:off + r0 + arr.shape[0], c0:c0 + arr.shape[1]].set(arr)

    w = put(w, "w_gat1", p["wl1"], 0, 0)                 # (16, 64)
    w = put(w, "w_gat1", p["wr1"], 0, 2 * HID)           # (16, 64) @ cols 64:128
    w = put(w, "att1_blk", p["att1"][0].reshape(HID, 1), 0, 0)
    w = put(w, "att1_blk", p["att1"][1].reshape(HID, 1), HID, 1)
    w = put(w, "w_gat2", p["wl2"], 0, 0)                 # (64, 32)
    w = put(w, "w_gat2", p["wr2"], 0, HID)               # (64, 32) @ cols 32:64
    w = put(w, "att2_col", p["att2"].reshape(HID, 1), 0, 0)
    w = put(w, "aw1gw1", p["aw1"], 0, 0)
    w = put(w, "aw1gw1", p["gw1"], 0, MLP)
    w = put(w, "aw2", p["aw2"])
    w = put(w, "aw3", p["aw3"])
    w = put(w, "vw1", p["vw1"])
    w = put(w, "vw2", p["vw2"])
    w = put(w, "vw3", p["vw3"])
    w = put(w, "gw2", p["gw2"])
    wslab = w.astype(jnp.bfloat16)

    s = jnp.zeros((B_ROWS, W_LANES), jnp.float32)

    def putb(s, name, arr, c0=0):
        arr = jnp.asarray(arr, jnp.float32).reshape(1, -1)
        row = B_OFF[name][0]
        return s.at[row:row + 1, c0:c0 + arr.shape[1]].set(arr)

    s = putb(s, "b_gat1", p["bl1"], 0)
    s = putb(s, "b_gat1", p["br1"], 2 * HID)
    s = putb(s, "bias1", p["bias1"])
    s = putb(s, "b_gat2", p["bl2"], 0)
    s = putb(s, "b_gat2", p["br2"], HID)
    s = putb(s, "bias2", p["bias2"])
    s = putb(s, "ab1gb1", p["ab1"], 0)
    s = putb(s, "ab1gb1", p["gb1"], MLP)
    s = putb(s, "ab2", p["ab2"])
    s = putb(s, "ab3", p["ab3"])
    s = putb(s, "vb1", p["vb1"])
    s = putb(s, "vb2", p["vb2"])
    s = putb(s, "vb3", p["vb3"])
    s = putb(s, "gb2", p["gb2"])
    return wslab, s


# -------------------------------- wrapper -------------------------------------
@functools.lru_cache(maxsize=None)
def _build_forward(b, n):
    """Build (and cache) the pallas_call for a given (batch, n_agents)."""
    bn = b * n
    out_rows = ((bn + b + 7) // 8) * 8
    kernel = _make_kernel(b, n, out_rows)
    call = pl.pallas_call(
        kernel,
        grid=(1,),
        in_specs=[
            pl.BlockSpec((bn, LANES), lambda i: (0, 0)),
            pl.BlockSpec((W_ROWS, W_LANES), lambda i: (0, 0)),
            pl.BlockSpec((B_ROWS, W_LANES), lambda i: (0, 0)),
        ],
        out_specs=pl.BlockSpec((out_rows, LANES), lambda i: (0, 0)),
        out_shape=jax.ShapeDtypeStruct((out_rows, LANES), jnp.float32),
        compiler_params=pltpu.CompilerParams(dimension_semantics=("arbitrary",)),
    )
    return call


@jax.jit
def actor_critic_forward(state, wslab, bslab):
    """state: (B, N, D_STATE), slabs from pack_params.

    Returns (action_mean (B, N*D_ACTION), value (B, 1))."""
    b, n, d = state.shape
    bn = b * n
    fwd = _build_forward(b, n)
    x = state.reshape(bn, d).astype(jnp.float32)
    x = jnp.pad(x, ((0, 0), (0, LANES - d)))          # lane-dense input DMA
    out = fwd(x, wslab, bslab)
    # matches .reshape((B, N, d_action)).flatten(start_dim=1)
    action_mean = out[:bn, :D_ACTION].reshape(b, n * D_ACTION)
    value = out[bn:bn + b, :1]
    return action_mean, value


# ----------------------- deterministic parameter init -------------------------
def init_params(key):
    shapes = {
        "wl1": (D_STATE, H1 * HID), "bl1": (1, H1 * HID),
        "wr1": (D_STATE, H1 * HID), "br1": (1, H1 * HID),
        "att1": (H1, HID), "bias1": (1, H1 * HID),
        "wl2": (H1 * HID, HID), "bl2": (1, HID),
        "wr2": (H1 * HID, HID), "br2": (1, HID),
        "att2": (H2, HID), "bias2": (1, HID),
        "aw1": (HID, MLP), "ab1": (1, MLP),
        "aw2": (MLP, MLP), "ab2": (1, MLP),
        "aw3": (MLP, D_ACTION), "ab3": (1, D_ACTION),
        "vw1": (HID, MLP), "vb1": (1, MLP),
        "vw2": (MLP, MLP), "vb2": (1, MLP),
        "vw3": (MLP, 1), "vb3": (1, 1),
        "gw1": (HID, MLP), "gb1": (1, MLP),
        "gw2": (MLP, 1), "gb2": (1, 1),
    }
    keys = jax.random.split(key, len(PARAM_NAMES))
    return {
        name: (0.1 * jax.random.normal(k, shapes[name])).astype(jnp.float32)
        for name, k in zip(PARAM_NAMES, keys)
    }


# ---------------------------- pure-JAX reference -------------------------------
def _gatv2_dense(x, wl, bl, wr, br, att, heads, c):
    """Dense GATv2 over a fully-connected graph with self-loops (f32 reference)."""
    gl = jnp.dot(x, wl, preferred_element_type=jnp.float32) + bl
    gr = jnp.dot(x, wr, preferred_element_type=jnp.float32) + br
    outs = []
    for h in range(heads):
        glh = gl[:, h * c:(h + 1) * c]
        grh = gr[:, h * c:(h + 1) * c]
        s = _leaky_relu(grh[:, None, :] + glh[None, :, :])
        logits = jnp.sum(s * att[h:h + 1, :][None, :, :], axis=-1)
        m = jnp.max(logits, axis=1, keepdims=True)
        e = jnp.exp(logits - m)
        alpha = e / jnp.sum(e, axis=1, keepdims=True)
        outs.append(jnp.dot(alpha, glh, preferred_element_type=jnp.float32))
    return outs[0] if heads == 1 else jnp.concatenate(outs, axis=1)


def reference_forward(state, p):
    def per_graph(x):
        h = _gatv2_dense(x, p["wl1"], p["bl1"], p["wr1"], p["br1"], p["att1"], H1, HID)
        h = _layer_norm(_gelu(h + p["bias1"]))
        h = _gatv2_dense(h, p["wl2"], p["bl2"], p["wr2"], p["br2"], p["att2"], H2, HID)
        node = _gelu(h + p["bias2"])
        gate = _gelu(node @ p["gw1"] + p["gb1"]) @ p["gw2"] + p["gb2"]
        w = jax.nn.softmax(gate, axis=0)
        emb = jnp.sum(w * node, axis=0, keepdims=True)
        v = _gelu(emb @ p["vw1"] + p["vb1"])
        v = _gelu(v @ p["vw2"] + p["vb2"])
        v = v @ p["vw3"] + p["vb3"]
        a = _gelu(node @ p["aw1"] + p["ab1"])
        a = _gelu(a @ p["aw2"] + p["ab2"])
        a = a @ p["aw3"] + p["ab3"]
        return a, v[0]
    a, v = jax.vmap(per_graph)(state)
    return a.reshape(state.shape[0], -1), v


# ----------------------------------- main --------------------------------------
if __name__ == "__main__":
    key = jax.random.PRNGKey(0)
    k_state, k_params = jax.random.split(key)
    state = jax.random.normal(k_state, (B, N, D_STATE), dtype=jnp.float32)
    params = init_params(k_params)

    # packed once (outside the per-step hot path)
    wslab, bslab = pack_params(params)
    jax.block_until_ready((wslab, bslab))

    action_mean, value = actor_critic_forward(state, wslab, bslab)
    jax.block_until_ready((action_mean, value))
    # second call exercises the cached, already-compiled path (no retrace)
    action_mean, value = actor_critic_forward(state, wslab, bslab)
    jax.block_until_ready((action_mean, value))

    ref_action, ref_value = reference_forward(state, params)
    assert action_mean.shape == (B, N * D_ACTION) and value.shape == (B, 1)
    # bf16 MXU operands + approx reciprocals in the attention softmaxes bound
    # the error well below this; elementwise math remains f32.
    assert jnp.allclose(action_mean, ref_action, atol=1e-2, rtol=1e-2)
    assert jnp.allclose(value, ref_value, atol=1e-2, rtol=1e-2)

    print("KERNEL_OK")
</pallas_src>

<mosaic_0001>
module attributes {stable_mosaic.version = 11 : i64} {
  func.func @kernel(%arg0: i32, %arg1: memref<16x128xf32, #tpu.memory_space<vmem>>, %arg2: memref<992x256xbf16, #tpu.memory_space<vmem>>, %arg3: memref<16x256xf32, #tpu.memory_space<vmem>>, %arg4: memref<24x128xf32, #tpu.memory_space<vmem>>) attributes {dimension_semantics = [#tpu.dimension_semantics<arbitrary>], iteration_bounds = array<i64: 1>, scalar_prefetch = 0 : i64, scratch_operands = 0 : i64, tpu.core_type = #tpu.core_type<tc>, window_params = [{pipeline_mode = #tpu.pipeline_mode<synchronous>, transform_indices = @transform_0, window_bounds = array<i64: 16, 128>}, {pipeline_mode = #tpu.pipeline_mode<synchronous>, transform_indices = @transform_1, window_bounds = array<i64: 992, 256>}, {pipeline_mode = #tpu.pipeline_mode<synchronous>, transform_indices = @transform_2, window_bounds = array<i64: 16, 256>}, {pipeline_mode = #tpu.pipeline_mode<synchronous>, transform_indices = @transform_3, window_bounds = array<i64: 24, 128>}]} {
    %c0 = arith.constant 0 : index
    %c0_0 = arith.constant 0 : index
    %0 = vector.load %arg1[%c0, %c0_0] : memref<16x128xf32, #tpu.memory_space<vmem>>, vector<16x128xf32>
    %c0_1 = arith.constant 0 : index
    %c0_2 = arith.constant 0 : index
    %1 = vector.load %arg2[%c0_1, %c0_2] : memref<992x256xbf16, #tpu.memory_space<vmem>>, vector<128x128xbf16>
    %2 = arith.truncf %0 : vector<16x128xf32> to vector<16x128xbf16>
    %cst = arith.constant dense<0.000000e+00> : vector<16x128xf32>
    %3 = tpu.matmul %2, %1, %cst {dimension_numbers = #tpu.dot_dimension_numbers<[1], [0], [0], [1], [0, 0, 1, 1], [], []>} : vector<16x128xbf16>, vector<128x128xbf16>, vector<16x128xf32> -> vector<16x128xf32>
    %c0_3 = arith.constant 0 : index
    %c0_4 = arith.constant 0 : index
    %4 = vector.load %arg3[%c0_3, %c0_4] : memref<16x256xf32, #tpu.memory_space<vmem>>, vector<1x128xf32>
    %5 = vector.broadcast %4 : vector<1x128xf32> to vector<16x128xf32>
    %6 = arith.addf %3, %5 : vector<16x128xf32>
    %7 = vector.extract_strided_slice %6 {offsets = [0, 0], sizes = [16, 64], strides = [1, 1]} : vector<16x128xf32> to vector<16x64xf32>
    %8 = vector.extract_strided_slice %6 {offsets = [0, 64], sizes = [16, 64], strides = [1, 1]} : vector<16x128xf32> to vector<16x64xf32>
    %9 = vector.shape_cast %7 : vector<16x64xf32> to vector<2x8x64xf32>
    %10 = vector.shape_cast %8 : vector<16x64xf32> to vector<2x8x64xf32>
    %11 = vector.shape_cast %10 : vector<2x8x64xf32> to vector<2x8x1x64xf32>
    %12 = vector.shape_cast %9 : vector<2x8x64xf32> to vector<2x1x8x64xf32>
    %13 = vector.broadcast %11 : vector<2x8x1x64xf32> to vector<2x8x8x64xf32>
    %14 = vector.broadcast %12 : vector<2x1x8x64xf32> to vector<2x8x8x64xf32>
    %15 = arith.addf %13, %14 : vector<2x8x8x64xf32>
    %cst_5 = arith.constant 0.000000e+00 : f32
    %16 = vector.broadcast %cst_5 : f32 to vector<2x8x8x64xf32>
    %17 = arith.cmpf ogt, %15, %16 : vector<2x8x8x64xf32>
    %cst_6 = arith.constant 2.000000e-01 : f32
    %18 = vector.broadcast %cst_6 : f32 to vector<2x8x8x64xf32>
    %19 = arith.mulf %18, %15 : vector<2x8x8x64xf32>
    %20 = arith.select %17, %15, %19 : vector<2x8x8x64xi1>, vector<2x8x8x64xf32>
    %21 = vector.shape_cast %20 : vector<2x8x8x64xf32> to vector<128x64xf32>
    %c128 = arith.constant 128 : index
    %c0_7 = arith.constant 0 : index
    %22 = vector.load %arg2[%c128, %c0_7] : memref<992x256xbf16, #tpu.memory_space<vmem>>, vector<64x2xbf16>
    %23 = arith.truncf %21 : vector<128x64xf32> to vector<128x64xbf16>
    %cst_8 = arith.constant dense<0.000000e+00> : vector<128x2xf32>
    %24 = tpu.matmul %23, %22, %cst_8 {dimension_numbers = #tpu.dot_dimension_numbers<[1], [0], [0], [1], [0, 0, 1, 1], [], []>} : vector<128x64xbf16>, vector<64x2xbf16>, vector<128x2xf32> -> vector<128x2xf32>
    %25 = vector.shape_cast %24 : vector<128x2xf32> to vector<2x8x8x2xf32>
    %cst_9 = arith.constant dense<0xFF800000> : vector<2x8x2xf32>
    %26 = vector.multi_reduction <maximumf>, %25, %cst_9 [2] : vector<2x8x8x2xf32> to vector<2x8x2xf32>
    %27 = vector.shape_cast %26 : vector<2x8x2xf32> to vector<2x8x1x2xf32>
    %28 = vector.broadcast %27 : vector<2x8x1x2xf32> to vector<2x8x8x2xf32>
    %29 = arith.subf %25, %28 : vector<2x8x8x2xf32>
    %30 = math.exp %29 : vector<2x8x8x2xf32>
    %cst_10 = arith.constant dense<0.000000e+00> : vector<2x8x2xf32>
    %31 = vector.multi_reduction <add>, %30, %cst_10 [2] : vector<2x8x8x2xf32> to vector<2x8x2xf32>
    %32 = vector.shape_cast %31 : vector<2x8x2xf32> to vector<2x8x1x2xf32>
    %33 = tpu.reciprocal %32 {approx = true} : vector<2x8x1x2xf32> -> vector<2x8x1x2xf32>
    %34 = vector.broadcast %33 : vector<2x8x1x2xf32> to vector<2x8x8x2xf32>
    %35 = arith.mulf %30, %34 : vector<2x8x8x2xf32>
    %36 = vector.extract_strided_slice %35 {offsets = [0, 0, 0, 0], sizes = [2, 8, 8, 1], strides = [1, 1, 1, 1]} : vector<2x8x8x2xf32> to vector<2x8x8x1xf32>
    %37 = vector.shape_cast %36 : vector<2x8x8x1xf32> to vector<2x8x8xf32>
    %38 = arith.truncf %37 : vector<2x8x8xf32> to vector<2x8x8xbf16>
    %39 = vector.extract_strided_slice %9 {offsets = [0, 0, 0], sizes = [2, 8, 32], strides = [1, 1, 1]} : vector<2x8x64xf32> to vector<2x8x32xf32>
    %40 = arith.truncf %39 : vector<2x8x32xf32> to vector<2x8x32xbf16>
    "tpu.trace_start"() <{level = 10 : i32, message = "bij,bjd->bid"}> : () -> ()
    %cst_11 = arith.constant dense<0.000000e+00> : vector<2x8x32xf32>
    %41 = tpu.matmul %38, %40, %cst_11 {dimension_numbers = #tpu.dot_dimension_numbers<[2], [1], [1], [2], [0, 0, 0, 1, 1, 2], [0], [0]>} : vector<2x8x8xbf16>, vector<2x8x32xbf16>, vector<2x8x32xf32> -> vector<2x8x32xf32>
    "tpu.trace_stop"() : () -> ()
    %42 = vector.extract_strided_slice %35 {offsets = [0, 0, 0, 1], sizes = [2, 8, 8, 1], strides = [1, 1, 1, 1]} : vector<2x8x8x2xf32> to vector<2x8x8x1xf32>
    %43 = vector.shape_cast %42 : vector<2x8x8x1xf32> to vector<2x8x8xf32>
    %44 = arith.truncf %43 : vector<2x8x8xf32> to vector<2x8x8xbf16>
    %45 = vector.extract_strided_slice %9 {offsets = [0, 0, 32], sizes = [2, 8, 32], strides = [1, 1, 1]} : vector<2x8x64xf32> to vector<2x8x32xf32>
    %46 = arith.truncf %45 : vector<2x8x32xf32> to vector<2x8x32xbf16>
    "tpu.trace_start"() <{level = 10 : i32, message = "bij,bjd->bid"}> : () -> ()
    %cst_12 = arith.constant dense<0.000000e+00> : vector<2x8x32xf32>
    %47 = tpu.matmul %44, %46, %cst_12 {dimension_numbers = #tpu.dot_dimension_numbers<[2], [1], [1], [2], [0, 0, 0, 1, 1, 2], [0], [0]>} : vector<2x8x8xbf16>, vector<2x8x32xbf16>, vector<2x8x32xf32> -> vector<2x8x32xf32>
    "tpu.trace_stop"() : () -> ()
    %48 = tpu.concatenate %41, %47 in 2 : vector<2x8x32xf32>, vector<2x8x32xf32> -> vector<2x8x64xf32>
    %49 = vector.shape_cast %48 : vector<2x8x64xf32> to vector<16x64xf32>
    %c1 = arith.constant 1 : index
    %c0_13 = arith.constant 0 : index
    %50 = vector.load %arg3[%c1, %c0_13] : memref<16x256xf32, #tpu.memory_space<vmem>>, vector<1x64xf32>
    %51 = vector.broadcast %50 : vector<1x64xf32> to vector<16x64xf32>
    %52 = arith.addf %49, %51 : vector<16x64xf32>
    %cst_14 = arith.constant 5.000000e-01 : f32
    %53 = vector.broadcast %cst_14 : f32 to vector<16x64xf32>
    %54 = arith.mulf %53, %52 : vector<16x64xf32>
    %cst_15 = arith.constant 0.707106769 : f32
    %55 = vector.broadcast %cst_15 : f32 to vector<16x64xf32>
    %56 = arith.mulf %52, %55 : vector<16x64xf32>
    %57 = math.erf %56 : vector<16x64xf32>
    %cst_16 = arith.constant 1.000000e+00 : f32
    %58 = vector.broadcast %cst_16 : f32 to vector<16x64xf32>
    %59 = arith.addf %58, %57 : vector<16x64xf32>
    %60 = arith.mulf %54, %59 : vector<16x64xf32>
    %cst_17 = arith.constant dense<0.000000e+00> : vector<16xf32>
    %61 = vector.multi_reduction <add>, %60, %cst_17 [1] : vector<16x64xf32> to vector<16xf32>
    %62 = vector.shape_cast %61 : vector<16xf32> to vector<16x1xf32>
    %cst_18 = arith.constant 6.400000e+01 : f32
    %63 = vector.broadcast %cst_18 : f32 to vector<16x1xf32>
    %64 = arith.divf %62, %63 : vector<16x1xf32>
    %65 = vector.broadcast %64 : vector<16x1xf32> to vector<16x64xf32>
    %66 = arith.subf %60, %65 : vector<16x64xf32>
    %67 = arith.mulf %66, %66 : vector<16x64xf32>
    %cst_19 = arith.constant dense<0.000000e+00> : vector<16xf32>
    %68 = vector.multi_reduction <add>, %67, %cst_19 [1] : vector<16x64xf32> to vector<16xf32>
    %69 = vector.shape_cast %68 : vector<16xf32> to vector<16x1xf32>
    %cst_20 = arith.constant 6.400000e+01 : f32
    %70 = vector.broadcast %cst_20 : f32 to vector<16x1xf32>
    %71 = arith.divf %69, %70 : vector<16x1xf32>
    %72 = vector.broadcast %64 : vector<16x1xf32> to vector<16x64xf32>
    %73 = arith.subf %60, %72 : vector<16x64xf32>
    %cst_21 = arith.constant 9.99999974E-6 : f32
    %74 = vector.broadcast %cst_21 : f32 to vector<16x1xf32>
    %75 = arith.addf %71, %74 : vector<16x1xf32>
    %76 = math.rsqrt %75 : vector<16x1xf32>
    %77 = vector.broadcast %76 : vector<16x1xf32> to vector<16x64xf32>
    %78 = arith.mulf %73, %77 : vector<16x64xf32>
    %c192 = arith.constant 192 : index
    %c0_22 = arith.constant 0 : index
    %79 = vector.load %arg2[%c192, %c0_22] : memref<992x256xbf16, #tpu.memory_space<vmem>>, vector<64x64xbf16>
    %80 = arith.truncf %78 : vector<16x64xf32> to vector<16x64xbf16>
    %cst_23 = arith.constant dense<0.000000e+00> : vector<16x64xf32>
    %81 = tpu.matmul %80, %79, %cst_23 {dimension_numbers = #tpu.dot_dimension_numbers<[1], [0], [0], [1], [0, 0, 1, 1], [], []>} : vector<16x64xbf16>, vector<64x64xbf16>, vector<16x64xf32> -> vector<16x64xf32>
    %c2 = arith.constant 2 : index
    %c0_24 = arith.constant 0 : index
    %82 = vector.load %arg3[%c2, %c0_24] : memref<16x256xf32, #tpu.memory_space<vmem>>, vector<1x64xf32>
    %83 = vector.broadcast %82 : vector<1x64xf32> to vector<16x64xf32>
    %84 = arith.addf %81, %83 : vector<16x64xf32>
    %85 = vector.extract_strided_slice %84 {offsets = [0, 0], sizes = [16, 32], strides = [1, 1]} : vector<16x64xf32> to vector<16x32xf32>
    %86 = vector.shape_cast %85 : vector<16x32xf32> to vector<2x8x32xf32>
    %87 = vector.extract_strided_slice %84 {offsets = [0, 32], sizes = [16, 32], strides = [1, 1]} : vector<16x64xf32> to vector<16x32xf32>
    %88 = vector.shape_cast %87 : vector<16x32xf32> to vector<2x8x32xf32>
    %89 = vector.shape_cast %88 : vector<2x8x32xf32> to vector<2x8x1x32xf32>
    %90 = vector.shape_cast %86 : vector<2x8x32xf32> to vector<2x1x8x32xf32>
    %91 = vector.broadcast %89 : vector<2x8x1x32xf32> to vector<2x8x8x32xf32>
    %92 = vector.broadcast %90 : vector<2x1x8x32xf32> to vector<2x8x8x32xf32>
    %93 = arith.addf %91, %92 : vector<2x8x8x32xf32>
    %cst_25 = arith.constant 0.000000e+00 : f32
    %94 = vector.broadcast %cst_25 : f32 to vector<2x8x8x32xf32>
    %95 = arith.cmpf ogt, %93, %94 : vector<2x8x8x32xf32>
    %cst_26 = arith.constant 2.000000e-01 : f32
    %96 = vector.broadcast %cst_26 : f32 to vector<2x8x8x32xf32>
    %97 = arith.mulf %96, %93 : vector<2x8x8x32xf32>
    %98 = arith.select %95, %93, %97 : vector<2x8x8x32xi1>, vector<2x8x8x32xf32>
    %99 = vector.shape_cast %98 : vector<2x8x8x32xf32> to vector<128x32xf32>
    %c256 = arith.constant 256 : index
    %c0_27 = arith.constant 0 : index
    %100 = vector.load %arg2[%c256, %c0_27] : memref<992x256xbf16, #tpu.memory_space<vmem>>, vector<32x1xbf16>
    %101 = arith.truncf %99 : vector<128x32xf32> to vector<128x32xbf16>
    %cst_28 = arith.constant dense<0.000000e+00> : vector<128x1xf32>
    %102 = tpu.matmul %101, %100, %cst_28 {dimension_numbers = #tpu.dot_dimension_numbers<[1], [0], [0], [1], [0, 0, 1, 1], [], []>} : vector<128x32xbf16>, vector<32x1xbf16>, vector<128x1xf32> -> vector<128x1xf32>
    %103 = vector.shape_cast %102 : vector<128x1xf32> to vector<2x8x8xf32>
    %cst_29 = arith.constant dense<0xFF800000> : vector<2x8xf32>
    %104 = vector.multi_reduction <maximumf>, %103, %cst_29 [2] : vector<2x8x8xf32> to vector<2x8xf32>
    %105 = vector.shape_cast %104 : vector<2x8xf32> to vector<2x8x1xf32>
    %106 = vector.broadcast %105 : vector<2x8x1xf32> to vector<2x8x8xf32>
    %107 = arith.subf %103, %106 : vector<2x8x8xf32>
    %108 = math.exp %107 : vector<2x8x8xf32>
    %cst_30 = arith.constant dense<0.000000e+00> : vector<2x8xf32>
    %109 = vector.multi_reduction <add>, %108, %cst_30 [2] : vector<2x8x8xf32> to vector<2x8xf32>
    %110 = vector.shape_cast %109 : vector<2x8xf32> to vector<2x8x1xf32>
    %111 = tpu.reciprocal %110 {approx = true} : vector<2x8x1xf32> -> vector<2x8x1xf32>
    %112 = vector.broadcast %111 : vector<2x8x1xf32> to vector<2x8x8xf32>
    %113 = arith.mulf %108, %112 : vector<2x8x8xf32>
    %114 = arith.truncf %113 : vector<2x8x8xf32> to vector<2x8x8xbf16>
    %115 = arith.truncf %86 : vector<2x8x32xf32> to vector<2x8x32xbf16>
    "tpu.trace_start"() <{level = 10 : i32, message = "bij,bjd->bid"}> : () -> ()
    %cst_31 = arith.constant dense<0.000000e+00> : vector<2x8x32xf32>
    %116 = tpu.matmul %114, %115, %cst_31 {dimension_numbers = #tpu.dot_dimension_numbers<[2], [1], [1], [2], [0, 0, 0, 1, 1, 2], [0], [0]>} : vector<2x8x8xbf16>, vector<2x8x32xbf16>, vector<2x8x32xf32> -> vector<2x8x32xf32>
    "tpu.trace_stop"() : () -> ()
    %117 = vector.shape_cast %116 : vector<2x8x32xf32> to vector<16x32xf32>
    %c3 = arith.constant 3 : index
    %c0_32 = arith.constant 0 : index
    %118 = vector.load %arg3[%c3, %c0_32] : memref<16x256xf32, #tpu.memory_space<vmem>>, vector<1x32xf32>
    %119 = vector.broadcast %118 : vector<1x32xf32> to vector<16x32xf32>
    %120 = arith.addf %117, %119 : vector<16x32xf32>
    %cst_33 = arith.constant 5.000000e-01 : f32
    %121 = vector.broadcast %cst_33 : f32 to vector<16x32xf32>
    %122 = arith.mulf %121, %120 : vector<16x32xf32>
    %cst_34 = arith.constant 0.707106769 : f32
    %123 = vector.broadcast %cst_34 : f32 to vector<16x32xf32>
    %124 = arith.mulf %120, %123 : vector<16x32xf32>
    %125 = math.erf %124 : vector<16x32xf32>
    %cst_35 = arith.constant 1.000000e+00 : f32
    %126 = vector.broadcast %cst_35 : f32 to vector<16x32xf32>
    %127 = arith.addf %126, %125 : vector<16x32xf32>
    %128 = arith.mulf %122, %127 : vector<16x32xf32>
    %c288 = arith.constant 288 : index
    %c0_36 = arith.constant 0 : index
    %129 = vector.load %arg2[%c288, %c0_36] : memref<992x256xbf16, #tpu.memory_space<vmem>>, vector<32x256xbf16>
    %130 = arith.truncf %128 : vector<16x32xf32> to vector<16x32xbf16>
    %cst_37 = arith.constant dense<0.000000e+00> : vector<16x256xf32>
    %131 = tpu.matmul %130, %129, %cst_37 {dimension_numbers = #tpu.dot_dimension_numbers<[1], [0], [0], [1], [0, 0, 1, 1], [], []>} : vector<16x32xbf16>, vector<32x256xbf16>, vector<16x256xf32> -> vector<16x256xf32>
    %c4 = arith.constant 4 : index
    %c0_38 = arith.constant 0 : index
    %132 = vector.load %arg3[%c4, %c0_38] : memref<16x256xf32, #tpu.memory_space<vmem>>, vector<1x256xf32>
    %133 = vector.broadcast %132 : vector<1x256xf32> to vector<16x256xf32>
    %134 = arith.addf %131, %133 : vector<16x256xf32>
    %cst_39 = arith.constant 5.000000e-01 : f32
    %135 = vector.broadcast %cst_39 : f32 to vector<16x256xf32>
    %136 = arith.mulf %135, %134 : vector<16x256xf32>
    %cst_40 = arith.constant 0.707106769 : f32
    %137 = vector.broadcast %cst_40 : f32 to vector<16x256xf32>
    %138 = arith.mulf %134, %137 : vector<16x256xf32>
    %139 = math.erf %138 : vector<16x256xf32>
    %cst_41 = arith.constant 1.000000e+00 : f32
    %140 = vector.broadcast %cst_41 : f32 to vector<16x256xf32>
    %141 = arith.addf %140, %139 : vector<16x256xf32>
    %142 = arith.mulf %136, %141 : vector<16x256xf32>
    %143 = vector.extract_strided_slice %142 {offsets = [0, 0], sizes = [16, 128], strides = [1, 1]} : vector<16x256xf32> to vector<16x128xf32>
    %144 = vector.extract_strided_slice %142 {offsets = [0, 128], sizes = [16, 128], strides = [1, 1]} : vector<16x256xf32> to vector<16x128xf32>
    %c864 = arith.constant 864 : index
    %c0_42 = arith.constant 0 : index
    %145 = vector.load %arg2[%c864, %c0_42] : memref<992x256xbf16, #tpu.memory_space<vmem>>, vector<128x1xbf16>
    %146 = arith.truncf %144 : vector<16x128xf32> to vector<16x128xbf16>
    %cst_43 = arith.constant dense<0.000000e+00> : vector<16x1xf32>
    %147 = tpu.matmul %146, %145, %cst_43 {dimension_numbers = #tpu.dot_dimension_numbers<[1], [0], [0], [1], [0, 0, 1, 1], [], []>} : vector<16x128xbf16>, vector<128x1xbf16>, vector<16x1xf32> -> vector<16x1xf32>
    %c10 = arith.constant 10 : index
    %c0_44 = arith.constant 0 : index
    %148 = vector.load %arg3[%c10, %c0_44] : memref<16x256xf32, #tpu.memory_space<vmem>>, vector<1x1xf32>
    %149 = vector.broadcast %148 : vector<1x1xf32> to vector<16x1xf32>
    %150 = arith.addf %147, %149 : vector<16x1xf32>
    %151 = vector.shape_cast %150 : vector<16x1xf32> to vector<2x8x1xf32>
    %cst_45 = arith.constant dense<0xFF800000> : vector<2x1xf32>
    %152 = vector.multi_reduction <maximumf>, %151, %cst_45 [1] : vector<2x8x1xf32> to vector<2x1xf32>
    %153 = vector.shape_cast %152 : vector<2x1xf32> to vector<2x1x1xf32>
    %154 = vector.broadcast %153 : vector<2x1x1xf32> to vector<2x8x1xf32>
    %155 = arith.subf %151, %154 : vector<2x8x1xf32>
    %156 = math.exp %155 : vector<2x8x1xf32>
    %cst_46 = arith.constant dense<0.000000e+00> : vector<2x1xf32>
    %157 = vector.multi_reduction <add>, %156, %cst_46 [1] : vector<2x8x1xf32> to vector<2x1xf32>
    %158 = vector.shape_cast %157 : vector<2x1xf32> to vector<2x1x1xf32>
    %159 = vector.broadcast %158 : vector<2x1x1xf32> to vector<2x8x1xf32>
    %160 = arith.divf %156, %159 : vector<2x8x1xf32>
    %161 = vector.shape_cast %128 : vector<16x32xf32> to vector<2x8x32xf32>
    %162 = vector.broadcast %160 : vector<2x8x1xf32> to vector<2x8x32xf32>
    %163 = arith.mulf %162, %161 : vector<2x8x32xf32>
    %cst_47 = arith.constant dense<0.000000e+00> : vector<2x32xf32>
    %164 = vector.multi_reduction <add>, %163, %cst_47 [1] : vector<2x8x32xf32> to vector<2x32xf32>
    %c576 = arith.constant 576 : index
    %c0_48 = arith.constant 0 : index
    %165 = vector.load %arg2[%c576, %c0_48] : memref<992x256xbf16, #tpu.memory_space<vmem>>, vector<32x128xbf16>
    %166 = arith.truncf %164 : vector<2x32xf32> to vector<2x32xbf16>
    %cst_49 = arith.constant dense<0.000000e+00> : vector<2x128xf32>
    %167 = tpu.matmul %166, %165, %cst_49 {dimension_numbers = #tpu.dot_dimension_numbers<[1], [0], [0], [1], [0, 0, 1, 1], [], []>} : vector<2x32xbf16>, vector<32x128xbf16>, vector<2x128xf32> -> vector<2x128xf32>
    %c7 = arith.constant 7 : index
    %c0_50 = arith.constant 0 : index
    %168 = vector.load %arg3[%c7, %c0_50] : memref<16x256xf32, #tpu.memory_space<vmem>>, vector<1x128xf32>
    %169 = vector.broadcast %168 : vector<1x128xf32> to vector<2x128xf32>
    %170 = arith.addf %167, %169 : vector<2x128xf32>
    %cst_51 = arith.constant 5.000000e-01 : f32
    %171 = vector.broadcast %cst_51 : f32 to vector<2x128xf32>
    %172 = arith.mulf %171, %170 : vector<2x128xf32>
    %cst_52 = arith.constant 0.707106769 : f32
    %173 = vector.broadcast %cst_52 : f32 to vector<2x128xf32>
    %174 = arith.mulf %170, %173 : vector<2x128xf32>
    %175 = math.erf %174 : vector<2x128xf32>
    %cst_53 = arith.constant 1.000000e+00 : f32
    %176 = vector.broadcast %cst_53 : f32 to vector<2x128xf32>
    %177 = arith.addf %176, %175 : vector<2x128xf32>
    %178 = arith.mulf %172, %177 : vector<2x128xf32>
    %c608 = arith.constant 608 : index
    %c0_54 = arith.constant 0 : index
    %179 = vector.load %arg2[%c608, %c0_54] : memref<992x256xbf16, #tpu.memory_space<vmem>>, vector<128x128xbf16>
    %180 = arith.truncf %178 : vector<2x128xf32> to vector<2x128xbf16>
    %cst_55 = arith.constant dense<0.000000e+00> : vector<2x128xf32>
    %181 = tpu.matmul %180, %179, %cst_55 {dimension_numbers = #tpu.dot_dimension_numbers<[1], [0], [0], [1], [0, 0, 1, 1], [], []>} : vector<2x128xbf16>, vector<128x128xbf16>, vector<2x128xf32> -> vector<2x128xf32>
    %c8 = arith.constant 8 : index
    %c0_56 = arith.constant 0 : index
    %182 = vector.load %arg3[%c8, %c0_56] : memref<16x256xf32, #tpu.memory_space<vmem>>, vector<1x128xf32>
    %183 = vector.broadcast %182 : vector<1x128xf32> to vector<2x128xf32>
    %184 = arith.addf %181, %183 : vector<2x128xf32>
    %cst_57 = arith.constant 5.000000e-01 : f32
    %185 = vector.broadcast %cst_57 : f32 to vector<2x128xf32>
    %186 = arith.mulf %185, %184 : vector<2x128xf32>
    %cst_58 = arith.constant 0.707106769 : f32
    %187 = vector.broadcast %cst_58 : f32 to vector<2x128xf32>
    %188 = arith.mulf %184, %187 : vector<2x128xf32>
    %189 = math.erf %188 : vector<2x128xf32>
    %cst_59 = arith.constant 1.000000e+00 : f32
    %190 = vector.broadcast %cst_59 : f32 to vector<2x128xf32>
    %191 = arith.addf %190, %189 : vector<2x128xf32>
    %192 = arith.mulf %186, %191 : vector<2x128xf32>
    %c736 = arith.constant 736 : index
    %c0_60 = arith.constant 0 : index
    %193 = vector.load %arg2[%c736, %c0_60] : memref<992x256xbf16, #tpu.memory_space<vmem>>, vector<128x128xbf16>
    %194 = arith.truncf %192 : vector<2x128xf32> to vector<2x128xbf16>
    %cst_61 = arith.constant dense<0.000000e+00> : vector<2x128xf32>
    %195 = tpu.matmul %194, %193, %cst_61 {dimension_numbers = #tpu.dot_dimension_numbers<[1], [0], [0], [1], [0, 0, 1, 1], [], []>} : vector<2x128xbf16>, vector<128x128xbf16>, vector<2x128xf32> -> vector<2x128xf32>
    %c9 = arith.constant 9 : index
    %c0_62 = arith.constant 0 : index
    %196 = vector.load %arg3[%c9, %c0_62] : memref<16x256xf32, #tpu.memory_space<vmem>>, vector<1x128xf32>
    %197 = vector.broadcast %196 : vector<1x128xf32> to vector<2x128xf32>
    %198 = arith.addf %195, %197 : vector<2x128xf32>
    %c320 = arith.constant 320 : index
    %c0_63 = arith.constant 0 : index
    %199 = vector.load %arg2[%c320, %c0_63] : memref<992x256xbf16, #tpu.memory_space<vmem>>, vector<128x128xbf16>
    %200 = arith.truncf %143 : vector<16x128xf32> to vector<16x128xbf16>
    %cst_64 = arith.constant dense<0.000000e+00> : vector<16x128xf32>
    %201 = tpu.matmul %200, %199, %cst_64 {dimension_numbers = #tpu.dot_dimension_numbers<[1], [0], [0], [1], [0, 0, 1, 1], [], []>} : vector<16x128xbf16>, vector<128x128xbf16>, vector<16x128xf32> -> vector<16x128xf32>
    %c5 = arith.constant 5 : index
    %c0_65 = arith.constant 0 : index
    %202 = vector.load %arg3[%c5, %c0_65] : memref<16x256xf32, #tpu.memory_space<vmem>>, vector<1x128xf32>
    %203 = vector.broadcast %202 : vector<1x128xf32> to vector<16x128xf32>
    %204 = arith.addf %201, %203 : vector<16x128xf32>
    %cst_66 = arith.constant 5.000000e-01 : f32
    %205 = vector.broadcast %cst_66 : f32 to vector<16x128xf32>
    %206 = arith.mulf %205, %204 : vector<16x128xf32>
    %cst_67 = arith.constant 0.707106769 : f32
    %207 = vector.broadcast %cst_67 : f32 to vector<16x128xf32>
    %208 = arith.mulf %204, %207 : vector<16x128xf32>
    %209 = math.erf %208 : vector<16x128xf32>
    %cst_68 = arith.constant 1.000000e+00 : f32
    %210 = vector.broadcast %cst_68 : f32 to vector<16x128xf32>
    %211 = arith.addf %210, %209 : vector<16x128xf32>
    %212 = arith.mulf %206, %211 : vector<16x128xf32>
    %c448 = arith.constant 448 : index
    %c0_69 = arith.constant 0 : index
    %213 = vector.load %arg2[%c448, %c0_69] : memref<992x256xbf16, #tpu.memory_space<vmem>>, vector<128x128xbf16>
    %214 = arith.truncf %212 : vector<16x128xf32> to vector<16x128xbf16>
    %cst_70 = arith.constant dense<0.000000e+00> : vector<16x128xf32>
    %215 = tpu.matmul %214, %213, %cst_70 {dimension_numbers = #tpu.dot_dimension_numbers<[1], [0], [0], [1], [0, 0, 1, 1], [], []>} : vector<16x128xbf16>, vector<128x128xbf16>, vector<16x128xf32> -> vector<16x128xf32>
    %c6 = arith.constant 6 : index
    %c0_71 = arith.constant 0 : index
    %216 = vector.load %arg3[%c6, %c0_71] : memref<16x256xf32, #tpu.memory_space<vmem>>, vector<1x128xf32>
    %217 = vector.broadcast %216 : vector<1x128xf32> to vector<16x128xf32>
    %218 = arith.addf %215, %217 : vector<16x128xf32>
    %cst_72 = arith.constant 0.000000e+00 : f32
    %219 = vector.broadcast %cst_72 : f32 to vector<6x128xf32>
    %220 = tpu.concatenate %218, %198, %219 in 0 : vector<16x128xf32>, vector<2x128xf32>, vector<6x128xf32> -> vector<24x128xf32>
    %c0_73 = arith.constant 0 : index
    %c0_74 = arith.constant 0 : index
    %221 = vector.load %arg4[%c0_73, %c0_74] : memref<24x128xf32, #tpu.memory_space<vmem>>, vector<24x128xf32>
    tpu.vector_store %arg4[%c0_73, %c0_74], %220 {strides = array<i32>} : memref<24x128xf32, #tpu.memory_space<vmem>>, vector<24x128xf32>,
    return
  }
  func.func @transform_0(%arg0: i32) -> (i32, i32) {
    %c0_i32 = arith.constant 0 : i32
    %c0_i32_0 = arith.constant 0 : i32
    %c0_i32_1 = arith.constant 0 : i32
    return %c0_i32, %c0_i32_0 : i32, i32
  }
  func.func @transform_1(%arg0: i32) -> (i32, i32) {
    %c0_i32 = arith.constant 0 : i32
    %c0_i32_0 = arith.constant 0 : i32
    %c0_i32_1 = arith.constant 0 : i32
    return %c0_i32, %c0_i32_0 : i32, i32
  }
  func.func @transform_2(%arg0: i32) -> (i32, i32) {
    %c0_i32 = arith.constant 0 : i32
    %c0_i32_0 = arith.constant 0 : i32
    %c0_i32_1 = arith.constant 0 : i32
    return %c0_i32, %c0_i32_0 : i32, i32
  }
  func.func @transform_3(%arg0: i32) -> (i32, i32) {
    %c0_i32 = arith.constant 0 : i32
    %c0_i32_0 = arith.constant 0 : i32
    %c0_i32_1 = arith.constant 0 : i32
    return %c0_i32, %c0_i32_0 : i32, i32
  }
}

</mosaic_0001>

<llo_original>
// kernel: actor_critic_forward.1
$region0: #{actor_critic_forward.1}
  #allocation0 [shape = 'u32[]', space=smem, size = 0x4, offset = 0x4, fixed_abs, tag = 'smem constant byte address 0x4 - core index']
  #allocation1 [shape = 'u32[144,128]{1,0:T(1,128)}', space=vmem, size = 0x12000, scoped, tag = 'internal scratch']
  %s0 = inlined_call_operand.vmem [shape: f32[16,128], index: 0, kind: input, shape index: {}]
  %s1 = inlined_call_operand.hbm [shape: bf16[992,256], index: 1, kind: input, shape index: {}]
  %s2 = inlined_call_operand.vmem [shape: f32[16,256], index: 2, kind: input, shape index: {}]
  %s3 = inlined_call_operand.vmem [shape: f32[24,128], index: 3, kind: output, shape index: {}]
  %s4 = sld [smem:[#allocation0]]
  $region26: #{actor_critic_forward.1} parent=0
    _
  %s6 = ssub.s32 1, %s4
  %s7 = scalar_select 0, %s6, %s4
  $region1: #{actor_critic_forward.1} parent=0
    #allocation2 [shape = 'u8[507904]{0}', space=vmem, size = 0x7c000, scoped, tag = 'input window, operand 1, single buffered']
    #allocation3 [shape = 's32[1]{0}', space=sflag, size = 0x4, scoped, tag = 'scoped memory for actor_critic_forward.1']
    %8 = vsyncpa [#allocation3], 0
    // Predicated region
    $region2: #{actor_critic_forward.1} parent=1 // pred_check
      _
    $region3: #{actor_critic_forward.1} parent=1 // pred_check_branch
      %10 = sbr.rel (0) target = $region5
    $region4: #{actor_critic_forward.1} parent=1 // pred_region
      _
    $region5: #{actor_critic_forward.1} parent=1 // pred_fallthru
      _
    // Predicated region
    $region6: #{actor_critic_forward.1} parent=1 // pred_check
      _
    $region7: #{actor_critic_forward.1} parent=1 // pred_check_branch
      %12 = sbr.rel (0) target = $region9
    $region8: #{actor_critic_forward.1} parent=1 // pred_region
      %s14 = ssub.s32 15872, 15872
      %15 = vsyncadd [#allocation3], %s14
      %s16 = sshll.u32 [#allocation2], 4
      %s17 = int_to_ptr.vmem [resolvable:$true] %s16
      %22 = dma.hbm_to_vmem [thread:$0]  %s1, 15872, %s17, [#allocation3], 128, 128, 8
    $region9: #{actor_critic_forward.1} parent=1 // pred_fallthru
      _
    // Predicated region
    $region10: #{actor_critic_forward.1} parent=1 // pred_check
      _
    $region11: #{actor_critic_forward.1} parent=1 // pred_check_branch
      %24 = sbr.rel (0) target = $region13
    $region12: #{actor_critic_forward.1} parent=1 // pred_region
      _
    $region13: #{actor_critic_forward.1} parent=1 // pred_fallthru
      _
    // Predicated region
    $region14: #{actor_critic_forward.1} parent=1 // pred_check
      _
    $region15: #{actor_critic_forward.1} parent=1 // pred_check_branch
      %26 = sbr.rel (0) target = $region17
    $region16: #{actor_critic_forward.1} parent=1 // pred_region
      %27 = dma.done [#allocation3], 15872
    $region17: #{actor_critic_forward.1} parent=1 // pred_fallthru
      _
    %v29 = vld [vmem:[%s0] sm:$0xff]
    %v30 = vld [vmem:[%s0 + $0x8] sm:$0xff]
    %v31 = vld [vmem:[#allocation2] sm:$0xf]
    %v32 = vld [vmem:[#allocation2 + $0x8] sm:$0xf]
    %v33 = vld [vmem:[#allocation2 + $0x10] sm:$0xf]
    %v34 = vld [vmem:[#allocation2 + $0x18] sm:$0xf]
    %v35 = vld [vmem:[#allocation2 + $0x20] sm:$0xf]
    %v36 = vld [vmem:[#allocation2 + $0x28] sm:$0xf]
    %v37 = vld [vmem:[#allocation2 + $0x30] sm:$0xf]
    %v38 = vld [vmem:[#allocation2 + $0x38] sm:$0xf]
    %v39 = vld [vmem:[#allocation2 + $0x40] sm:$0xf]
    %v40 = vld [vmem:[#allocation2 + $0x48] sm:$0xf]
    %v41 = vld [vmem:[#allocation2 + $0x50] sm:$0xf]
    %v42 = vld [vmem:[#allocation2 + $0x58] sm:$0xf]
    %v43 = vld [vmem:[#allocation2 + $0x60] sm:$0xf]
    %v44 = vld [vmem:[#allocation2 + $0x68] sm:$0xf]
    %v45 = vld [vmem:[#allocation2 + $0x70] sm:$0xf]
    %v46 = vld [vmem:[#allocation2 + $0x78] sm:$0xf]
    %v47 = vpack.c.bf16 %v30, %v29
    %v48 = vld [vmem:[%s2] ss:$0 sm:$0xff]
    %v65 = vunpack.c.l.b16 %v31
    %v66 = vunpack.c.l.b16 %v32
    %v67 = vunpack.c.l.b16 %v33
    %v68 = vunpack.c.l.b16 %v34
    %v69 = vunpack.c.l.b16 %v35
    %v70 = vunpack.c.l.b16 %v36
    %v71 = vunpack.c.l.b16 %v37
    %v72 = vunpack.c.l.b16 %v38
    %v73 = vunpack.c.l.b16 %v39
    %v74 = vunpack.c.l.b16 %v40
    %v75 = vunpack.c.l.b16 %v41
    %v76 = vunpack.c.l.b16 %v42
    %v77 = vunpack.c.l.b16 %v43
    %v78 = vunpack.c.l.b16 %v44
    %v79 = vunpack.c.l.b16 %v45
    %v80 = vunpack.c.l.b16 %v46
    %v81 = vpack.c.b16 %v66, %v65
    %v82 = vpack.c.b16 %v68, %v67
    %v83 = vpack.c.b16 %v70, %v69
    %v84 = vpack.c.b16 %v72, %v71
    %v85 = vpack.c.b16 %v74, %v73
    %v86 = vpack.c.b16 %v76, %v75
    %v87 = vpack.c.b16 %v78, %v77
    %v88 = vpack.c.b16 %v80, %v79
    %97 = vmatprep.subr.bf16.mxu0 0
    %98 = vmatpush1.bf16.msra.mxu0 %v81
    %99 = vmatprep.subr.bf16.mxu0 0
    %100 = vmatpush1.bf16.msra.mxu0 %v82
    %101 = vmatprep.subr.bf16.mxu0 0
    %102 = vmatpush1.bf16.msra.mxu0 %v83
    %103 = vmatprep.subr.bf16.mxu0 0
    %104 = vmatpush1.bf16.msra.mxu0 %v84
    %105 = vmatprep.subr.bf16.mxu0 0
    %106 = vmatpush1.bf16.msra.mxu0 %v85
    %107 = vmatprep.subr.bf16.mxu0 0
    %108 = vmatpush1.bf16.msra.mxu0 %v86
    %109 = vmatprep.subr.bf16.mxu0 0
    %110 = vmatpush1.bf16.msra.mxu0 %v87
    %111 = vmatprep.subr.bf16.mxu0 0
    %112 = vmatpush1.bf16.msra.mxu0 %v88
    %113 = vmatprep.subr.bf16.mxu0 0
    %114 = vmatpush1.bf16.msra.mxu0 0
    %115 = vmatprep.subr.bf16.mxu0 0
    %116 = vmatpush1.bf16.msra.mxu0 0
    %117 = vmatprep.subr.bf16.mxu0 0
    %118 = vmatpush1.bf16.msra.mxu0 0
    %119 = vmatprep.subr.bf16.mxu0 0
    %120 = vmatpush1.bf16.msra.mxu0 0
    %121 = vmatprep.subr.bf16.mxu0 0
    %122 = vmatpush1.bf16.msra.mxu0 0
    %123 = vmatprep.subr.bf16.mxu0 0
    %124 = vmatpush1.bf16.msra.mxu0 0
    %125 = vmatprep.subr.bf16.mxu0 0
    %126 = vmatpush1.bf16.msra.mxu0 0
    %127 = vmatprep.subr.bf16.mxu0 0
    %128 = vmatpush1.bf16.msra.mxu0 0
    %129 = vmatprep.mubr.bf16.mxu0 0
    %130 = vmatmul.mubr.bf16.gmra.mrb[0].mxu0 %v47
    %v131 = vpop.f32.mrb[0].mxu0
    %v132 = vadd.f32 %v48, %v131
    %v133 = vpop.f32.mrb[0].mxu0
    %v134 = vpop.f32.mrb[0].mxu0
    %v135 = vadd.f32 %v48, %v134
    %v136 = vpop.f32.mrb[0].mxu0
    %137 = vdwg.mxu0
    %v140 = vcombine.high %v132, %v132
    %v142 = vunpack.c.l.s4 1966171168
    %v143 = vunpack.c.0.s8 %v142
    %v144 = vlaneseq
    %v145 = vshrl.u32 %v144, 7
    %v146 = vsub.s32 %v143, %v145
    %v147 = vrot.slane %v132, %v146
    %v149 = vunpack.c.l.s4 1966171168
    %v150 = vunpack.c.0.s8 %v149
    %v151 = vlaneseq
    %v152 = vshrl.u32 %v151, 7
    %v153 = vsub.s32 %v150, %v152
    %v154 = vrot.slane %v140, %v153
    %v155 = vcombine.high %v147, %v147
    %v156 = vcombine.high %v154, %v154
    %v158 = vunpack.c.l.s4 1966171168
    %v159 = vunpack.c.0.s8 %v158
    %v160 = vlaneseq
    %v161 = vshrl.u32 %v160, 7
    %v162 = vsub.s32 %v159, %v161
    %v163 = vrot.slane %v147, %v162
    %v165 = vunpack.c.l.s4 1966171168
    %v166 = vunpack.c.0.s8 %v165
    %v167 = vlaneseq
    %v168 = vshrl.u32 %v167, 7
    %v169 = vsub.s32 %v166, %v168
    %v170 = vrot.slane %v154, %v169
    %v172 = vunpack.c.l.s4 1966171168
    %v173 = vunpack.c.0.s8 %v172
    %v174 = vlaneseq
    %v175 = vshrl.u32 %v174, 7
    %v176 = vsub.s32 %v173, %v175
    %v177 = vrot.slane %v155, %v176
    %v179 = vunpack.c.l.s4 1966171168
    %v180 = vunpack.c.0.s8 %v179
    %v181 = vlaneseq
    %v182 = vshrl.u32 %v181, 7
    %v183 = vsub.s32 %v180, %v182
    %v184 = vrot.slane %v156, %v183
    %v185 = vcombine.high %v163, %v163
    %v186 = vcombine.high %v170, %v170
    %v187 = vcombine.high %v177, %v177
    %v188 = vcombine.high %v184, %v184
    %v189 = vcombine.high %v135, %v135
    %v191 = vunpack.c.l.s4 1966171168
    %v192 = vunpack.c.0.s8 %v191
    %v193 = vlaneseq
    %v194 = vshrl.u32 %v193, 7
    %v195 = vsub.s32 %v192, %v194
    %v196 = vrot.slane %v135, %v195
    %v198 = vunpack.c.l.s4 1966171168
    %v199 = vunpack.c.0.s8 %v198
    %v200 = vlaneseq
    %v201 = vshrl.u32 %v200, 7
    %v202 = vsub.s32 %v199, %v201
    %v203 = vrot.slane %v189, %v202
    %v204 = vcombine.high %v196, %v196
    %v205 = vcombine.high %v203, %v203
    %v207 = vunpack.c.l.s4 1966171168
    %v208 = vunpack.c.0.s8 %v207
    %v209 = vlaneseq
    %v210 = vshrl.u32 %v209, 7
    %v211 = vsub.s32 %v208, %v210
    %v212 = vrot.slane %v196, %v211
    %v214 = vunpack.c.l.s4 1966171168
    %v215 = vunpack.c.0.s8 %v214
    %v216 = vlaneseq
    %v217 = vshrl.u32 %v216, 7
    %v218 = vsub.s32 %v215, %v217
    %v219 = vrot.slane %v203, %v218
    %v221 = vunpack.c.l.s4 1966171168
    %v222 = vunpack.c.0.s8 %v221
    %v223 = vlaneseq
    %v224 = vshrl.u32 %v223, 7
    %v225 = vsub.s32 %v222, %v224
    %v226 = vrot.slane %v204, %v225
    %v228 = vunpack.c.l.s4 1966171168
    %v229 = vunpack.c.0.s8 %v228
    %v230 = vlaneseq
    %v231 = vshrl.u32 %v230, 7
    %v232 = vsub.s32 %v229, %v231
    %v233 = vrot.slane %v205, %v232
    %v234 = vcombine.high %v212, %v212
    %v235 = vcombine.high %v219, %v219
    %v236 = vcombine.high %v226, %v226
    %v237 = vcombine.high %v233, %v233
    %v238 = vlaneseq
    %v239 = vshrl.u32 %v238, 7
    %v240 = vsub.s32 0, %v239
    %v241 = vrot.slane %v163, %v240
    %v242 = vlaneseq
    %v243 = vshrl.u32 %v242, 7
    %v244 = vsub.s32 0, %v243
    %v245 = vrot.slane %v177, %v244
    %v246 = vlaneseq
    %v247 = vshrl.u32 %v246, 7
    %v248 = vsub.s32 0, %v247
    %v249 = vrot.slane %v185, %v248
    %v250 = vlaneseq
    %v251 = vshrl.u32 %v250, 7
    %v252 = vsub.s32 0, %v251
    %v253 = vrot.slane %v187, %v252
    %v254 = vlaneseq
    %v255 = vshrl.u32 %v254, 7
    %v256 = vsub.s32 0, %v255
    %v257 = vrot.slane %v170, %v256
    %v258 = vlaneseq
    %v259 = vshrl.u32 %v258, 7
    %v260 = vsub.s32 0, %v259
    %v261 = vrot.slane %v184, %v260
    %v262 = vlaneseq
    %v263 = vshrl.u32 %v262, 7
    %v264 = vsub.s32 0, %v263
    %v265 = vrot.slane %v186, %v264
    %v266 = vlaneseq
    %v267 = vshrl.u32 %v266, 7
    %v268 = vsub.s32 0, %v267
    %v269 = vrot.slane %v188, %v268
    %v270 = vlaneseq
    %v271 = vshrl.u32 %v270, 7
    %v272 = vsub.s32 0, %v271
    %v273 = vrot.slane %v212, %v272
    %v274 = vlaneseq
    %v275 = vshrl.u32 %v274, 7
    %v276 = vsub.s32 0, %v275
    %v277 = vrot.slane %v226, %v276
    %v278 = vlaneseq
    %v279 = vshrl.u32 %v278, 7
    %v280 = vsub.s32 0, %v279
    %v281 = vrot.slane %v234, %v280
    %v282 = vlaneseq
    %v283 = vshrl.u32 %v282, 7
    %v284 = vsub.s32 0, %v283
    %v285 = vrot.slane %v236, %v284
    %v286 = vlaneseq
    %v287 = vshrl.u32 %v286, 7
    %v288 = vsub.s32 0, %v287
    %v289 = vrot.slane %v219, %v288
    %v290 = vlaneseq
    %v291 = vshrl.u32 %v290, 7
    %v292 = vsub.s32 0, %v291
    %v293 = vrot.slane %v233, %v292
    %v294 = vlaneseq
    %v295 = vshrl.u32 %v294, 7
    %v296 = vsub.s32 0, %v295
    %v297 = vrot.slane %v235, %v296
    %v298 = vlaneseq
    %v299 = vshrl.u32 %v298, 7
    %v300 = vsub.s32 0, %v299
    %v301 = vrot.slane %v237, %v300
    %318 = vrot.lane.b32.xlu0 %v132, 64
    %v319 = vpop.permute.xlu0 %318
    %320 = vrot.lane.b32.xlu0 %v135, 64
    %v321 = vpop.permute.xlu0 %320
    %v324 = vadd.f32 %v241, %v319
    %v325 = vadd.f32 %v245, %v319
    %v326 = vadd.f32 %v249, %v319
    %v327 = vadd.f32 %v253, %v319
    %v328 = vadd.f32 %v257, %v319
    %v329 = vadd.f32 %v261, %v319
    %v330 = vadd.f32 %v265, %v319
    %v331 = vadd.f32 %v269, %v319
    %v332 = vadd.f32 %v273, %v321
    %v333 = vadd.f32 %v277, %v321
    %v334 = vadd.f32 %v281, %v321
    %v335 = vadd.f32 %v285, %v321
    %v336 = vadd.f32 %v289, %v321
    %v337 = vadd.f32 %v293, %v321
    %v338 = vadd.f32 %v297, %v321
    %v339 = vadd.f32 %v301, %v321
    %vm340 = vcmp.gt.f32.partialorder %v324, 0.0
    %vm341 = vcmp.gt.f32.partialorder %v325, 0.0
    %vm342 = vcmp.gt.f32.partialorder %v326, 0.0
    %vm343 = vcmp.gt.f32.partialorder %v327, 0.0
    %vm344 = vcmp.gt.f32.partialorder %v328, 0.0
    %vm345 = vcmp.gt.f32.partialorder %v329, 0.0
    %vm346 = vcmp.gt.f32.partialorder %v330, 0.0
    %vm347 = vcmp.gt.f32.partialorder %v331, 0.0
    %vm348 = vcmp.gt.f32.partialorder %v332, 0.0
    %vm349 = vcmp.gt.f32.partialorder %v333, 0.0
    %vm350 = vcmp.gt.f32.partialorder %v334, 0.0
    %vm351 = vcmp.gt.f32.partialorder %v335, 0.0
    %vm352 = vcmp.gt.f32.partialorder %v336, 0.0
    %vm353 = vcmp.gt.f32.partialorder %v337, 0.0
    %vm354 = vcmp.gt.f32.partialorder %v338, 0.0
    %vm355 = vcmp.gt.f32.partialorder %v339, 0.0
    %v356 = vmul.f32 %v324, 0.2
    %v357 = vmul.f32 %v325, 0.2
    %v358 = vmul.f32 %v326, 0.2
    %v359 = vmul.f32 %v327, 0.2
    %v360 = vmul.f32 %v328, 0.2
    %v361 = vmul.f32 %v329, 0.2
    %v362 = vmul.f32 %v330, 0.2
    %v363 = vmul.f32 %v331, 0.2
    %v364 = vmul.f32 %v332, 0.2
    %v365 = vmul.f32 %v333, 0.2
    %v366 = vmul.f32 %v334, 0.2
    %v367 = vmul.f32 %v335, 0.2
    %v368 = vmul.f32 %v336, 0.2
    %v369 = vmul.f32 %v337, 0.2
    %v370 = vmul.f32 %v338, 0.2
    %v371 = vmul.f32 %v339, 0.2
    %v372 = vsel %vm340, %v324, %v356
    %v373 = vsel %vm341, %v325, %v357
    %v374 = vsel %vm342, %v326, %v358
    %v375 = vsel %vm343, %v327, %v359
    %v376 = vsel %vm344, %v328, %v360
    %v377 = vsel %vm345, %v329, %v361
    %v378 = vsel %vm346, %v330, %v362
    %v379 = vsel %vm347, %v331, %v363
    %v380 = vsel %vm348, %v332, %v364
    %v381 = vsel %vm349, %v333, %v365
    %v382 = vsel %vm350, %v334, %v366
    %v383 = vsel %vm351, %v335, %v367
    %v384 = vsel %vm352, %v336, %v368
    %v385 = vsel %vm353, %v337, %v369
    %v386 = vsel %vm354, %v338, %v370
    %v387 = vsel %vm355, %v339, %v371
    %v388 = vld [vmem:[#allocation2 + $0x80] sm:$0xf]
    %v389 = vld [vmem:[#allocation2 + $0x88] sm:$0xf]
    %v390 = vld [vmem:[#allocation2 + $0x90] sm:$0xf]
    %v391 = vld [vmem:[#allocation2 + $0x98] sm:$0xf]
    %v392 = vld [vmem:[#allocation2 + $0xa0] sm:$0xf]
    %v393 = vld [vmem:[#allocation2 + $0xa8] sm:$0xf]
    %v394 = vld [vmem:[#allocation2 + $0xb0] sm:$0xf]
    %v395 = vld [vmem:[#allocation2 + $0xb8] sm:$0xf]
    %v396 = vpack.c.bf16 %v373, %v372
    %v397 = vpack.c.bf16 %v375, %v374
    %v398 = vpack.c.bf16 %v377, %v376
    %v399 = vpack.c.bf16 %v379, %v378
    %v400 = vpack.c.bf16 %v381, %v380
    %v401 = vpack.c.bf16 %v383, %v382
    %v402 = vpack.c.bf16 %v385, %v384
    %v403 = vpack.c.bf16 %v387, %v386
    %412 = vrot.lane.b32.xlu0 %v396, 64
    %v413 = vpop.permute.xlu0 %412
    %414 = vrot.lane.b32.xlu0 %v397, 64
    %v415 = vpop.permute.xlu0 %414
    %416 = vrot.lane.b32.xlu0 %v398, 64
    %v417 = vpop.permute.xlu0 %416
    %418 = vrot.lane.b32.xlu0 %v399, 64
    %v419 = vpop.permute.xlu0 %418
    %420 = vrot.lane.b32.xlu0 %v400, 64
    %v421 = vpop.permute.xlu0 %420
    %422 = vrot.lane.b32.xlu0 %v401, 64
    %v423 = vpop.permute.xlu0 %422
    %424 = vrot.lane.b32.xlu0 %v402, 64
    %v425 = vpop.permute.xlu0 %424
    %426 = vrot.lane.b32.xlu0 %v403, 64
    %v427 = vpop.permute.xlu0 %426
    %v436 = vunpack.c.l.b16 %v388
    %v437 = vunpack.c.l.b16 %v389
    %v438 = vunpack.c.l.b16 %v390
    %v439 = vunpack.c.l.b16 %v391
    %v440 = vunpack.c.l.b16 %v392
    %v441 = vunpack.c.l.b16 %v393
    %v442 = vunpack.c.l.b16 %v394
    %v443 = vunpack.c.l.b16 %v395
    %v444 = vpack.c.b16 %v437, %v436
    %v445 = vpack.c.b16 %v439, %v438
    %v446 = vpack.c.b16 %v441, %v440
    %v447 = vpack.c.b16 %v443, %v442
    %vm452 = vcmask 523264
    %v454 = vsel %vm452, %v413, 0
    %v457 = vsel %vm452, %v415, 0
    %v460 = vsel %vm452, %v417, 0
    %v463 = vsel %vm452, %v419, 0
    %v466 = vsel %vm452, %v421, 0
    %v469 = vsel %vm452, %v423, 0
    %v472 = vsel %vm452, %v425, 0
    %v475 = vsel %vm452, %v427, 0
    %477 = vmatprep.subr.bf16.mxu0 0
    %478 = vmatpush1.bf16.msra.mxu0 %v444
    %479 = vmatprep.subr.bf16.mxu0 0
    %480 = vmatpush1.bf16.msra.mxu0 %v445
    %481 = vmatprep.subr.bf16.mxu0 0
    %482 = vmatpush1.bf16.msra.mxu0 %v446
    %483 = vmatprep.subr.bf16.mxu0 0
    %484 = vmatpush1.bf16.msra.mxu0 %v447
    %485 = vmatprep.subr.bf16.mxu0 0
    %486 = vmatpush1.bf16.msra.mxu0 0
    %487 = vmatprep.subr.bf16.mxu0 0
    %488 = vmatpush1.bf16.msra.mxu0 0
    %489 = vmatprep.subr.bf16.mxu0 0
    %490 = vmatpush1.bf16.msra.mxu0 0
    %491 = vmatprep.subr.bf16.mxu0 0
    %492 = vmatpush1.bf16.msra.mxu0 0
    %493 = vmatprep.subr.bf16.mxu0 0
    %494 = vmatpush1.bf16.msra.mxu0 0
    %495 = vmatprep.subr.bf16.mxu0 0
    %496 = vmatpush1.bf16.msra.mxu0 0
    %497 = vmatprep.subr.bf16.mxu0 0
    %498 = vmatpush1.bf16.msra.mxu0 0
    %499 = vmatprep.subr.bf16.mxu0 0
    %500 = vmatpush1.bf16.msra.mxu0 0
    %501 = vmatprep.subr.bf16.mxu0 0
    %502 = vmatpush1.bf16.msra.mxu0 0
    %503 = vmatprep.subr.bf16.mxu0 0
    %504 = vmatpush1.bf16.msra.mxu0 0
    %505 = vmatprep.subr.bf16.mxu0 0
    %506 = vmatpush1.bf16.msra.mxu0 0
    %507 = vmatprep.subr.bf16.mxu0 0
    %508 = vmatpush1.bf16.msra.mxu0 0
    %509 = vmatprep.mubr.bf16.mxu0 0
    %510 = vmatmul.mubr.bf16.gmra.mrb[0].mxu0 %v454
    %v511 = vpop.f32.mrb[0].mxu0
    %v512 = vadd.f32 0.0, %v511
    %v513 = vpop.f32.mrb[0].mxu0
    %v514 = vpop.f32.mrb[0].mxu0
    %v515 = vadd.f32 0.0, %v514
    %v516 = vpop.f32.mrb[0].mxu0
    %517 = vmatprep.mubr.bf16.mxu0 0
    %518 = vmatmul.mubr.bf16.gmra.mrb[0].mxu0 %v457
    %v519 = vpop.f32.mrb[0].mxu0
    %v520 = vadd.f32 0.0, %v519
    %v521 = vpop.f32.mrb[0].mxu0
    %v522 = vpop.f32.mrb[0].mxu0
    %v523 = vadd.f32 0.0, %v522
    %v524 = vpop.f32.mrb[0].mxu0
    %525 = vmatprep.mubr.bf16.mxu0 0
    %526 = vmatmul.mubr.bf16.gmra.mrb[0].mxu0 %v460
    %v527 = vpop.f32.mrb[0].mxu0
    %v528 = vadd.f32 0.0, %v527
    %v529 = vpop.f32.mrb[0].mxu0
    %v530 = vpop.f32.mrb[0].mxu0
    %v531 = vadd.f32 0.0, %v530
    %v532 = vpop.f32.mrb[0].mxu0
    %533 = vmatprep.mubr.bf16.mxu0 0
    %534 = vmatmul.mubr.bf16.gmra.mrb[0].mxu0 %v463
    %v535 = vpop.f32.mrb[0].mxu0
    %v536 = vadd.f32 0.0, %v535
    %v537 = vpop.f32.mrb[0].mxu0
    %v538 = vpop.f32.mrb[0].mxu0
    %v539 = vadd.f32 0.0, %v538
    %v540 = vpop.f32.mrb[0].mxu0
    %541 = vmatprep.mubr.bf16.mxu0 0
    %542 = vmatmul.mubr.bf16.gmra.mrb[0].mxu0 %v466
    %v543 = vpop.f32.mrb[0].mxu0
    %v544 = vadd.f32 0.0, %v543
    %v545 = vpop.f32.mrb[0].mxu0
    %v546 = vpop.f32.mrb[0].mxu0
    %v547 = vadd.f32 0.0, %v546
    %v548 = vpop.f32.mrb[0].mxu0
    %549 = vmatprep.mubr.bf16.mxu0 0
    %550 = vmatmul.mubr.bf16.gmra.mrb[0].mxu0 %v469
    %v551 = vpop.f32.mrb[0].mxu0
    %v552 = vadd.f32 0.0, %v551
    %v553 = vpop.f32.mrb[0].mxu0
    %v554 = vpop.f32.mrb[0].mxu0
    %v555 = vadd.f32 0.0, %v554
    %v556 = vpop.f32.mrb[0].mxu0
    %557 = vmatprep.mubr.bf16.mxu0 0
    %558 = vmatmul.mubr.bf16.gmra.mrb[0].mxu0 %v472
    %v559 = vpop.f32.mrb[0].mxu0
    %v560 = vadd.f32 0.0, %v559
    %v561 = vpop.f32.mrb[0].mxu0
    %v562 = vpop.f32.mrb[0].mxu0
    %v563 = vadd.f32 0.0, %v562
    %v564 = vpop.f32.mrb[0].mxu0
    %565 = vmatprep.mubr.bf16.mxu0 0
    %566 = vmatmul.mubr.bf16.gmra.mrb[0].mxu0 %v475
    %v567 = vpop.f32.mrb[0].mxu0
    %v568 = vadd.f32 0.0, %v567
    %v569 = vpop.f32.mrb[0].mxu0
    %v570 = vpop.f32.mrb[0].mxu0
    %v571 = vadd.f32 0.0, %v570
    %v572 = vpop.f32.mrb[0].mxu0
    %573 = vdwg.mxu0
    %vm574 = vcmask 15360
    %v575 = vsel %vm574, %v512, -inf
    %v576 = vrot.slane %v575, 4
    %v577 = vmax.f32 %v575, %v576
    %v578 = vrot.slane %v577, 2
    %v579 = vmax.f32 %v577, %v578
    %v580 = vrot.slane %v579, 1
    %v581 = vmax.f32 %v579, %v580
    %v582 = vsel %vm574, %v515, -inf
    %v583 = vrot.slane %v582, 4
    %v584 = vmax.f32 %v582, %v583
    %v585 = vrot.slane %v584, 2
    %v586 = vmax.f32 %v584, %v585
    %v587 = vrot.slane %v586, 1
    %v588 = vmax.f32 %v586, %v587
    %v589 = vsel %vm574, %v520, -inf
    %v590 = vrot.slane %v589, 4
    %v591 = vmax.f32 %v589, %v590
    %v592 = vrot.slane %v591, 2
    %v593 = vmax.f32 %v591, %v592
    %v594 = vrot.slane %v593, 1
    %v595 = vmax.f32 %v593, %v594
    %v596 = vsel %vm574, %v523, -inf
    %v597 = vrot.slane %v596, 4
    %v598 = vmax.f32 %v596, %v597
    %v599 = vrot.slane %v598, 2
    %v600 = vmax.f32 %v598, %v599
    %v601 = vrot.slane %v600, 1
    %v602 = vmax.f32 %v600, %v601
    %v603 = vsel %vm574, %v528, -inf
    %v604 = vrot.slane %v603, 4
    %v605 = vmax.f32 %v603, %v604
    %v606 = vrot.slane %v605, 2
    %v607 = vmax.f32 %v605, %v606
    %v608 = vrot.slane %v607, 1
    %v609 = vmax.f32 %v607, %v608
    %v610 = vsel %vm574, %v531, -inf
    %v611 = vrot.slane %v610, 4
    %v612 = vmax.f32 %v610, %v611
    %v613 = vrot.slane %v612, 2
    %v614 = vmax.f32 %v612, %v613
    %v615 = vrot.slane %v614, 1
    %v616 = vmax.f32 %v614, %v615
    %v617 = vsel %vm574, %v536, -inf
    %v618 = vrot.slane %v617, 4
    %v619 = vmax.f32 %v617, %v618
    %v620 = vrot.slane %v619, 2
    %v621 = vmax.f32 %v619, %v620
    %v622 = vrot.slane %v621, 1
    %v623 = vmax.f32 %v621, %v622
    %v624 = vsel %vm574, %v539, -inf
    %v625 = vrot.slane %v624, 4
    %v626 = vmax.f32 %v624, %v625
    %v627 = vrot.slane %v626, 2
    %v628 = vmax.f32 %v626, %v627
    %v629 = vrot.slane %v628, 1
    %v630 = vmax.f32 %v628, %v629
    %v631 = vsel %vm574, %v544, -inf
    %v632 = vrot.slane %v631, 4
    %v633 = vmax.f32 %v631, %v632
    %v634 = vrot.slane %v633, 2
    %v635 = vmax.f32 %v633, %v634
    %v636 = vrot.slane %v635, 1
    %v637 = vmax.f32 %v635, %v636
    %v638 = vsel %vm574, %v547, -inf
    %v639 = vrot.slane %v638, 4
    %v640 = vmax.f32 %v638, %v639
    %v641 = vrot.slane %v640, 2
    %v642 = vmax.f32 %v640, %v641
    %v643 = vrot.slane %v642, 1
    %v644 = vmax.f32 %v642, %v643
    %v645 = vsel %vm574, %v552, -inf
    %v646 = vrot.slane %v645, 4
    %v647 = vmax.f32 %v645, %v646
    %v648 = vrot.slane %v647, 2
    %v649 = vmax.f32 %v647, %v648
    %v650 = vrot.slane %v649, 1
    %v651 = vmax.f32 %v649, %v650
    %v652 = vsel %vm574, %v555, -inf
    %v653 = vrot.slane %v652, 4
    %v654 = vmax.f32 %v652, %v653
    %v655 = vrot.slane %v654, 2
    %v656 = vmax.f32 %v654, %v655
    %v657 = vrot.slane %v656, 1
    %v658 = vmax.f32 %v656, %v657
    %v659 = vsel %vm574, %v560, -inf
    %v660 = vrot.slane %v659, 4
    %v661 = vmax.f32 %v659, %v660
    %v662 = vrot.slane %v661, 2
    %v663 = vmax.f32 %v661, %v662
    %v664 = vrot.slane %v663, 1
    %v665 = vmax.f32 %v663, %v664
    %v666 = vsel %vm574, %v563, -inf
    %v667 = vrot.slane %v666, 4
    %v668 = vmax.f32 %v666, %v667
    %v669 = vrot.slane %v668, 2
    %v670 = vmax.f32 %v668, %v669
    %v671 = vrot.slane %v670, 1
    %v672 = vmax.f32 %v670, %v671
    %v673 = vsel %vm574, %v568, -inf
    %v674 = vrot.slane %v673, 4
    %v675 = vmax.f32 %v673, %v674
    %v676 = vrot.slane %v675, 2
    %v677 = vmax.f32 %v675, %v676
    %v678 = vrot.slane %v677, 1
    %v679 = vmax.f32 %v677, %v678
    %v680 = vsel %vm574, %v571, -inf
    %v681 = vrot.slane %v680, 4
    %v682 = vmax.f32 %v680, %v681
    %v683 = vrot.slane %v682, 2
    %v684 = vmax.f32 %v682, %v683
    %v685 = vrot.slane %v684, 1
    %v686 = vmax.f32 %v684, %v685
    %v687 = vsub.f32 %v512, %v581
    %v688 = vsub.f32 %v515, %v588
    %v689 = vsub.f32 %v520, %v595
    %v690 = vsub.f32 %v523, %v602
    %v691 = vsub.f32 %v528, %v609
    %v692 = vsub.f32 %v531, %v616
    %v693 = vsub.f32 %v536, %v623
    %v694 = vsub.f32 %v539, %v630
    %v695 = vsub.f32 %v544, %v637
    %v696 = vsub.f32 %v547, %v644
    %v697 = vsub.f32 %v552, %v651
    %v698 = vsub.f32 %v555, %v658
    %v699 = vsub.f32 %v560, %v665
    %v700 = vsub.f32 %v563, %v672
    %v701 = vsub.f32 %v568, %v679
    %v702 = vsub.f32 %v571, %v686
    %v703 = vmul.f32 %v687, 1.442695
    %v704 = vpow.pop %v703
    %v705 = vmul.f32 %v688, 1.442695
    %v706 = vpow.pop %v705
    %v707 = vmul.f32 %v689, 1.442695
    %v708 = vpow.pop %v707
    %v709 = vmul.f32 %v690, 1.442695
    %v710 = vpow.pop %v709
    %v711 = vmul.f32 %v691, 1.442695
    %v712 = vpow.pop %v711
    %v713 = vmul.f32 %v692, 1.442695
    %v714 = vpow.pop %v713
    %v715 = vmul.f32 %v693, 1.442695
    %v716 = vpow.pop %v715
    %v717 = vmul.f32 %v694, 1.442695
    %v718 = vpow.pop %v717
    %v719 = vmul.f32 %v695, 1.442695
    %v720 = vpow.pop %v719
    %v721 = vmul.f32 %v696, 1.442695
    %v722 = vpow.pop %v721
    %v723 = vmul.f32 %v697, 1.442695
    %v724 = vpow.pop %v723
    %v725 = vmul.f32 %v698, 1.442695
    %v726 = vpow.pop %v725
    %v727 = vmul.f32 %v699, 1.442695
    %v728 = vpow.pop %v727
    %v729 = vmul.f32 %v700, 1.442695
    %v730 = vpow.pop %v729
    %v731 = vmul.f32 %v701, 1.442695
    %v732 = vpow.pop %v731
    %v733 = vmul.f32 %v702, 1.442695
    %v734 = vpow.pop %v733
    %v735 = vsel %vm574, %v704, 0.0
    %v736 = vrot.slane %v735, 4
    %v737 = vadd.f32 %v735, %v736
    %v738 = vrot.slane %v737, 2
    %v739 = vadd.f32 %v737, %v738
    %v740 = vrot.slane %v739, 1
    %v741 = vadd.f32 %v739, %v740
    %v742 = vsel %vm574, %v706, 0.0
    %v743 = vrot.slane %v742, 4
    %v744 = vadd.f32 %v742, %v743
    %v745 = vrot.slane %v744, 2
    %v746 = vadd.f32 %v744, %v745
    %v747 = vrot.slane %v746, 1
    %v748 = vadd.f32 %v746, %v747
    %v749 = vsel %vm574, %v708, 0.0
    %v750 = vrot.slane %v749, 4
    %v751 = vadd.f32 %v749, %v750
    %v752 = vrot.slane %v751, 2
    %v753 = vadd.f32 %v751, %v752
    %v754 = vrot.slane %v753, 1
    %v755 = vadd.f32 %v753, %v754
    %v756 = vsel %vm574, %v710, 0.0
    %v757 = vrot.slane %v756, 4
    %v758 = vadd.f32 %v756, %v757
    %v759 = vrot.slane %v758, 2
    %v760 = vadd.f32 %v758, %v759
    %v761 = vrot.slane %v760, 1
    %v762 = vadd.f32 %v760, %v761
    %v763 = vsel %vm574, %v712, 0.0
    %v764 = vrot.slane %v763, 4
    %v765 = vadd.f32 %v763, %v764
    %v766 = vrot.slane %v765, 2
    %v767 = vadd.f32 %v765, %v766
    %v768 = vrot.slane %v767, 1
    %v769 = vadd.f32 %v767, %v768
    %v770 = vsel %vm574, %v714, 0.0
    %v771 = vrot.slane %v770, 4
    %v772 = vadd.f32 %v770, %v771
    %v773 = vrot.slane %v772, 2
    %v774 = vadd.f32 %v772, %v773
    %v775 = vrot.slane %v774, 1
    %v776 = vadd.f32 %v774, %v775
    %v777 = vsel %vm574, %v716, 0.0
    %v778 = vrot.slane %v777, 4
    %v779 = vadd.f32 %v777, %v778
    %v780 = vrot.slane %v779, 2
    %v781 = vadd.f32 %v779, %v780
    %v782 = vrot.slane %v781, 1
    %v783 = vadd.f32 %v781, %v782
    %v784 = vsel %vm574, %v718, 0.0
    %v785 = vrot.slane %v784, 4
    %v786 = vadd.f32 %v784, %v785
    %v787 = vrot.slane %v786, 2
    %v788 = vadd.f32 %v786, %v787
    %v789 = vrot.slane %v788, 1
    %v790 = vadd.f32 %v788, %v789
    %v791 = vsel %vm574, %v720, 0.0
    %v792 = vrot.slane %v791, 4
    %v793 = vadd.f32 %v791, %v792
    %v794 = vrot.slane %v793, 2
    %v795 = vadd.f32 %v793, %v794
    %v796 = vrot.slane %v795, 1
    %v797 = vadd.f32 %v795, %v796
    %v798 = vsel %vm574, %v722, 0.0
    %v799 = vrot.slane %v798, 4
    %v800 = vadd.f32 %v798, %v799
    %v801 = vrot.slane %v800, 2
    %v802 = vadd.f32 %v800, %v801
    %v803 = vrot.slane %v802, 1
    %v804 = vadd.f32 %v802, %v803
    %v805 = vsel %vm574, %v724, 0.0
    %v806 = vrot.slane %v805, 4
    %v807 = vadd.f32 %v805, %v806
    %v808 = vrot.slane %v807, 2
    %v809 = vadd.f32 %v807, %v808
    %v810 = vrot.slane %v809, 1
    %v811 = vadd.f32 %v809, %v810
    %v812 = vsel %vm574, %v726, 0.0
    %v813 = vrot.slane %v812, 4
    %v814 = vadd.f32 %v812, %v813
    %v815 = vrot.slane %v814, 2
    %v816 = vadd.f32 %v814, %v815
    %v817 = vrot.slane %v816, 1
    %v818 = vadd.f32 %v816, %v817
    %v819 = vsel %vm574, %v728, 0.0
    %v820 = vrot.slane %v819, 4
    %v821 = vadd.f32 %v819, %v820
    %v822 = vrot.slane %v821, 2
    %v823 = vadd.f32 %v821, %v822
    %v824 = vrot.slane %v823, 1
    %v825 = vadd.f32 %v823, %v824
    %v826 = vsel %vm574, %v730, 0.0
    %v827 = vrot.slane %v826, 4
    %v828 = vadd.f32 %v826, %v827
    %v829 = vrot.slane %v828, 2
    %v830 = vadd.f32 %v828, %v829
    %v831 = vrot.slane %v830, 1
    %v832 = vadd.f32 %v830, %v831
    %v833 = vsel %vm574, %v732, 0.0
    %v834 = vrot.slane %v833, 4
    %v835 = vadd.f32 %v833, %v834
    %v836 = vrot.slane %v835, 2
    %v837 = vadd.f32 %v835, %v836
    %v838 = vrot.slane %v837, 1
    %v839 = vadd.f32 %v837, %v838
    %v840 = vsel %vm574, %v734, 0.0
    %v841 = vrot.slane %v840, 4
    %v842 = vadd.f32 %v840, %v841
    %v843 = vrot.slane %v842, 2
    %v844 = vadd.f32 %v842, %v843
    %v845 = vrot.slane %v844, 1
    %v846 = vadd.f32 %v844, %v845
    %v847 = vrcp.pop %v741
    %v848 = vrcp.pop %v748
    %v849 = vrcp.pop %v755
    %v850 = vrcp.pop %v762
    %v851 = vrcp.pop %v769
    %v852 = vrcp.pop %v776
    %v853 = vrcp.pop %v783
    %v854 = vrcp.pop %v790
    %v855 = vrcp.pop %v797
    %v856 = vrcp.pop %v804
    %v857 = vrcp.pop %v811
    %v858 = vrcp.pop %v818
    %v859 = vrcp.pop %v825
    %v860 = vrcp.pop %v832
    %v861 = vrcp.pop %v839
    %v862 = vrcp.pop %v846
    %v863 = vmul.f32 %v704, %v847
    %v864 = vmul.f32 %v706, %v848
    %v865 = vmul.f32 %v708, %v849
    %v866 = vmul.f32 %v710, %v850
    %v867 = vmul.f32 %v712, %v851
    %v868 = vmul.f32 %v714, %v852
    %v869 = vmul.f32 %v716, %v853
    %v870 = vmul.f32 %v718, %v854
    %v871 = vmul.f32 %v720, %v855
    %v872 = vmul.f32 %v722, %v856
    %v873 = vmul.f32 %v724, %v857
    %v874 = vmul.f32 %v726, %v858
    %v875 = vmul.f32 %v728, %v859
    %v876 = vmul.f32 %v730, %v860
    %v877 = vmul.f32 %v732, %v861
    %v878 = vmul.f32 %v734, %v862
    %v879 = vpack.c.bf16 %v863, %v863
    %v880 = vpack.c.bf16 %v864, %v864
    %v881 = vpack.c.bf16 %v865, %v865
    %v882 = vpack.c.bf16 %v866, %v866
    %v883 = vpack.c.bf16 %v867, %v867
    %v884 = vpack.c.bf16 %v868, %v868
    %v885 = vpack.c.bf16 %v869, %v869
    %v886 = vpack.c.bf16 %v870, %v870
    %v887 = vpack.c.bf16 %v871, %v871
    %v888 = vpack.c.bf16 %v872, %v872
    %v889 = vpack.c.bf16 %v873, %v873
    %v890 = vpack.c.bf16 %v874, %v874
    %v891 = vpack.c.bf16 %v875, %v875
    %v892 = vpack.c.bf16 %v876, %v876
    %v893 = vpack.c.bf16 %v877, %v877
    %v894 = vpack.c.bf16 %v878, %v878
    %v895 = vpack.c.bf16 %v132, %v132
    %v896 = vpack.c.bf16 %v135, %v135
    %v905 = vunpack.c.l.b16 %v879
    %v906 = vunpack.c.l.b16 %v880
    %v907 = vunpack.c.l.b16 %v881
    %v908 = vunpack.c.l.b16 %v882
    %v909 = vunpack.c.l.b16 %v883
    %v910 = vunpack.c.l.b16 %v884
    %v911 = vunpack.c.l.b16 %v885
    %v912 = vunpack.c.l.b16 %v886
    %913 = vset.pattern.permute.xlu0 0
    %914 = vperm.xlu0 %913, %v905
    %v915 = vpop.permute.xlu0 %914
    %916 = vset.pattern.permute.xlu0 0
    %917 = vperm.xlu0 %916, %v906
    %v918 = vpop.permute.xlu0 %917
    %919 = vset.pattern.permute.xlu0 0
    %920 = vperm.xlu0 %919, %v907
    %v921 = vpop.permute.xlu0 %920
    %922 = vset.pattern.permute.xlu0 0
    %923 = vperm.xlu0 %922, %v908
    %v924 = vpop.permute.xlu0 %923
    %925 = vset.pattern.permute.xlu0 0
    %926 = vperm.xlu0 %925, %v909
    %v927 = vpop.permute.xlu0 %926
    %928 = vset.pattern.permute.xlu0 0
    %929 = vperm.xlu0 %928, %v910
    %v930 = vpop.permute.xlu0 %929
    %931 = vset.pattern.permute.xlu0 0
    %932 = vperm.xlu0 %931, %v911
    %v933 = vpop.permute.xlu0 %932
    %934 = vset.pattern.permute.xlu0 0
    %935 = vperm.xlu0 %934, %v912
    %v936 = vpop.permute.xlu0 %935
    %v937 = vlaneseq
    %v938 = vand.u32 %v937, 127
    %v939 = vlaneseq
    %v940 = vshrl.u32 %v939, 7
    %v941 = vsub.s32 %v938, %v940
    %v942 = vrot.slane %v915, %v941
    %v943 = vlaneseq
    %v944 = vshrl.u32 %v943, 7
    %v945 = vsub.s32 %v938, %v944
    %v946 = vrot.slane %v918, %v945
    %v947 = vlaneseq
    %v948 = vshrl.u32 %v947, 7
    %v949 = vsub.s32 %v938, %v948
    %v950 = vrot.slane %v921, %v949
    %v951 = vlaneseq
    %v952 = vshrl.u32 %v951, 7
    %v953 = vsub.s32 %v938, %v952
    %v954 = vrot.slane %v924, %v953
    %v955 = vlaneseq
    %v956 = vshrl.u32 %v955, 7
    %v957 = vsub.s32 %v938, %v956
    %v958 = vrot.slane %v927, %v957
    %v959 = vlaneseq
    %v960 = vshrl.u32 %v959, 7
    %v961 = vsub.s32 %v938, %v960
    %v962 = vrot.slane %v930, %v961
    %v963 = vlaneseq
    %v964 = vshrl.u32 %v963, 7
    %v965 = vsub.s32 %v938, %v964
    %v966 = vrot.slane %v933, %v965
    %v967 = vlaneseq
    %v968 = vshrl.u32 %v967, 7
    %v969 = vsub.s32 %v938, %v968
    %v970 = vrot.slane %v936, %v969
    %vm971 = vcmask 1041409
    %v972 = vsel %vm971, %v946, %v942
    %vm973 = vcmask 1042434
    %v974 = vsel %vm973, %v950, %v972
    %vm975 = vcmask 1043459
    %v976 = vsel %vm975, %v954, %v974
    %vm977 = vcmask 1044484
    %v978 = vsel %vm977, %v958, %v976
    %vm979 = vcmask 1045509
    %v980 = vsel %vm979, %v962, %v978
    %vm981 = vcmask 1046534
    %v982 = vsel %vm981, %v966, %v980
    %vm983 = vcmask 1047559
    %v984 = vsel %vm983, %v970, %v982
    %v985 = vpack.c.b16 %v984, %v984
    %vm986 = vcmask 64512
    %v988 = vsel %vm986, %v985, 0
    %vm990 = vcmask 1043456
    %v992 = vsel %vm990, %v895, 0
    %994 = vmatprep.subr.bf16.mxu0 0
    %995 = vmatpush1.bf16.msra.mxu0 %v992
    %996 = vmatprep.subr.bf16.mxu0 0
    %997 = vmatpush1.bf16.msra.mxu0 0
    %998 = vmatprep.subr.bf16.mxu0 0
    %999 = vmatpush1.bf16.msra.mxu0 0
    %1000 = vmatprep.subr.bf16.mxu0 0
    %1001 = vmatpush1.bf16.msra.mxu0 0
    %1002 = vmatprep.subr.bf16.mxu0 0
    %1003 = vmatpush1.bf16.msra.mxu0 0
    %1004 = vmatprep.subr.bf16.mxu0 0
    %1005 = vmatpush1.bf16.msra.mxu0 0
    %1006 = vmatprep.subr.bf16.mxu0 0
    %1007 = vmatpush1.bf16.msra.mxu0 0
    %1008 = vmatprep.subr.bf16.mxu0 0
    %1009 = vmatpush1.bf16.msra.mxu0 0
    %1010 = vmatprep.subr.bf16.mxu0 0
    %1011 = vmatpush1.bf16.msra.mxu0 0
    %1012 = vmatprep.subr.bf16.mxu0 0
    %1013 = vmatpush1.bf16.msra.mxu0 0
    %1014 = vmatprep.subr.bf16.mxu0 0
    %1015 = vmatpush1.bf16.msra.mxu0 0
    %1016 = vmatprep.subr.bf16.mxu0 0
    %1017 = vmatpush1.bf16.msra.mxu0 0
    %1018 = vmatprep.subr.bf16.mxu0 0
    %1019 = vmatpush1.bf16.msra.mxu0 0
    %1020 = vmatprep.subr.bf16.mxu0 0
    %1021 = vmatpush1.bf16.msra.mxu0 0
    %1022 = vmatprep.subr.bf16.mxu0 0
    %1023 = vmatpush1.bf16.msra.mxu0 0
    %1024 = vmatprep.subr.bf16.mxu0 0
    %1025 = vmatpush1.bf16.msra.mxu0 0
    %1026 = vmatprep.mubr.bf16.mxu0 0
    %1027 = vmatmul.mubr.bf16.gmra.mrb[0].mxu0 %v988
    %v1028 = vpop.f32.mrb[0].mxu0
    %v1029 = vadd.f32 0.0, %v1028
    %v1030 = vpop.f32.mrb[0].mxu0
    %v1031 = vpop.f32.mrb[0].mxu0
    %v1032 = vpop.f32.mrb[0].mxu0
    %1033 = vdwg.mxu0
    %v1042 = vunpack.c.l.b16 %v887
    %v1043 = vunpack.c.l.b16 %v888
    %v1044 = vunpack.c.l.b16 %v889
    %v1045 = vunpack.c.l.b16 %v890
    %v1046 = vunpack.c.l.b16 %v891
    %v1047 = vunpack.c.l.b16 %v892
    %v1048 = vunpack.c.l.b16 %v893
    %v1049 = vunpack.c.l.b16 %v894
    %1050 = vset.pattern.permute.xlu0 0
    %1051 = vperm.xlu0 %1050, %v1042
    %v1052 = vpop.permute.xlu0 %1051
    %1053 = vset.pattern.permute.xlu0 0
    %1054 = vperm.xlu0 %1053, %v1043
    %v1055 = vpop.permute.xlu0 %1054
    %1056 = vset.pattern.permute.xlu0 0
    %1057 = vperm.xlu0 %1056, %v1044
    %v1058 = vpop.permute.xlu0 %1057
    %1059 = vset.pattern.permute.xlu0 0
    %1060 = vperm.xlu0 %1059, %v1045
    %v1061 = vpop.permute.xlu0 %1060
    %1062 = vset.pattern.permute.xlu0 0
    %1063 = vperm.xlu0 %1062, %v1046
    %v1064 = vpop.permute.xlu0 %1063
    %1065 = vset.pattern.permute.xlu0 0
    %1066 = vperm.xlu0 %1065, %v1047
    %v1067 = vpop.permute.xlu0 %1066
    %1068 = vset.pattern.permute.xlu0 0
    %1069 = vperm.xlu0 %1068, %v1048
    %v1070 = vpop.permute.xlu0 %1069
    %1071 = vset.pattern.permute.xlu0 0
    %1072 = vperm.xlu0 %1071, %v1049
    %v1073 = vpop.permute.xlu0 %1072
    %v1074 = vlaneseq
    %v1075 = vshrl.u32 %v1074, 7
    %v1076 = vsub.s32 %v938, %v1075
    %v1077 = vrot.slane %v1052, %v1076
    %v1078 = vlaneseq
    %v1079 = vshrl.u32 %v1078, 7
    %v1080 = vsub.s32 %v938, %v1079
    %v1081 = vrot.slane %v1055, %v1080
    %v1082 = vlaneseq
    %v1083 = vshrl.u32 %v1082, 7
    %v1084 = vsub.s32 %v938, %v1083
    %v1085 = vrot.slane %v1058, %v1084
    %v1086 = vlaneseq
    %v1087 = vshrl.u32 %v1086, 7
    %v1088 = vsub.s32 %v938, %v1087
    %v1089 = vrot.slane %v1061, %v1088
    %v1090 = vlaneseq
    %v1091 = vshrl.u32 %v1090, 7
    %v1092 = vsub.s32 %v938, %v1091
    %v1093 = vrot.slane %v1064, %v1092
    %v1094 = vlaneseq
    %v1095 = vshrl.u32 %v1094, 7
    %v1096 = vsub.s32 %v938, %v1095
    %v1097 = vrot.slane %v1067, %v1096
    %v1098 = vlaneseq
    %v1099 = vshrl.u32 %v1098, 7
    %v1100 = vsub.s32 %v938, %v1099
    %v1101 = vrot.slane %v1070, %v1100
    %v1102 = vlaneseq
    %v1103 = vshrl.u32 %v1102, 7
    %v1104 = vsub.s32 %v938, %v1103
    %v1105 = vrot.slane %v1073, %v1104
    %v1106 = vsel %vm971, %v1081, %v1077
    %v1107 = vsel %vm973, %v1085, %v1106
    %v1108 = vsel %vm975, %v1089, %v1107
    %v1109 = vsel %vm977, %v1093, %v1108
    %v1110 = vsel %vm979, %v1097, %v1109
    %v1111 = vsel %vm981, %v1101, %v1110
    %v1112 = vsel %vm983, %v1105, %v1111
    %v1113 = vpack.c.b16 %v1112, %v1112
    %v1115 = vsel %vm986, %v1113, 0
    %v1118 = vsel %vm990, %v896, 0
    %1120 = vmatprep.subr.bf16.mxu0 0
    %1121 = vmatpush1.bf16.msra.mxu0 %v1118
    %1122 = vmatprep.subr.bf16.mxu0 0
    %1123 = vmatpush1.bf16.msra.mxu0 0
    %1124 = vmatprep.subr.bf16.mxu0 0
    %1125 = vmatpush1.bf16.msra.mxu0 0
    %1126 = vmatprep.subr.bf16.mxu0 0
    %1127 = vmatpush1.bf16.msra.mxu0 0
    %1128 = vmatprep.subr.bf16.mxu0 0
    %1129 = vmatpush1.bf16.msra.mxu0 0
    %1130 = vmatprep.subr.bf16.mxu0 0
    %1131 = vmatpush1.bf16.msra.mxu0 0
    %1132 = vmatprep.subr.bf16.mxu0 0
    %1133 = vmatpush1.bf16.msra.mxu0 0
    %1134 = vmatprep.subr.bf16.mxu0 0
    %1135 = vmatpush1.bf16.msra.mxu0 0
    %1136 = vmatprep.subr.bf16.mxu0 0
    %1137 = vmatpush1.bf16.msra.mxu0 0
    %1138 = vmatprep.subr.bf16.mxu0 0
    %1139 = vmatpush1.bf16.msra.mxu0 0
    %1140 = vmatprep.subr.bf16.mxu0 0
    %1141 = vmatpush1.bf16.msra.mxu0 0
    %1142 = vmatprep.subr.bf16.mxu0 0
    %1143 = vmatpush1.bf16.msra.mxu0 0
    %1144 = vmatprep.subr.bf16.mxu0 0
    %1145 = vmatpush1.bf16.msra.mxu0 0
    %1146 = vmatprep.subr.bf16.mxu0 0
    %1147 = vmatpush1.bf16.msra.mxu0 0
    %1148 = vmatprep.subr.bf16.mxu0 0
    %1149 = vmatpush1.bf16.msra.mxu0 0
    %1150 = vmatprep.subr.bf16.mxu0 0
    %1151 = vmatpush1.bf16.msra.mxu0 0
    %1152 = vmatprep.mubr.bf16.mxu0 0
    %1153 = vmatmul.mubr.bf16.gmra.mrb[0].mxu0 %v1115
    %v1154 = vpop.f32.mrb[0].mxu0
    %v1155 = vadd.f32 0.0, %v1154
    %v1156 = vpop.f32.mrb[0].mxu0
    %v1157 = vpop.f32.mrb[0].mxu0
    %v1158 = vpop.f32.mrb[0].mxu0
    %1159 = vdwg.mxu0
    %1160 = vset.pattern.permute.xlu0 1
    %1161 = vperm.xlu0 %1160, %v905
    %v1162 = vpop.permute.xlu0 %1161
    %1163 = vset.pattern.permute.xlu0 1
    %1164 = vperm.xlu0 %1163, %v906
    %v1165 = vpop.permute.xlu0 %1164
    %1166 = vset.pattern.permute.xlu0 1
    %1167 = vperm.xlu0 %1166, %v907
    %v1168 = vpop.permute.xlu0 %1167
    %1169 = vset.pattern.permute.xlu0 1
    %1170 = vperm.xlu0 %1169, %v908
    %v1171 = vpop.permute.xlu0 %1170
    %1172 = vset.pattern.permute.xlu0 1
    %1173 = vperm.xlu0 %1172, %v909
    %v1174 = vpop.permute.xlu0 %1173
    %1175 = vset.pattern.permute.xlu0 1
    %1176 = vperm.xlu0 %1175, %v910
    %v1177 = vpop.permute.xlu0 %1176
    %1178 = vset.pattern.permute.xlu0 1
    %1179 = vperm.xlu0 %1178, %v911
    %v1180 = vpop.permute.xlu0 %1179
    %1181 = vset.pattern.permute.xlu0 1
    %1182 = vperm.xlu0 %1181, %v912
    %v1183 = vpop.permute.xlu0 %1182
    %v1184 = vlaneseq
    %v1185 = vshrl.u32 %v1184, 7
    %v1186 = vsub.s32 %v938, %v1185
    %v1187 = vrot.slane %v1162, %v1186
    %v1188 = vlaneseq
    %v1189 = vshrl.u32 %v1188, 7
    %v1190 = vsub.s32 %v938, %v1189
    %v1191 = vrot.slane %v1165, %v1190
    %v1192 = vlaneseq
    %v1193 = vshrl.u32 %v1192, 7
    %v1194 = vsub.s32 %v938, %v1193
    %v1195 = vrot.slane %v1168, %v1194
    %v1196 = vlaneseq
    %v1197 = vshrl.u32 %v1196, 7
    %v1198 = vsub.s32 %v938, %v1197
    %v1199 = vrot.slane %v1171, %v1198
    %v1200 = vlaneseq
    %v1201 = vshrl.u32 %v1200, 7
    %v1202 = vsub.s32 %v938, %v1201
    %v1203 = vrot.slane %v1174, %v1202
    %v1204 = vlaneseq
    %v1205 = vshrl.u32 %v1204, 7
    %v1206 = vsub.s32 %v938, %v1205
    %v1207 = vrot.slane %v1177, %v1206
    %v1208 = vlaneseq
    %v1209 = vshrl.u32 %v1208, 7
    %v1210 = vsub.s32 %v938, %v1209
    %v1211 = vrot.slane %v1180, %v1210
    %v1212 = vlaneseq
    %v1213 = vshrl.u32 %v1212, 7
    %v1214 = vsub.s32 %v938, %v1213
    %v1215 = vrot.slane %v1183, %v1214
    %v1216 = vsel %vm971, %v1191, %v1187
    %v1217 = vsel %vm973, %v1195, %v1216
    %v1218 = vsel %vm975, %v1199, %v1217
    %v1219 = vsel %vm977, %v1203, %v1218
    %v1220 = vsel %vm979, %v1207, %v1219
    %v1221 = vsel %vm981, %v1211, %v1220
    %v1222 = vsel %vm983, %v1215, %v1221
    %v1223 = vpack.c.b16 %v1222, %v1222
    %1225 = vrot.lane.b32.xlu0 %v895, 96
    %v1226 = vpop.permute.xlu0 %1225
    %v1228 = vsel %vm986, %v1223, 0
    %v1231 = vsel %vm990, %v1226, 0
    %1233 = vmatprep.subr.bf16.mxu0 0
    %1234 = vmatpush1.bf16.msra.mxu0 %v1231
    %1235 = vmatprep.subr.bf16.mxu0 0
    %1236 = vmatpush1.bf16.msra.mxu0 0
    %1237 = vmatprep.subr.bf16.mxu0 0
    %1238 = vmatpush1.bf16.msra.mxu0 0
    %1239 = vmatprep.subr.bf16.mxu0 0
    %1240 = vmatpush1.bf16.msra.mxu0 0
    %1241 = vmatprep.subr.bf16.mxu0 0
    %1242 = vmatpush1.bf16.msra.mxu0 0
    %1243 = vmatprep.subr.bf16.mxu0 0
    %1244 = vmatpush1.bf16.msra.mxu0 0
    %1245 = vmatprep.subr.bf16.mxu0 0
    %1246 = vmatpush1.bf16.msra.mxu0 0
    %1247 = vmatprep.subr.bf16.mxu0 0
    %1248 = vmatpush1.bf16.msra.mxu0 0
    %1249 = vmatprep.subr.bf16.mxu0 0
    %1250 = vmatpush1.bf16.msra.mxu0 0
    %1251 = vmatprep.subr.bf16.mxu0 0
    %1252 = vmatpush1.bf16.msra.mxu0 0
    %1253 = vmatprep.subr.bf16.mxu0 0
    %1254 = vmatpush1.bf16.msra.mxu0 0
    %1255 = vmatprep.subr.bf16.mxu0 0
    %1256 = vmatpush1.bf16.msra.mxu0 0
    %1257 = vmatprep.subr.bf16.mxu0 0
    %1258 = vmatpush1.bf16.msra.mxu0 0
    %1259 = vmatprep.subr.bf16.mxu0 0
    %1260 = vmatpush1.bf16.msra.mxu0 0
    %1261 = vmatprep.subr.bf16.mxu0 0
    %1262 = vmatpush1.bf16.msra.mxu0 0
    %1263 = vmatprep.subr.bf16.mxu0 0
    %1264 = vmatpush1.bf16.msra.mxu0 0
    %1265 = vmatprep.mubr.bf16.mxu0 0
    %1266 = vmatmul.mubr.bf16.gmra.mrb[0].mxu0 %v1228
    %v1267 = vpop.f32.mrb[0].mxu0
    %v1268 = vadd.f32 0.0, %v1267
    %v1269 = vpop.f32.mrb[0].mxu0
    %v1270 = vpop.f32.mrb[0].mxu0
    %v1271 = vpop.f32.mrb[0].mxu0
    %1272 = vdwg.mxu0
    %1273 = vset.pattern.permute.xlu0 1
    %1274 = vperm.xlu0 %1273, %v1042
    %v1275 = vpop.permute.xlu0 %1274
    %1276 = vset.pattern.permute.xlu0 1
    %1277 = vperm.xlu0 %1276, %v1043
    %v1278 = vpop.permute.xlu0 %1277
    %1279 = vset.pattern.permute.xlu0 1
    %1280 = vperm.xlu0 %1279, %v1044
    %v1281 = vpop.permute.xlu0 %1280
    %1282 = vset.pattern.permute.xlu0 1
    %1283 = vperm.xlu0 %1282, %v1045
    %v1284 = vpop.permute.xlu0 %1283
    %1285 = vset.pattern.permute.xlu0 1
    %1286 = vperm.xlu0 %1285, %v1046
    %v1287 = vpop.permute.xlu0 %1286
    %1288 = vset.pattern.permute.xlu0 1
    %1289 = vperm.xlu0 %1288, %v1047
    %v1290 = vpop.permute.xlu0 %1289
    %1291 = vset.pattern.permute.xlu0 1
    %1292 = vperm.xlu0 %1291, %v1048
    %v1293 = vpop.permute.xlu0 %1292
    %1294 = vset.pattern.permute.xlu0 1
    %1295 = vperm.xlu0 %1294, %v1049
    %v1296 = vpop.permute.xlu0 %1295
    %v1297 = vlaneseq
    %v1298 = vshrl.u32 %v1297, 7
    %v1299 = vsub.s32 %v938, %v1298
    %v1300 = vrot.slane %v1275, %v1299
    %v1301 = vlaneseq
    %v1302 = vshrl.u32 %v1301, 7
    %v1303 = vsub.s32 %v938, %v1302
    %v1304 = vrot.slane %v1278, %v1303
    %v1305 = vlaneseq
    %v1306 = vshrl.u32 %v1305, 7
    %v1307 = vsub.s32 %v938, %v1306
    %v1308 = vrot.slane %v1281, %v1307
    %v1309 = vlaneseq
    %v1310 = vshrl.u32 %v1309, 7
    %v1311 = vsub.s32 %v938, %v1310
    %v1312 = vrot.slane %v1284, %v1311
    %v1313 = vlaneseq
    %v1314 = vshrl.u32 %v1313, 7
    %v1315 = vsub.s32 %v938, %v1314
    %v1316 = vrot.slane %v1287, %v1315
    %v1317 = vlaneseq
    %v1318 = vshrl.u32 %v1317, 7
    %v1319 = vsub.s32 %v938, %v1318
    %v1320 = vrot.slane %v1290, %v1319
    %v1321 = vlaneseq
    %v1322 = vshrl.u32 %v1321, 7
    %v1323 = vsub.s32 %v938, %v1322
    %v1324 = vrot.slane %v1293, %v1323
    %v1325 = vlaneseq
    %v1326 = vshrl.u32 %v1325, 7
    %v1327 = vsub.s32 %v938, %v1326
    %v1328 = vrot.slane %v1296, %v1327
    %v1329 = vsel %vm971, %v1304, %v1300
    %v1330 = vsel %vm973, %v1308, %v1329
    %v1331 = vsel %vm975, %v1312, %v1330
    %v1332 = vsel %vm977, %v1316, %v1331
    %v1333 = vsel %vm979, %v1320, %v1332
    %v1334 = vsel %vm981, %v1324, %v1333
    %v1335 = vsel %vm983, %v1328, %v1334
    %v1336 = vpack.c.b16 %v1335, %v1335
    %1338 = vrot.lane.b32.xlu0 %v896, 96
    %v1339 = vpop.permute.xlu0 %1338
    %v1341 = vsel %vm986, %v1336, 0
    %v1344 = vsel %vm990, %v1339, 0
    %1346 = vmatprep.subr.bf16.mxu0 0
    %1347 = vmatpush1.bf16.msra.mxu0 %v1344
    %1348 = vmatprep.subr.bf16.mxu0 0
    %1349 = vmatpush1.bf16.msra.mxu0 0
    %1350 = vmatprep.subr.bf16.mxu0 0
    %1351 = vmatpush1.bf16.msra.mxu0 0
    %1352 = vmatprep.subr.bf16.mxu0 0
    %1353 = vmatpush1.bf16.msra.mxu0 0
    %1354 = vmatprep.subr.bf16.mxu0 0
    %1355 = vmatpush1.bf16.msra.mxu0 0
    %1356 = vmatprep.subr.bf16.mxu0 0
    %1357 = vmatpush1.bf16.msra.mxu0 0
    %1358 = vmatprep.subr.bf16.mxu0 0
    %1359 = vmatpush1.bf16.msra.mxu0 0
    %1360 = vmatprep.subr.bf16.mxu0 0
    %1361 = vmatpush1.bf16.msra.mxu0 0
    %1362 = vmatprep.subr.bf16.mxu0 0
    %1363 = vmatpush1.bf16.msra.mxu0 0
    %1364 = vmatprep.subr.bf16.mxu0 0
    %1365 = vmatpush1.bf16.msra.mxu0 0
    %1366 = vmatprep.subr.bf16.mxu0 0
    %1367 = vmatpush1.bf16.msra.mxu0 0
    %1368 = vmatprep.subr.bf16.mxu0 0
    %1369 = vmatpush1.bf16.msra.mxu0 0
    %1370 = vmatprep.subr.bf16.mxu0 0
    %1371 = vmatpush1.bf16.msra.mxu0 0
    %1372 = vmatprep.subr.bf16.mxu0 0
    %1373 = vmatpush1.bf16.msra.mxu0 0
    %1374 = vmatprep.subr.bf16.mxu0 0
    %1375 = vmatpush1.bf16.msra.mxu0 0
    %1376 = vmatprep.subr.bf16.mxu0 0
    %1377 = vmatpush1.bf16.msra.mxu0 0
    %1378 = vmatprep.mubr.bf16.mxu0 0
    %1379 = vmatmul.mubr.bf16.gmra.mrb[0].mxu0 %v1341
    %v1380 = vpop.f32.mrb[0].mxu0
    %v1381 = vadd.f32 0.0, %v1380
    %v1382 = vpop.f32.mrb[0].mxu0
    %v1383 = vpop.f32.mrb[0].mxu0
    %v1384 = vpop.f32.mrb[0].mxu0
    %1385 = vdwg.mxu0
    %1388 = vrot.lane.b32.xlu0 %v1268, 32
    %v1389 = vpop.permute.xlu0 %1388
    %1390 = vrot.lane.b32.xlu0 %v1381, 32
    %v1391 = vpop.permute.xlu0 %1390
    %vm1394 = vcmask 261120
    %v1395 = vsel %vm1394, %v1029, %v1389
    %v1396 = vsel %vm1394, %v1155, %v1391
    %v1397 = vld [vmem:[%s2 + $0x1] ss:$0 sm:$0xff]
    %v1398 = vadd.f32 %v1395, %v1397
    %v1399 = vadd.f32 %v1396, %v1397
    %v1400 = vmul.f32 %v1398, 0.5
    %v1401 = vmul.f32 %v1399, 0.5
    %v1402 = vmul.f32 %v1398, 0.70710677
    %v1403 = vmul.f32 %v1399, 0.70710677
    %v1404 = verf.f32.pop %v1402
    %v1405 = verf.f32.pop %v1403
    %v1406 = vadd.f32 %v1404, 1.0
    %v1407 = vadd.f32 %v1405, 1.0
    %v1408 = vmul.f32 %v1400, %v1406
    %v1409 = vmul.f32 %v1401, %v1407
    %v1410 = vsel %vm452, %v1408, 0.0
    %1411 = vadd.xlane.f32.xlu0 %v1410
    %v1412 = vpop.xlane.xlu0 %1411
    %v1413 = vsel %vm452, %v1409, 0.0
    %1414 = vadd.xlane.f32.xlu0 %v1413
    %v1415 = vpop.xlane.xlu0 %1414
    %v1416 = vrcp.pop 64.0
    %v1417 = vmul.f32 %v1412, %v1416
    %v1418 = vmul.f32 %v1415, %v1416
    %v1419 = vsub.f32 %v1408, %v1417
    %v1420 = vsub.f32 %v1409, %v1418
    %v1421 = vmul.f32 %v1419, %v1419
    %v1422 = vmul.f32 %v1420, %v1420
    %v1423 = vsel %vm452, %v1421, 0.0
    %1424 = vadd.xlane.f32.xlu0 %v1423
    %v1425 = vpop.xlane.xlu0 %1424
    %v1426 = vsel %vm452, %v1422, 0.0
    %1427 = vadd.xlane.f32.xlu0 %v1426
    %v1428 = vpop.xlane.xlu0 %1427
    %v1429 = vmul.f32 %v1425, %v1416
    %v1430 = vmul.f32 %v1428, %v1416
    %v1431 = vadd.f32 %v1429, 1e-05
    %v1432 = vadd.f32 %v1430, 1e-05
    %v1433 = vrsqrt.pop %v1431
    %v1434 = vrsqrt.pop %v1432
    %v1435 = vmul.f32 %v1419, %v1433
    %v1436 = vmul.f32 %v1420, %v1434
    %v1437 = vld [vmem:[#allocation2 + $0xc0] sm:$0xf]
    %v1438 = vld [vmem:[#allocation2 + $0xc8] sm:$0xf]
    %v1439 = vld [vmem:[#allocation2 + $0xd0] sm:$0xf]
    %v1440 = vld [vmem:[#allocation2 + $0xd8] sm:$0xf]
    %v1441 = vld [vmem:[#allocation2 + $0xe0] sm:$0xf]
    %v1442 = vld [vmem:[#allocation2 + $0xe8] sm:$0xf]
    %v1443 = vld [vmem:[#allocation2 + $0xf0] sm:$0xf]
    %v1444 = vld [vmem:[#allocation2 + $0xf8] sm:$0xf]
    %v1445 = vpack.c.bf16 %v1436, %v1435
    %v1446 = vld [vmem:[%s2 + $0x2] ss:$0 sm:$0xff]
    %v1455 = vunpack.c.l.b16 %v1437
    %v1456 = vunpack.c.l.b16 %v1438
    %v1457 = vunpack.c.l.b16 %v1439
    %v1458 = vunpack.c.l.b16 %v1440
    %v1459 = vunpack.c.l.b16 %v1441
    %v1460 = vunpack.c.l.b16 %v1442
    %v1461 = vunpack.c.l.b16 %v1443
    %v1462 = vunpack.c.l.b16 %v1444
    %v1463 = vpack.c.b16 %v1456, %v1455
    %v1464 = vpack.c.b16 %v1458, %v1457
    %v1465 = vpack.c.b16 %v1460, %v1459
    %v1466 = vpack.c.b16 %v1462, %v1461
    %v1472 = vsel %vm452, %v1445, 0
    %1474 = vmatprep.subr.bf16.mxu0 0
    %1475 = vmatpush1.bf16.msra.mxu0 %v1463
    %1476 = vmatprep.subr.bf16.mxu0 0
    %1477 = vmatpush1.bf16.msra.mxu0 %v1464
    %1478 = vmatprep.subr.bf16.mxu0 0
    %1479 = vmatpush1.bf16.msra.mxu0 %v1465
    %1480 = vmatprep.subr.bf16.mxu0 0
    %1481 = vmatpush1.bf16.msra.mxu0 %v1466
    %1482 = vmatprep.subr.bf16.mxu0 0
    %1483 = vmatpush1.bf16.msra.mxu0 0
    %1484 = vmatprep.subr.bf16.mxu0 0
    %1485 = vmatpush1.bf16.msra.mxu0 0
    %1486 = vmatprep.subr.bf16.mxu0 0
    %1487 = vmatpush1.bf16.msra.mxu0 0
    %1488 = vmatprep.subr.bf16.mxu0 0
    %1489 = vmatpush1.bf16.msra.mxu0 0
    %1490 = vmatprep.subr.bf16.mxu0 0
    %1491 = vmatpush1.bf16.msra.mxu0 0
    %1492 = vmatprep.subr.bf16.mxu0 0
    %1493 = vmatpush1.bf16.msra.mxu0 0
    %1494 = vmatprep.subr.bf16.mxu0 0
    %1495 = vmatpush1.bf16.msra.mxu0 0
    %1496 = vmatprep.subr.bf16.mxu0 0
    %1497 = vmatpush1.bf16.msra.mxu0 0
    %1498 = vmatprep.subr.bf16.mxu0 0
    %1499 = vmatpush1.bf16.msra.mxu0 0
    %1500 = vmatprep.subr.bf16.mxu0 0
    %1501 = vmatpush1.bf16.msra.mxu0 0
    %1502 = vmatprep.subr.bf16.mxu0 0
    %1503 = vmatpush1.bf16.msra.mxu0 0
    %1504 = vmatprep.subr.bf16.mxu0 0
    %1505 = vmatpush1.bf16.msra.mxu0 0
    %1506 = vmatprep.mubr.bf16.mxu0 0
    %1507 = vmatmul.mubr.bf16.gmra.mrb[0].mxu0 %v1472
    %v1508 = vpop.f32.mrb[0].mxu0
    %v1509 = vadd.f32 %v1446, %v1508
    %v1510 = vpop.f32.mrb[0].mxu0
    %v1511 = vpop.f32.mrb[0].mxu0
    %v1512 = vadd.f32 %v1446, %v1511
    %v1513 = vpop.f32.mrb[0].mxu0
    %1514 = vdwg.mxu0
    %v1517 = vcombine.high %v1509, %v1509
    %v1519 = vunpack.c.l.s4 1966171168
    %v1520 = vunpack.c.0.s8 %v1519
    %v1521 = vlaneseq
    %v1522 = vshrl.u32 %v1521, 7
    %v1523 = vsub.s32 %v1520, %v1522
    %v1524 = vrot.slane %v1509, %v1523
    %v1526 = vunpack.c.l.s4 1966171168
    %v1527 = vunpack.c.0.s8 %v1526
    %v1528 = vlaneseq
    %v1529 = vshrl.u32 %v1528, 7
    %v1530 = vsub.s32 %v1527, %v1529
    %v1531 = vrot.slane %v1517, %v1530
    %v1532 = vcombine.high %v1524, %v1524
    %v1533 = vcombine.high %v1531, %v1531
    %v1535 = vunpack.c.l.s4 1966171168
    %v1536 = vunpack.c.0.s8 %v1535
    %v1537 = vlaneseq
    %v1538 = vshrl.u32 %v1537, 7
    %v1539 = vsub.s32 %v1536, %v1538
    %v1540 = vrot.slane %v1524, %v1539
    %v1542 = vunpack.c.l.s4 1966171168
    %v1543 = vunpack.c.0.s8 %v1542
    %v1544 = vlaneseq
    %v1545 = vshrl.u32 %v1544, 7
    %v1546 = vsub.s32 %v1543, %v1545
    %v1547 = vrot.slane %v1531, %v1546
    %v1549 = vunpack.c.l.s4 1966171168
    %v1550 = vunpack.c.0.s8 %v1549
    %v1551 = vlaneseq
    %v1552 = vshrl.u32 %v1551, 7
    %v1553 = vsub.s32 %v1550, %v1552
    %v1554 = vrot.slane %v1532, %v1553
    %v1556 = vunpack.c.l.s4 1966171168
    %v1557 = vunpack.c.0.s8 %v1556
    %v1558 = vlaneseq
    %v1559 = vshrl.u32 %v1558, 7
    %v1560 = vsub.s32 %v1557, %v1559
    %v1561 = vrot.slane %v1533, %v1560
    %v1562 = vcombine.high %v1540, %v1540
    %v1563 = vcombine.high %v1547, %v1547
    %v1564 = vcombine.high %v1554, %v1554
    %v1565 = vcombine.high %v1561, %v1561
    %v1566 = vcombine.high %v1512, %v1512
    %v1568 = vunpack.c.l.s4 1966171168
    %v1569 = vunpack.c.0.s8 %v1568
    %v1570 = vlaneseq
    %v1571 = vshrl.u32 %v1570, 7
    %v1572 = vsub.s32 %v1569, %v1571
    %v1573 = vrot.slane %v1512, %v1572
    %v1575 = vunpack.c.l.s4 1966171168
    %v1576 = vunpack.c.0.s8 %v1575
    %v1577 = vlaneseq
    %v1578 = vshrl.u32 %v1577, 7
    %v1579 = vsub.s32 %v1576, %v1578
    %v1580 = vrot.slane %v1566, %v1579
    %v1581 = vcombine.high %v1573, %v1573
    %v1582 = vcombine.high %v1580, %v1580
    %v1584 = vunpack.c.l.s4 1966171168
    %v1585 = vunpack.c.0.s8 %v1584
    %v1586 = vlaneseq
    %v1587 = vshrl.u32 %v1586, 7
    %v1588 = vsub.s32 %v1585, %v1587
    %v1589 = vrot.slane %v1573, %v1588
    %v1591 = vunpack.c.l.s4 1966171168
    %v1592 = vunpack.c.0.s8 %v1591
    %v1593 = vlaneseq
    %v1594 = vshrl.u32 %v1593, 7
    %v1595 = vsub.s32 %v1592, %v1594
    %v1596 = vrot.slane %v1580, %v1595
    %v1598 = vunpack.c.l.s4 1966171168
    %v1599 = vunpack.c.0.s8 %v1598
    %v1600 = vlaneseq
    %v1601 = vshrl.u32 %v1600, 7
    %v1602 = vsub.s32 %v1599, %v1601
    %v1603 = vrot.slane %v1581, %v1602
    %v1605 = vunpack.c.l.s4 1966171168
    %v1606 = vunpack.c.0.s8 %v1605
    %v1607 = vlaneseq
    %v1608 = vshrl.u32 %v1607, 7
    %v1609 = vsub.s32 %v1606, %v1608
    %v1610 = vrot.slane %v1582, %v1609
    %v1611 = vcombine.high %v1589, %v1589
    %v1612 = vcombine.high %v1596, %v1596
    %v1613 = vcombine.high %v1603, %v1603
    %v1614 = vcombine.high %v1610, %v1610
    %v1615 = vlaneseq
    %v1616 = vshrl.u32 %v1615, 7
    %v1617 = vsub.s32 0, %v1616
    %v1618 = vrot.slane %v1540, %v1617
    %v1619 = vlaneseq
    %v1620 = vshrl.u32 %v1619, 7
    %v1621 = vsub.s32 0, %v1620
    %v1622 = vrot.slane %v1554, %v1621
    %v1623 = vlaneseq
    %v1624 = vshrl.u32 %v1623, 7
    %v1625 = vsub.s32 0, %v1624
    %v1626 = vrot.slane %v1562, %v1625
    %v1627 = vlaneseq
    %v1628 = vshrl.u32 %v1627, 7
    %v1629 = vsub.s32 0, %v1628
    %v1630 = vrot.slane %v1564, %v1629
    %v1631 = vlaneseq
    %v1632 = vshrl.u32 %v1631, 7
    %v1633 = vsub.s32 0, %v1632
    %v1634 = vrot.slane %v1547, %v1633
    %v1635 = vlaneseq
    %v1636 = vshrl.u32 %v1635, 7
    %v1637 = vsub.s32 0, %v1636
    %v1638 = vrot.slane %v1561, %v1637
    %v1639 = vlaneseq
    %v1640 = vshrl.u32 %v1639, 7
    %v1641 = vsub.s32 0, %v1640
    %v1642 = vrot.slane %v1563, %v1641
    %v1643 = vlaneseq
    %v1644 = vshrl.u32 %v1643, 7
    %v1645 = vsub.s32 0, %v1644
    %v1646 = vrot.slane %v1565, %v1645
    %v1647 = vlaneseq
    %v1648 = vshrl.u32 %v1647, 7
    %v1649 = vsub.s32 0, %v1648
    %v1650 = vrot.slane %v1589, %v1649
    %v1651 = vlaneseq
    %v1652 = vshrl.u32 %v1651, 7
    %v1653 = vsub.s32 0, %v1652
    %v1654 = vrot.slane %v1603, %v1653
    %v1655 = vlaneseq
    %v1656 = vshrl.u32 %v1655, 7
    %v1657 = vsub.s32 0, %v1656
    %v1658 = vrot.slane %v1611, %v1657
    %v1659 = vlaneseq
    %v1660 = vshrl.u32 %v1659, 7
    %v1661 = vsub.s32 0, %v1660
    %v1662 = vrot.slane %v1613, %v1661
    %v1663 = vlaneseq
    %v1664 = vshrl.u32 %v1663, 7
    %v1665 = vsub.s32 0, %v1664
    %v1666 = vrot.slane %v1596, %v1665
    %v1667 = vlaneseq
    %v1668 = vshrl.u32 %v1667, 7
    %v1669 = vsub.s32 0, %v1668
    %v1670 = vrot.slane %v1610, %v1669
    %v1671 = vlaneseq
    %v1672 = vshrl.u32 %v1671, 7
    %v1673 = vsub.s32 0, %v1672
    %v1674 = vrot.slane %v1612, %v1673
    %v1675 = vlaneseq
    %v1676 = vshrl.u32 %v1675, 7
    %v1677 = vsub.s32 0, %v1676
    %v1678 = vrot.slane %v1614, %v1677
    %1695 = vrot.lane.b32.xlu0 %v1509, 32
    %v1696 = vpop.permute.xlu0 %1695
    %1697 = vrot.lane.b32.xlu0 %v1512, 32
    %v1698 = vpop.permute.xlu0 %1697
    %v1701 = vadd.f32 %v1618, %v1696
    %v1702 = vadd.f32 %v1622, %v1696
    %v1703 = vadd.f32 %v1626, %v1696
    %v1704 = vadd.f32 %v1630, %v1696
    %v1705 = vadd.f32 %v1634, %v1696
    %v1706 = vadd.f32 %v1638, %v1696
    %v1707 = vadd.f32 %v1642, %v1696
    %v1708 = vadd.f32 %v1646, %v1696
    %v1709 = vadd.f32 %v1650, %v1698
    %v1710 = vadd.f32 %v1654, %v1698
    %v1711 = vadd.f32 %v1658, %v1698
    %v1712 = vadd.f32 %v1662, %v1698
    %v1713 = vadd.f32 %v1666, %v1698
    %v1714 = vadd.f32 %v1670, %v1698
    %v1715 = vadd.f32 %v1674, %v1698
    %v1716 = vadd.f32 %v1678, %v1698
    %vm1717 = vcmp.gt.f32.partialorder %v1701, 0.0
    %vm1718 = vcmp.gt.f32.partialorder %v1702, 0.0
    %vm1719 = vcmp.gt.f32.partialorder %v1703, 0.0
    %vm1720 = vcmp.gt.f32.partialorder %v1704, 0.0
    %vm1721 = vcmp.gt.f32.partialorder %v1705, 0.0
    %vm1722 = vcmp.gt.f32.partialorder %v1706, 0.0
    %vm1723 = vcmp.gt.f32.partialorder %v1707, 0.0
    %vm1724 = vcmp.gt.f32.partialorder %v1708, 0.0
    %vm1725 = vcmp.gt.f32.partialorder %v1709, 0.0
    %vm1726 = vcmp.gt.f32.partialorder %v1710, 0.0
    %vm1727 = vcmp.gt.f32.partialorder %v1711, 0.0
    %vm1728 = vcmp.gt.f32.partialorder %v1712, 0.0
    %vm1729 = vcmp.gt.f32.partialorder %v1713, 0.0
    %vm1730 = vcmp.gt.f32.partialorder %v1714, 0.0
    %vm1731 = vcmp.gt.f32.partialorder %v1715, 0.0
    %vm1732 = vcmp.gt.f32.partialorder %v1716, 0.0
    %v1733 = vmul.f32 %v1701, 0.2
    %v1734 = vmul.f32 %v1702, 0.2
    %v1735 = vmul.f32 %v1703, 0.2
    %v1736 = vmul.f32 %v1704, 0.2
    %v1737 = vmul.f32 %v1705, 0.2
    %v1738 = vmul.f32 %v1706, 0.2
    %v1739 = vmul.f32 %v1707, 0.2
    %v1740 = vmul.f32 %v1708, 0.2
    %v1741 = vmul.f32 %v1709, 0.2
    %v1742 = vmul.f32 %v1710, 0.2
    %v1743 = vmul.f32 %v1711, 0.2
    %v1744 = vmul.f32 %v1712, 0.2
    %v1745 = vmul.f32 %v1713, 0.2
    %v1746 = vmul.f32 %v1714, 0.2
    %v1747 = vmul.f32 %v1715, 0.2
    %v1748 = vmul.f32 %v1716, 0.2
    %v1749 = vsel %vm1717, %v1701, %v1733
    %v1750 = vsel %vm1718, %v1702, %v1734
    %v1751 = vsel %vm1719, %v1703, %v1735
    %v1752 = vsel %vm1720, %v1704, %v1736
    %v1753 = vsel %vm1721, %v1705, %v1737
    %v1754 = vsel %vm1722, %v1706, %v1738
    %v1755 = vsel %vm1723, %v1707, %v1739
    %v1756 = vsel %vm1724, %v1708, %v1740
    %v1757 = vsel %vm1725, %v1709, %v1741
    %v1758 = vsel %vm1726, %v1710, %v1742
    %v1759 = vsel %vm1727, %v1711, %v1743
    %v1760 = vsel %vm1728, %v1712, %v1744
    %v1761 = vsel %vm1729, %v1713, %v1745
    %v1762 = vsel %vm1730, %v1714, %v1746
    %v1763 = vsel %vm1731, %v1715, %v1747
    %v1764 = vsel %vm1732, %v1716, %v1748
    %v1765 = vld [vmem:[#allocation2 + $0x100] sm:$0xf]
    %v1766 = vld [vmem:[#allocation2 + $0x108] sm:$0xf]
    %v1767 = vld [vmem:[#allocation2 + $0x110] sm:$0xf]
    %v1768 = vld [vmem:[#allocation2 + $0x118] sm:$0xf]
    %v1769 = vpack.c.bf16 %v1750, %v1749
    %v1770 = vpack.c.bf16 %v1752, %v1751
    %v1771 = vpack.c.bf16 %v1754, %v1753
    %v1772 = vpack.c.bf16 %v1756, %v1755
    %v1773 = vpack.c.bf16 %v1758, %v1757
    %v1774 = vpack.c.bf16 %v1760, %v1759
    %v1775 = vpack.c.bf16 %v1762, %v1761
    %v1776 = vpack.c.bf16 %v1764, %v1763
    %1785 = vrot.lane.b32.xlu0 %v1769, 96
    %v1786 = vpop.permute.xlu0 %1785
    %1787 = vrot.lane.b32.xlu0 %v1770, 96
    %v1788 = vpop.permute.xlu0 %1787
    %1789 = vrot.lane.b32.xlu0 %v1771, 96
    %v1790 = vpop.permute.xlu0 %1789
    %1791 = vrot.lane.b32.xlu0 %v1772, 96
    %v1792 = vpop.permute.xlu0 %1791
    %1793 = vrot.lane.b32.xlu0 %v1773, 96
    %v1794 = vpop.permute.xlu0 %1793
    %1795 = vrot.lane.b32.xlu0 %v1774, 96
    %v1796 = vpop.permute.xlu0 %1795
    %1797 = vrot.lane.b32.xlu0 %v1775, 96
    %v1798 = vpop.permute.xlu0 %1797
    %1799 = vrot.lane.b32.xlu0 %v1776, 96
    %v1800 = vpop.permute.xlu0 %1799
    %v1805 = vunpack.c.l.b16 %v1765
    %v1806 = vunpack.c.l.b16 %v1766
    %v1807 = vunpack.c.l.b16 %v1767
    %v1808 = vunpack.c.l.b16 %v1768
    %v1809 = vpack.c.b16 %v1806, %v1805
    %v1810 = vpack.c.b16 %v1808, %v1807
    %v1814 = vsel %vm1394, %v1786, 0
    %v1817 = vsel %vm1394, %v1788, 0
    %v1820 = vsel %vm1394, %v1790, 0
    %v1823 = vsel %vm1394, %v1792, 0
    %v1826 = vsel %vm1394, %v1794, 0
    %v1829 = vsel %vm1394, %v1796, 0
    %v1832 = vsel %vm1394, %v1798, 0
    %v1835 = vsel %vm1394, %v1800, 0
    %1837 = vmatprep.subr.bf16.mxu0 0
    %1838 = vmatpush1.bf16.msra.mxu0 %v1809
    %1839 = vmatprep.subr.bf16.mxu0 0
    %1840 = vmatpush1.bf16.msra.mxu0 %v1810
    %1841 = vmatprep.subr.bf16.mxu0 0
    %1842 = vmatpush1.bf16.msra.mxu0 0
    %1843 = vmatprep.subr.bf16.mxu0 0
    %1844 = vmatpush1.bf16.msra.mxu0 0
    %1845 = vmatprep.subr.bf16.mxu0 0
    %1846 = vmatpush1.bf16.msra.mxu0 0
    %1847 = vmatprep.subr.bf16.mxu0 0
    %1848 = vmatpush1.bf16.msra.mxu0 0
    %1849 = vmatprep.subr.bf16.mxu0 0
    %1850 = vmatpush1.bf16.msra.mxu0 0
    %1851 = vmatprep.subr.bf16.mxu0 0
    %1852 = vmatpush1.bf16.msra.mxu0 0
    %1853 = vmatprep.subr.bf16.mxu0 0
    %1854 = vmatpush1.bf16.msra.mxu0 0
    %1855 = vmatprep.subr.bf16.mxu0 0
    %1856 = vmatpush1.bf16.msra.mxu0 0
    %1857 = vmatprep.subr.bf16.mxu0 0
    %1858 = vmatpush1.bf16.msra.mxu0 0
    %1859 = vmatprep.subr.bf16.mxu0 0
    %1860 = vmatpush1.bf16.msra.mxu0 0
    %1861 = vmatprep.subr.bf16.mxu0 0
    %1862 = vmatpush1.bf16.msra.mxu0 0
    %1863 = vmatprep.subr.bf16.mxu0 0
    %1864 = vmatpush1.bf16.msra.mxu0 0
    %1865 = vmatprep.subr.bf16.mxu0 0
    %1866 = vmatpush1.bf16.msra.mxu0 0
    %1867 = vmatprep.subr.bf16.mxu0 0
    %1868 = vmatpush1.bf16.msra.mxu0 0
    %1869 = vmatprep.mubr.bf16.mxu0 0
    %1870 = vmatmul.mubr.bf16.gmra.mrb[0].mxu0 %v1814
    %v1871 = vpop.f32.mrb[0].mxu0
    %v1872 = vadd.f32 0.0, %v1871
    %v1873 = vpop.f32.mrb[0].mxu0
    %v1874 = vpop.f32.mrb[0].mxu0
    %v1875 = vadd.f32 0.0, %v1874
    %v1876 = vpop.f32.mrb[0].mxu0
    %1877 = vmatprep.mubr.bf16.mxu0 0
    %1878 = vmatmul.mubr.bf16.gmra.mrb[0].mxu0 %v1817
    %v1879 = vpop.f32.mrb[0].mxu0
    %v1880 = vadd.f32 0.0, %v1879
    %v1881 = vpop.f32.mrb[0].mxu0
    %v1882 = vpop.f32.mrb[0].mxu0
    %v1883 = vadd.f32 0.0, %v1882
    %v1884 = vpop.f32.mrb[0].mxu0
    %1885 = vmatprep.mubr.bf16.mxu0 0
    %1886 = vmatmul.mubr.bf16.gmra.mrb[0].mxu0 %v1820
    %v1887 = vpop.f32.mrb[0].mxu0
    %v1888 = vadd.f32 0.0, %v1887
    %v1889 = vpop.f32.mrb[0].mxu0
    %v1890 = vpop.f32.mrb[0].mxu0
    %v1891 = vadd.f32 0.0, %v1890
    %v1892 = vpop.f32.mrb[0].mxu0
    %1893 = vmatprep.mubr.bf16.mxu0 0
    %1894 = vmatmul.mubr.bf16.gmra.mrb[0].mxu0 %v1823
    %v1895 = vpop.f32.mrb[0].mxu0
    %v1896 = vadd.f32 0.0, %v1895
    %v1897 = vpop.f32.mrb[0].mxu0
    %v1898 = vpop.f32.mrb[0].mxu0
    %v1899 = vadd.f32 0.0, %v1898
    %v1900 = vpop.f32.mrb[0].mxu0
    %1901 = vmatprep.mubr.bf16.mxu0 0
    %1902 = vmatmul.mubr.bf16.gmra.mrb[0].mxu0 %v1826
    %v1903 = vpop.f32.mrb[0].mxu0
    %v1904 = vadd.f32 0.0, %v1903
    %v1905 = vpop.f32.mrb[0].mxu0
    %v1906 = vpop.f32.mrb[0].mxu0
    %v1907 = vadd.f32 0.0, %v1906
    %v1908 = vpop.f32.mrb[0].mxu0
    %1909 = vmatprep.mubr.bf16.mxu0 0
    %1910 = vmatmul.mubr.bf16.gmra.mrb[0].mxu0 %v1829
    %v1911 = vpop.f32.mrb[0].mxu0
    %v1912 = vadd.f32 0.0, %v1911
    %v1913 = vpop.f32.mrb[0].mxu0
    %v1914 = vpop.f32.mrb[0].mxu0
    %v1915 = vadd.f32 0.0, %v1914
    %v1916 = vpop.f32.mrb[0].mxu0
    %1917 = vmatprep.mubr.bf16.mxu0 0
    %1918 = vmatmul.mubr.bf16.gmra.mrb[0].mxu0 %v1832
    %v1919 = vpop.f32.mrb[0].mxu0
    %v1920 = vadd.f32 0.0, %v1919
    %v1921 = vpop.f32.mrb[0].mxu0
    %v1922 = vpop.f32.mrb[0].mxu0
    %v1923 = vadd.f32 0.0, %v1922
    %v1924 = vpop.f32.mrb[0].mxu0
    %1925 = vmatprep.mubr.bf16.mxu0 0
    %1926 = vmatmul.mubr.bf16.gmra.mrb[0].mxu0 %v1835
    %v1927 = vpop.f32.mrb[0].mxu0
    %v1928 = vadd.f32 0.0, %v1927
    %v1929 = vpop.f32.mrb[0].mxu0
    %v1930 = vpop.f32.mrb[0].mxu0
    %v1931 = vadd.f32 0.0, %v1930
    %v1932 = vpop.f32.mrb[0].mxu0
    %1933 = vdwg.mxu0
    %1950 = vset.pattern.permute.xlu0 0
    %1951 = vperm.xlu0 %1950, %v1872
    %v1952 = vpop.permute.xlu0 %1951
    %1953 = vset.pattern.permute.xlu0 0
    %1954 = vperm.xlu0 %1953, %v1875
    %v1955 = vpop.permute.xlu0 %1954
    %1956 = vset.pattern.permute.xlu0 0
    %1957 = vperm.xlu0 %1956, %v1880
    %v1958 = vpop.permute.xlu0 %1957
    %1959 = vset.pattern.permute.xlu0 0
    %1960 = vperm.xlu0 %1959, %v1883
    %v1961 = vpop.permute.xlu0 %1960
    %1962 = vset.pattern.permute.xlu0 0
    %1963 = vperm.xlu0 %1962, %v1888
    %v1964 = vpop.permute.xlu0 %1963
    %1965 = vset.pattern.permute.xlu0 0
    %1966 = vperm.xlu0 %1965, %v1891
    %v1967 = vpop.permute.xlu0 %1966
    %1968 = vset.pattern.permute.xlu0 0
    %1969 = vperm.xlu0 %1968, %v1896
    %v1970 = vpop.permute.xlu0 %1969
    %1971 = vset.pattern.permute.xlu0 0
    %1972 = vperm.xlu0 %1971, %v1899
    %v1973 = vpop.permute.xlu0 %1972
    %1974 = vset.pattern.permute.xlu0 0
    %1975 = vperm.xlu0 %1974, %v1904
    %v1976 = vpop.permute.xlu0 %1975
    %1977 = vset.pattern.permute.xlu0 0
    %1978 = vperm.xlu0 %1977, %v1907
    %v1979 = vpop.permute.xlu0 %1978
    %1980 = vset.pattern.permute.xlu0 0
    %1981 = vperm.xlu0 %1980, %v1912
    %v1982 = vpop.permute.xlu0 %1981
    %1983 = vset.pattern.permute.xlu0 0
    %1984 = vperm.xlu0 %1983, %v1915
    %v1985 = vpop.permute.xlu0 %1984
    %1986 = vset.pattern.permute.xlu0 0
    %1987 = vperm.xlu0 %1986, %v1920
    %v1988 = vpop.permute.xlu0 %1987
    %1989 = vset.pattern.permute.xlu0 0
    %1990 = vperm.xlu0 %1989, %v1923
    %v1991 = vpop.permute.xlu0 %1990
    %1992 = vset.pattern.permute.xlu0 0
    %1993 = vperm.xlu0 %1992, %v1928
    %v1994 = vpop.permute.xlu0 %1993
    %1995 = vset.pattern.permute.xlu0 0
    %1996 = vperm.xlu0 %1995, %v1931
    %v1997 = vpop.permute.xlu0 %1996
    %v1998 = vlaneseq
    %v1999 = vshrl.u32 %v1998, 7
    %v2000 = vsub.s32 %v938, %v1999
    %v2001 = vrot.slane %v1952, %v2000
    %v2002 = vlaneseq
    %v2003 = vshrl.u32 %v2002, 7
    %v2004 = vsub.s32 %v938, %v2003
    %v2005 = vrot.slane %v1955, %v2004
    %v2006 = vlaneseq
    %v2007 = vshrl.u32 %v2006, 7
    %v2008 = vsub.s32 %v938, %v2007
    %v2009 = vrot.slane %v1958, %v2008
    %v2010 = vlaneseq
    %v2011 = vshrl.u32 %v2010, 7
    %v2012 = vsub.s32 %v938, %v2011
    %v2013 = vrot.slane %v1961, %v2012
    %v2014 = vlaneseq
    %v2015 = vshrl.u32 %v2014, 7
    %v2016 = vsub.s32 %v938, %v2015
    %v2017 = vrot.slane %v1964, %v2016
    %v2018 = vlaneseq
    %v2019 = vshrl.u32 %v2018, 7
    %v2020 = vsub.s32 %v938, %v2019
    %v2021 = vrot.slane %v1967, %v2020
    %v2022 = vlaneseq
    %v2023 = vshrl.u32 %v2022, 7
    %v2024 = vsub.s32 %v938, %v2023
    %v2025 = vrot.slane %v1970, %v2024
    %v2026 = vlaneseq
    %v2027 = vshrl.u32 %v2026, 7
    %v2028 = vsub.s32 %v938, %v2027
    %v2029 = vrot.slane %v1973, %v2028
    %v2030 = vlaneseq
    %v2031 = vshrl.u32 %v2030, 7
    %v2032 = vsub.s32 %v938, %v2031
    %v2033 = vrot.slane %v1976, %v2032
    %v2034 = vlaneseq
    %v2035 = vshrl.u32 %v2034, 7
    %v2036 = vsub.s32 %v938, %v2035
    %v2037 = vrot.slane %v1979, %v2036
    %v2038 = vlaneseq
    %v2039 = vshrl.u32 %v2038, 7
    %v2040 = vsub.s32 %v938, %v2039
    %v2041 = vrot.slane %v1982, %v2040
    %v2042 = vlaneseq
    %v2043 = vshrl.u32 %v2042, 7
    %v2044 = vsub.s32 %v938, %v2043
    %v2045 = vrot.slane %v1985, %v2044
    %v2046 = vlaneseq
    %v2047 = vshrl.u32 %v2046, 7
    %v2048 = vsub.s32 %v938, %v2047
    %v2049 = vrot.slane %v1988, %v2048
    %v2050 = vlaneseq
    %v2051 = vshrl.u32 %v2050, 7
    %v2052 = vsub.s32 %v938, %v2051
    %v2053 = vrot.slane %v1991, %v2052
    %v2054 = vlaneseq
    %v2055 = vshrl.u32 %v2054, 7
    %v2056 = vsub.s32 %v938, %v2055
    %v2057 = vrot.slane %v1994, %v2056
    %v2058 = vlaneseq
    %v2059 = vshrl.u32 %v2058, 7
    %v2060 = vsub.s32 %v938, %v2059
    %v2061 = vrot.slane %v1997, %v2060
    %v2062 = vsel %vm971, %v2005, %v2001
    %v2063 = vsel %vm973, %v2009, %v2062
    %v2064 = vsel %vm975, %v2013, %v2063
    %v2065 = vsel %vm977, %v2017, %v2064
    %v2066 = vsel %vm979, %v2021, %v2065
    %v2067 = vsel %vm981, %v2025, %v2066
    %v2068 = vsel %vm983, %v2029, %v2067
    %v2069 = vsel %vm971, %v2037, %v2033
    %v2070 = vsel %vm973, %v2041, %v2069
    %v2071 = vsel %vm975, %v2045, %v2070
    %v2072 = vsel %vm977, %v2049, %v2071
    %v2073 = vsel %vm979, %v2053, %v2072
    %v2074 = vsel %vm981, %v2057, %v2073
    %v2075 = vsel %vm983, %v2061, %v2074
    %v2078 = vsel %vm986, %v2068, -inf
    %2079 = vmax.xlane.f32.xlu0 %v2078
    %v2080 = vpop.xlane.xlu0 %2079
    %v2081 = vsel %vm986, %v2075, -inf
    %2082 = vmax.xlane.f32.xlu0 %v2081
    %v2083 = vpop.xlane.xlu0 %2082
    %v2086 = vlaneseq
    %v2087 = vshrl.u32 %v2086, 7
    %v2088 = vsub.s32 0, %v2087
    %v2089 = vrot.slane %v2080, %v2088
    %v2090 = vlaneseq
    %v2091 = vshrl.u32 %v2090, 7
    %v2092 = vsub.s32 1, %v2091
    %v2093 = vrot.slane %v2080, %v2092
    %v2094 = vlaneseq
    %v2095 = vshrl.u32 %v2094, 7
    %v2096 = vsub.s32 2, %v2095
    %v2097 = vrot.slane %v2080, %v2096
    %v2098 = vlaneseq
    %v2099 = vshrl.u32 %v2098, 7
    %v2100 = vsub.s32 3, %v2099
    %v2101 = vrot.slane %v2080, %v2100
    %v2102 = vlaneseq
    %v2103 = vshrl.u32 %v2102, 7
    %v2104 = vsub.s32 4, %v2103
    %v2105 = vrot.slane %v2080, %v2104
    %v2106 = vlaneseq
    %v2107 = vshrl.u32 %v2106, 7
    %v2108 = vsub.s32 5, %v2107
    %v2109 = vrot.slane %v2080, %v2108
    %v2110 = vlaneseq
    %v2111 = vshrl.u32 %v2110, 7
    %v2112 = vsub.s32 6, %v2111
    %v2113 = vrot.slane %v2080, %v2112
    %v2114 = vlaneseq
    %v2115 = vshrl.u32 %v2114, 7
    %v2116 = vsub.s32 7, %v2115
    %v2117 = vrot.slane %v2080, %v2116
    %v2118 = vlaneseq
    %v2119 = vshrl.u32 %v2118, 7
    %v2120 = vsub.s32 0, %v2119
    %v2121 = vrot.slane %v2083, %v2120
    %v2122 = vlaneseq
    %v2123 = vshrl.u32 %v2122, 7
    %v2124 = vsub.s32 1, %v2123
    %v2125 = vrot.slane %v2083, %v2124
    %v2126 = vlaneseq
    %v2127 = vshrl.u32 %v2126, 7
    %v2128 = vsub.s32 2, %v2127
    %v2129 = vrot.slane %v2083, %v2128
    %v2130 = vlaneseq
    %v2131 = vshrl.u32 %v2130, 7
    %v2132 = vsub.s32 3, %v2131
    %v2133 = vrot.slane %v2083, %v2132
    %v2134 = vlaneseq
    %v2135 = vshrl.u32 %v2134, 7
    %v2136 = vsub.s32 4, %v2135
    %v2137 = vrot.slane %v2083, %v2136
    %v2138 = vlaneseq
    %v2139 = vshrl.u32 %v2138, 7
    %v2140 = vsub.s32 5, %v2139
    %v2141 = vrot.slane %v2083, %v2140
    %v2142 = vlaneseq
    %v2143 = vshrl.u32 %v2142, 7
    %v2144 = vsub.s32 6, %v2143
    %v2145 = vrot.slane %v2083, %v2144
    %v2146 = vlaneseq
    %v2147 = vshrl.u32 %v2146, 7
    %v2148 = vsub.s32 7, %v2147
    %v2149 = vrot.slane %v2083, %v2148
    %v2166 = vsub.f32 %v1872, %v2089
    %v2167 = vsub.f32 %v1875, %v2093
    %v2168 = vsub.f32 %v1880, %v2097
    %v2169 = vsub.f32 %v1883, %v2101
    %v2170 = vsub.f32 %v1888, %v2105
    %v2171 = vsub.f32 %v1891, %v2109
    %v2172 = vsub.f32 %v1896, %v2113
    %v2173 = vsub.f32 %v1899, %v2117
    %v2174 = vsub.f32 %v1904, %v2121
    %v2175 = vsub.f32 %v1907, %v2125
    %v2176 = vsub.f32 %v1912, %v2129
    %v2177 = vsub.f32 %v1915, %v2133
    %v2178 = vsub.f32 %v1920, %v2137
    %v2179 = vsub.f32 %v1923, %v2141
    %v2180 = vsub.f32 %v1928, %v2145
    %v2181 = vsub.f32 %v1931, %v2149
    %v2182 = vmul.f32 %v2166, 1.442695
    %v2183 = vpow.pop %v2182
    %v2184 = vmul.f32 %v2167, 1.442695
    %v2185 = vpow.pop %v2184
    %v2186 = vmul.f32 %v2168, 1.442695
    %v2187 = vpow.pop %v2186
    %v2188 = vmul.f32 %v2169, 1.442695
    %v2189 = vpow.pop %v2188
    %v2190 = vmul.f32 %v2170, 1.442695
    %v2191 = vpow.pop %v2190
    %v2192 = vmul.f32 %v2171, 1.442695
    %v2193 = vpow.pop %v2192
    %v2194 = vmul.f32 %v2172, 1.442695
    %v2195 = vpow.pop %v2194
    %v2196 = vmul.f32 %v2173, 1.442695
    %v2197 = vpow.pop %v2196
    %v2198 = vmul.f32 %v2174, 1.442695
    %v2199 = vpow.pop %v2198
    %v2200 = vmul.f32 %v2175, 1.442695
    %v2201 = vpow.pop %v2200
    %v2202 = vmul.f32 %v2176, 1.442695
    %v2203 = vpow.pop %v2202
    %v2204 = vmul.f32 %v2177, 1.442695
    %v2205 = vpow.pop %v2204
    %v2206 = vmul.f32 %v2178, 1.442695
    %v2207 = vpow.pop %v2206
    %v2208 = vmul.f32 %v2179, 1.442695
    %v2209 = vpow.pop %v2208
    %v2210 = vmul.f32 %v2180, 1.442695
    %v2211 = vpow.pop %v2210
    %v2212 = vmul.f32 %v2181, 1.442695
    %v2213 = vpow.pop %v2212
    %2230 = vset.pattern.permute.xlu0 0
    %2231 = vperm.xlu0 %2230, %v2183
    %v2232 = vpop.permute.xlu0 %2231
    %2233 = vset.pattern.permute.xlu0 0
    %2234 = vperm.xlu0 %2233, %v2185
    %v2235 = vpop.permute.xlu0 %2234
    %2236 = vset.pattern.permute.xlu0 0
    %2237 = vperm.xlu0 %2236, %v2187
    %v2238 = vpop.permute.xlu0 %2237
    %2239 = vset.pattern.permute.xlu0 0
    %2240 = vperm.xlu0 %2239, %v2189
    %v2241 = vpop.permute.xlu0 %2240
    %2242 = vset.pattern.permute.xlu0 0
    %2243 = vperm.xlu0 %2242, %v2191
    %v2244 = vpop.permute.xlu0 %2243
    %2245 = vset.pattern.permute.xlu0 0
    %2246 = vperm.xlu0 %2245, %v2193
    %v2247 = vpop.permute.xlu0 %2246
    %2248 = vset.pattern.permute.xlu0 0
    %2249 = vperm.xlu0 %2248, %v2195
    %v2250 = vpop.permute.xlu0 %2249
    %2251 = vset.pattern.permute.xlu0 0
    %2252 = vperm.xlu0 %2251, %v2197
    %v2253 = vpop.permute.xlu0 %2252
    %2254 = vset.pattern.permute.xlu0 0
    %2255 = vperm.xlu0 %2254, %v2199
    %v2256 = vpop.permute.xlu0 %2255
    %2257 = vset.pattern.permute.xlu0 0
    %2258 = vperm.xlu0 %2257, %v2201
    %v2259 = vpop.permute.xlu0 %2258
    %2260 = vset.pattern.permute.xlu0 0
    %2261 = vperm.xlu0 %2260, %v2203
    %v2262 = vpop.permute.xlu0 %2261
    %2263 = vset.pattern.permute.xlu0 0
    %2264 = vperm.xlu0 %2263, %v2205
    %v2265 = vpop.permute.xlu0 %2264
    %2266 = vset.pattern.permute.xlu0 0
    %2267 = vperm.xlu0 %2266, %v2207
    %v2268 = vpop.permute.xlu0 %2267
    %2269 = vset.pattern.permute.xlu0 0
    %2270 = vperm.xlu0 %2269, %v2209
    %v2271 = vpop.permute.xlu0 %2270
    %2272 = vset.pattern.permute.xlu0 0
    %2273 = vperm.xlu0 %2272, %v2211
    %v2274 = vpop.permute.xlu0 %2273
    %2275 = vset.pattern.permute.xlu0 0
    %2276 = vperm.xlu0 %2275, %v2213
    %v2277 = vpop.permute.xlu0 %2276
    %v2278 = vlaneseq
    %v2279 = vshrl.u32 %v2278, 7
    %v2280 = vsub.s32 %v938, %v2279
    %v2281 = vrot.slane %v2232, %v2280
    %v2282 = vlaneseq
    %v2283 = vshrl.u32 %v2282, 7
    %v2284 = vsub.s32 %v938, %v2283
    %v2285 = vrot.slane %v2235, %v2284
    %v2286 = vlaneseq
    %v2287 = vshrl.u32 %v2286, 7
    %v2288 = vsub.s32 %v938, %v2287
    %v2289 = vrot.slane %v2238, %v2288
    %v2290 = vlaneseq
    %v2291 = vshrl.u32 %v2290, 7
    %v2292 = vsub.s32 %v938, %v2291
    %v2293 = vrot.slane %v2241, %v2292
    %v2294 = vlaneseq
    %v2295 = vshrl.u32 %v2294, 7
    %v2296 = vsub.s32 %v938, %v2295
    %v2297 = vrot.slane %v2244, %v2296
    %v2298 = vlaneseq
    %v2299 = vshrl.u32 %v2298, 7
    %v2300 = vsub.s32 %v938, %v2299
    %v2301 = vrot.slane %v2247, %v2300
    %v2302 = vlaneseq
    %v2303 = vshrl.u32 %v2302, 7
    %v2304 = vsub.s32 %v938, %v2303
    %v2305 = vrot.slane %v2250, %v2304
    %v2306 = vlaneseq
    %v2307 = vshrl.u32 %v2306, 7
    %v2308 = vsub.s32 %v938, %v2307
    %v2309 = vrot.slane %v2253, %v2308
    %v2310 = vlaneseq
    %v2311 = vshrl.u32 %v2310, 7
    %v2312 = vsub.s32 %v938, %v2311
    %v2313 = vrot.slane %v2256, %v2312
    %v2314 = vlaneseq
    %v2315 = vshrl.u32 %v2314, 7
    %v2316 = vsub.s32 %v938, %v2315
    %v2317 = vrot.slane %v2259, %v2316
    %v2318 = vlaneseq
    %v2319 = vshrl.u32 %v2318, 7
    %v2320 = vsub.s32 %v938, %v2319
    %v2321 = vrot.slane %v2262, %v2320
    %v2322 = vlaneseq
    %v2323 = vshrl.u32 %v2322, 7
    %v2324 = vsub.s32 %v938, %v2323
    %v2325 = vrot.slane %v2265, %v2324
    %v2326 = vlaneseq
    %v2327 = vshrl.u32 %v2326, 7
    %v2328 = vsub.s32 %v938, %v2327
    %v2329 = vrot.slane %v2268, %v2328
    %v2330 = vlaneseq
    %v2331 = vshrl.u32 %v2330, 7
    %v2332 = vsub.s32 %v938, %v2331
    %v2333 = vrot.slane %v2271, %v2332
    %v2334 = vlaneseq
    %v2335 = vshrl.u32 %v2334, 7
    %v2336 = vsub.s32 %v938, %v2335
    %v2337 = vrot.slane %v2274, %v2336
    %v2338 = vlaneseq
    %v2339 = vshrl.u32 %v2338, 7
    %v2340 = vsub.s32 %v938, %v2339
    %v2341 = vrot.slane %v2277, %v2340
    %v2342 = vsel %vm971, %v2285, %v2281
    %v2343 = vsel %vm973, %v2289, %v2342
    %v2344 = vsel %vm975, %v2293, %v2343
    %v2345 = vsel %vm977, %v2297, %v2344
    %v2346 = vsel %vm979, %v2301, %v2345
    %v2347 = vsel %vm981, %v2305, %v2346
    %v2348 = vsel %vm983, %v2309, %v2347
    %v2349 = vsel %vm971, %v2317, %v2313
    %v2350 = vsel %vm973, %v2321, %v2349
    %v2351 = vsel %vm975, %v2325, %v2350
    %v2352 = vsel %vm977, %v2329, %v2351
    %v2353 = vsel %vm979, %v2333, %v2352
    %v2354 = vsel %vm981, %v2337, %v2353
    %v2355 = vsel %vm983, %v2341, %v2354
    %v2358 = vsel %vm986, %v2348, 0.0
    %2359 = vadd.xlane.f32.xlu0 %v2358
    %v2360 = vpop.xlane.xlu0 %2359
    %v2361 = vsel %vm986, %v2355, 0.0
    %2362 = vadd.xlane.f32.xlu0 %v2361
    %v2363 = vpop.xlane.xlu0 %2362
    %v2364 = vrcp.pop %v2360
    %v2365 = vrcp.pop %v2363
    %v2368 = vlaneseq
    %v2369 = vshrl.u32 %v2368, 7
    %v2370 = vsub.s32 0, %v2369
    %v2371 = vrot.slane %v2364, %v2370
    %v2372 = vlaneseq
    %v2373 = vshrl.u32 %v2372, 7
    %v2374 = vsub.s32 1, %v2373
    %v2375 = vrot.slane %v2364, %v2374
    %v2376 = vlaneseq
    %v2377 = vshrl.u32 %v2376, 7
    %v2378 = vsub.s32 2, %v2377
    %v2379 = vrot.slane %v2364, %v2378
    %v2380 = vlaneseq
    %v2381 = vshrl.u32 %v2380, 7
    %v2382 = vsub.s32 3, %v2381
    %v2383 = vrot.slane %v2364, %v2382
    %v2384 = vlaneseq
    %v2385 = vshrl.u32 %v2384, 7
    %v2386 = vsub.s32 4, %v2385
    %v2387 = vrot.slane %v2364, %v2386
    %v2388 = vlaneseq
    %v2389 = vshrl.u32 %v2388, 7
    %v2390 = vsub.s32 5, %v2389
    %v2391 = vrot.slane %v2364, %v2390
    %v2392 = vlaneseq
    %v2393 = vshrl.u32 %v2392, 7
    %v2394 = vsub.s32 6, %v2393
    %v2395 = vrot.slane %v2364, %v2394
    %v2396 = vlaneseq
    %v2397 = vshrl.u32 %v2396, 7
    %v2398 = vsub.s32 7, %v2397
    %v2399 = vrot.slane %v2364, %v2398
    %v2400 = vlaneseq
    %v2401 = vshrl.u32 %v2400, 7
    %v2402 = vsub.s32 0, %v2401
    %v2403 = vrot.slane %v2365, %v2402
    %v2404 = vlaneseq
    %v2405 = vshrl.u32 %v2404, 7
    %v2406 = vsub.s32 1, %v2405
    %v2407 = vrot.slane %v2365, %v2406
    %v2408 = vlaneseq
    %v2409 = vshrl.u32 %v2408, 7
    %v2410 = vsub.s32 2, %v2409
    %v2411 = vrot.slane %v2365, %v2410
    %v2412 = vlaneseq
    %v2413 = vshrl.u32 %v2412, 7
    %v2414 = vsub.s32 3, %v2413
    %v2415 = vrot.slane %v2365, %v2414
    %v2416 = vlaneseq
    %v2417 = vshrl.u32 %v2416, 7
    %v2418 = vsub.s32 4, %v2417
    %v2419 = vrot.slane %v2365, %v2418
    %v2420 = vlaneseq
    %v2421 = vshrl.u32 %v2420, 7
    %v2422 = vsub.s32 5, %v2421
    %v2423 = vrot.slane %v2365, %v2422
    %v2424 = vlaneseq
    %v2425 = vshrl.u32 %v2424, 7
    %v2426 = vsub.s32 6, %v2425
    %v2427 = vrot.slane %v2365, %v2426
    %v2428 = vlaneseq
    %v2429 = vshrl.u32 %v2428, 7
    %v2430 = vsub.s32 7, %v2429
    %v2431 = vrot.slane %v2365, %v2430
    %v2448 = vmul.f32 %v2183, %v2371
    %v2449 = vmul.f32 %v2185, %v2375
    %v2450 = vmul.f32 %v2187, %v2379
    %v2451 = vmul.f32 %v2189, %v2383
    %v2452 = vmul.f32 %v2191, %v2387
    %v2453 = vmul.f32 %v2193, %v2391
    %v2454 = vmul.f32 %v2195, %v2395
    %v2455 = vmul.f32 %v2197, %v2399
    %v2456 = vmul.f32 %v2199, %v2403
    %v2457 = vmul.f32 %v2201, %v2407
    %v2458 = vmul.f32 %v2203, %v2411
    %v2459 = vmul.f32 %v2205, %v2415
    %v2460 = vmul.f32 %v2207, %v2419
    %v2461 = vmul.f32 %v2209, %v2423
    %v2462 = vmul.f32 %v2211, %v2427
    %v2463 = vmul.f32 %v2213, %v2431
    %v2464 = vpack.c.bf16 %v2448, %v2448
    %v2465 = vpack.c.bf16 %v2449, %v2449
    %v2466 = vpack.c.bf16 %v2450, %v2450
    %v2467 = vpack.c.bf16 %v2451, %v2451
    %v2468 = vpack.c.bf16 %v2452, %v2452
    %v2469 = vpack.c.bf16 %v2453, %v2453
    %v2470 = vpack.c.bf16 %v2454, %v2454
    %v2471 = vpack.c.bf16 %v2455, %v2455
    %v2472 = vpack.c.bf16 %v2456, %v2456
    %v2473 = vpack.c.bf16 %v2457, %v2457
    %v2474 = vpack.c.bf16 %v2458, %v2458
    %v2475 = vpack.c.bf16 %v2459, %v2459
    %v2476 = vpack.c.bf16 %v2460, %v2460
    %v2477 = vpack.c.bf16 %v2461, %v2461
    %v2478 = vpack.c.bf16 %v2462, %v2462
    %v2479 = vpack.c.bf16 %v2463, %v2463
    %v2480 = vpack.c.bf16 %v1509, %v1509
    %v2481 = vpack.c.bf16 %v1512, %v1512
    %v2490 = vunpack.c.l.b16 %v2464
    %v2491 = vunpack.c.l.b16 %v2465
    %v2492 = vunpack.c.l.b16 %v2466
    %v2493 = vunpack.c.l.b16 %v2467
    %v2494 = vunpack.c.l.b16 %v2468
    %v2495 = vunpack.c.l.b16 %v2469
    %v2496 = vunpack.c.l.b16 %v2470
    %v2497 = vunpack.c.l.b16 %v2471
    %2498 = vset.pattern.permute.xlu0 0
    %2499 = vperm.xlu0 %2498, %v2490
    %v2500 = vpop.permute.xlu0 %2499
    %2501 = vset.pattern.permute.xlu0 0
    %2502 = vperm.xlu0 %2501, %v2491
    %v2503 = vpop.permute.xlu0 %2502
    %2504 = vset.pattern.permute.xlu0 0
    %2505 = vperm.xlu0 %2504, %v2492
    %v2506 = vpop.permute.xlu0 %2505
    %2507 = vset.pattern.permute.xlu0 0
    %2508 = vperm.xlu0 %2507, %v2493
    %v2509 = vpop.permute.xlu0 %2508
    %2510 = vset.pattern.permute.xlu0 0
    %2511 = vperm.xlu0 %2510, %v2494
    %v2512 = vpop.permute.xlu0 %2511
    %2513 = vset.pattern.permute.xlu0 0
    %2514 = vperm.xlu0 %2513, %v2495
    %v2515 = vpop.permute.xlu0 %2514
    %2516 = vset.pattern.permute.xlu0 0
    %2517 = vperm.xlu0 %2516, %v2496
    %v2518 = vpop.permute.xlu0 %2517
    %2519 = vset.pattern.permute.xlu0 0
    %2520 = vperm.xlu0 %2519, %v2497
    %v2521 = vpop.permute.xlu0 %2520
    %v2522 = vlaneseq
    %v2523 = vshrl.u32 %v2522, 7
    %v2524 = vsub.s32 %v938, %v2523
    %v2525 = vrot.slane %v2500, %v2524
    %v2526 = vlaneseq
    %v2527 = vshrl.u32 %v2526, 7
    %v2528 = vsub.s32 %v938, %v2527
    %v2529 = vrot.slane %v2503, %v2528
    %v2530 = vlaneseq
    %v2531 = vshrl.u32 %v2530, 7
    %v2532 = vsub.s32 %v938, %v2531
    %v2533 = vrot.slane %v2506, %v2532
    %v2534 = vlaneseq
    %v2535 = vshrl.u32 %v2534, 7
    %v2536 = vsub.s32 %v938, %v2535
    %v2537 = vrot.slane %v2509, %v2536
    %v2538 = vlaneseq
    %v2539 = vshrl.u32 %v2538, 7
    %v2540 = vsub.s32 %v938, %v2539
    %v2541 = vrot.slane %v2512, %v2540
    %v2542 = vlaneseq
    %v2543 = vshrl.u32 %v2542, 7
    %v2544 = vsub.s32 %v938, %v2543
    %v2545 = vrot.slane %v2515, %v2544
    %v2546 = vlaneseq
    %v2547 = vshrl.u32 %v2546, 7
    %v2548 = vsub.s32 %v938, %v2547
    %v2549 = vrot.slane %v2518, %v2548
    %v2550 = vlaneseq
    %v2551 = vshrl.u32 %v2550, 7
    %v2552 = vsub.s32 %v938, %v2551
    %v2553 = vrot.slane %v2521, %v2552
    %v2554 = vsel %vm971, %v2529, %v2525
    %v2555 = vsel %vm973, %v2533, %v2554
    %v2556 = vsel %vm975, %v2537, %v2555
    %v2557 = vsel %vm977, %v2541, %v2556
    %v2558 = vsel %vm979, %v2545, %v2557
    %v2559 = vsel %vm981, %v2549, %v2558
    %v2560 = vsel %vm983, %v2553, %v2559
    %v2561 = vpack.c.b16 %v2560, %v2560
    %v2563 = vsel %vm986, %v2561, 0
    %v2566 = vsel %vm990, %v2480, 0
    %2568 = vmatprep.subr.bf16.mxu0 0
    %2569 = vmatpush1.bf16.msra.mxu0 %v2566
    %2570 = vmatprep.subr.bf16.mxu0 0
    %2571 = vmatpush1.bf16.msra.mxu0 0
    %2572 = vmatprep.subr.bf16.mxu0 0
    %2573 = vmatpush1.bf16.msra.mxu0 0
    %2574 = vmatprep.subr.bf16.mxu0 0
    %2575 = vmatpush1.bf16.msra.mxu0 0
    %2576 = vmatprep.subr.bf16.mxu0 0
    %2577 = vmatpush1.bf16.msra.mxu0 0
    %2578 = vmatprep.subr.bf16.mxu0 0
    %2579 = vmatpush1.bf16.msra.mxu0 0
    %2580 = vmatprep.subr.bf16.mxu0 0
    %2581 = vmatpush1.bf16.msra.mxu0 0
    %2582 = vmatprep.subr.bf16.mxu0 0
    %2583 = vmatpush1.bf16.msra.mxu0 0
    %2584 = vmatprep.subr.bf16.mxu0 0
    %2585 = vmatpush1.bf16.msra.mxu0 0
    %2586 = vmatprep.subr.bf16.mxu0 0
    %2587 = vmatpush1.bf16.msra.mxu0 0
    %2588 = vmatprep.subr.bf16.mxu0 0
    %2589 = vmatpush1.bf16.msra.mxu0 0
    %2590 = vmatprep.subr.bf16.mxu0 0
    %2591 = vmatpush1.bf16.msra.mxu0 0
    %2592 = vmatprep.subr.bf16.mxu0 0
    %2593 = vmatpush1.bf16.msra.mxu0 0
    %2594 = vmatprep.subr.bf16.mxu0 0
    %2595 = vmatpush1.bf16.msra.mxu0 0
    %2596 = vmatprep.subr.bf16.mxu0 0
    %2597 = vmatpush1.bf16.msra.mxu0 0
    %2598 = vmatprep.subr.bf16.mxu0 0
    %2599 = vmatpush1.bf16.msra.mxu0 0
    %2600 = vmatprep.mubr.bf16.mxu0 0
    %2601 = vmatmul.mubr.bf16.gmra.mrb[0].mxu0 %v2563
    %v2602 = vpop.f32.mrb[0].mxu0
    %v2603 = vadd.f32 0.0, %v2602
    %v2604 = vpop.f32.mrb[0].mxu0
    %v2605 = vpop.f32.mrb[0].mxu0
    %v2606 = vpop.f32.mrb[0].mxu0
    %2607 = vdwg.mxu0
    %v2616 = vunpack.c.l.b16 %v2472
    %v2617 = vunpack.c.l.b16 %v2473
    %v2618 = vunpack.c.l.b16 %v2474
    %v2619 = vunpack.c.l.b16 %v2475
    %v2620 = vunpack.c.l.b16 %v2476
    %v2621 = vunpack.c.l.b16 %v2477
    %v2622 = vunpack.c.l.b16 %v2478
    %v2623 = vunpack.c.l.b16 %v2479
    %2624 = vset.pattern.permute.xlu0 0
    %2625 = vperm.xlu0 %2624, %v2616
    %v2626 = vpop.permute.xlu0 %2625
    %2627 = vset.pattern.permute.xlu0 0
    %2628 = vperm.xlu0 %2627, %v2617
    %v2629 = vpop.permute.xlu0 %2628
    %2630 = vset.pattern.permute.xlu0 0
    %2631 = vperm.xlu0 %2630, %v2618
    %v2632 = vpop.permute.xlu0 %2631
    %2633 = vset.pattern.permute.xlu0 0
    %2634 = vperm.xlu0 %2633, %v2619
    %v2635 = vpop.permute.xlu0 %2634
    %2636 = vset.pattern.permute.xlu0 0
    %2637 = vperm.xlu0 %2636, %v2620
    %v2638 = vpop.permute.xlu0 %2637
    %2639 = vset.pattern.permute.xlu0 0
    %2640 = vperm.xlu0 %2639, %v2621
    %v2641 = vpop.permute.xlu0 %2640
    %2642 = vset.pattern.permute.xlu0 0
    %2643 = vperm.xlu0 %2642, %v2622
    %v2644 = vpop.permute.xlu0 %2643
    %2645 = vset.pattern.permute.xlu0 0
    %2646 = vperm.xlu0 %2645, %v2623
    %v2647 = vpop.permute.xlu0 %2646
    %v2648 = vlaneseq
    %v2649 = vshrl.u32 %v2648, 7
    %v2650 = vsub.s32 %v938, %v2649
    %v2651 = vrot.slane %v2626, %v2650
    %v2652 = vlaneseq
    %v2653 = vshrl.u32 %v2652, 7
    %v2654 = vsub.s32 %v938, %v2653
    %v2655 = vrot.slane %v2629, %v2654
    %v2656 = vlaneseq
    %v2657 = vshrl.u32 %v2656, 7
    %v2658 = vsub.s32 %v938, %v2657
    %v2659 = vrot.slane %v2632, %v2658
    %v2660 = vlaneseq
    %v2661 = vshrl.u32 %v2660, 7
    %v2662 = vsub.s32 %v938, %v2661
    %v2663 = vrot.slane %v2635, %v2662
    %v2664 = vlaneseq
    %v2665 = vshrl.u32 %v2664, 7
    %v2666 = vsub.s32 %v938, %v2665
    %v2667 = vrot.slane %v2638, %v2666
    %v2668 = vlaneseq
    %v2669 = vshrl.u32 %v2668, 7
    %v2670 = vsub.s32 %v938, %v2669
    %v2671 = vrot.slane %v2641, %v2670
    %v2672 = vlaneseq
    %v2673 = vshrl.u32 %v2672, 7
    %v2674 = vsub.s32 %v938, %v2673
    %v2675 = vrot.slane %v2644, %v2674
    %v2676 = vlaneseq
    %v2677 = vshrl.u32 %v2676, 7
    %v2678 = vsub.s32 %v938, %v2677
    %v2679 = vrot.slane %v2647, %v2678
    %v2680 = vsel %vm971, %v2655, %v2651
    %v2681 = vsel %vm973, %v2659, %v2680
    %v2682 = vsel %vm975, %v2663, %v2681
    %v2683 = vsel %vm977, %v2667, %v2682
    %v2684 = vsel %vm979, %v2671, %v2683
    %v2685 = vsel %vm981, %v2675, %v2684
    %v2686 = vsel %vm983, %v2679, %v2685
    %v2687 = vpack.c.b16 %v2686, %v2686
    %v2689 = vsel %vm986, %v2687, 0
    %v2692 = vsel %vm990, %v2481, 0
    %2694 = vmatprep.subr.bf16.mxu0 0
    %2695 = vmatpush1.bf16.msra.mxu0 %v2692
    %2696 = vmatprep.subr.bf16.mxu0 0
    %2697 = vmatpush1.bf16.msra.mxu0 0
    %2698 = vmatprep.subr.bf16.mxu0 0
    %2699 = vmatpush1.bf16.msra.mxu0 0
    %2700 = vmatprep.subr.bf16.mxu0 0
    %2701 = vmatpush1.bf16.msra.mxu0 0
    %2702 = vmatprep.subr.bf16.mxu0 0
    %2703 = vmatpush1.bf16.msra.mxu0 0
    %2704 = vmatprep.subr.bf16.mxu0 0
    %2705 = vmatpush1.bf16.msra.mxu0 0
    %2706 = vmatprep.subr.bf16.mxu0 0
    %2707 = vmatpush1.bf16.msra.mxu0 0
    %2708 = vmatprep.subr.bf16.mxu0 0
    %2709 = vmatpush1.bf16.msra.mxu0 0
    %2710 = vmatprep.subr.bf16.mxu0 0
    %2711 = vmatpush1.bf16.msra.mxu0 0
    %2712 = vmatprep.subr.bf16.mxu0 0
    %2713 = vmatpush1.bf16.msra.mxu0 0
    %2714 = vmatprep.subr.bf16.mxu0 0
    %2715 = vmatpush1.bf16.msra.mxu0 0
    %2716 = vmatprep.subr.bf16.mxu0 0
    %2717 = vmatpush1.bf16.msra.mxu0 0
    %2718 = vmatprep.subr.bf16.mxu0 0
    %2719 = vmatpush1.bf16.msra.mxu0 0
    %2720 = vmatprep.subr.bf16.mxu0 0
    %2721 = vmatpush1.bf16.msra.mxu0 0
    %2722 = vmatprep.subr.bf16.mxu0 0
    %2723 = vmatpush1.bf16.msra.mxu0 0
    %2724 = vmatprep.subr.bf16.mxu0 0
    %2725 = vmatpush1.bf16.msra.mxu0 0
    %2726 = vmatprep.mubr.bf16.mxu0 0
    %2727 = vmatmul.mubr.bf16.gmra.mrb[0].mxu0 %v2689
    %v2728 = vpop.f32.mrb[0].mxu0
    %v2729 = vadd.f32 0.0, %v2728
    %v2730 = vpop.f32.mrb[0].mxu0
    %v2731 = vpop.f32.mrb[0].mxu0
    %v2732 = vpop.f32.mrb[0].mxu0
    %2733 = vdwg.mxu0
    %v2734 = vld [vmem:[%s2 + $0x3] ss:$0 sm:$0xff]
    %v2735 = vadd.f32 %v2603, %v2734
    %v2736 = vadd.f32 %v2729, %v2734
    %v2737 = vmul.f32 %v2735, 0.5
    %v2738 = vmul.f32 %v2736, 0.5
    %v2739 = vmul.f32 %v2735, 0.70710677
    %v2740 = vmul.f32 %v2736, 0.70710677
    %v2741 = verf.f32.pop %v2739
    %v2742 = verf.f32.pop %v2740
    %v2743 = vadd.f32 %v2741, 1.0
    %v2744 = vadd.f32 %v2742, 1.0
    %v2745 = vmul.f32 %v2737, %v2743
    %v2746 = vmul.f32 %v2738, %v2744
    %v2747 = vld [vmem:[#allocation2 + $0x120] sm:$0xff]
    %v2748 = vld [vmem:[#allocation2 + $0x128] sm:$0xff]
    %v2749 = vld [vmem:[#allocation2 + $0x130] sm:$0xff]
    %v2750 = vld [vmem:[#allocation2 + $0x138] sm:$0xff]
    %v2751 = vpack.c.bf16 %v2746, %v2745
    %s2752 = scalar_lea.vmem %s2, 4
    %v2753 = vld [vmem:[%s2752] ss:$8 sm:$0x3]
    %v2755 = vlaneseq
    %v2756 = vshrl.u32 %v2755, 7
    %v2757 = vsub.s32 0, %v2756
    %v2758 = vrot.slane %v2753, %v2757
    %v2759 = vlaneseq
    %v2760 = vshrl.u32 %v2759, 7
    %v2761 = vsub.s32 1, %v2760
    %v2762 = vrot.slane %v2753, %v2761
    %v2769 = vunpack.c.l.b16 %v2747
    %v2770 = vunpack.c.h.b16 %v2747
    %v2771 = vunpack.c.l.b16 %v2748
    %v2772 = vunpack.c.h.b16 %v2748
    %v2773 = vunpack.c.l.b16 %v2749
    %v2774 = vunpack.c.h.b16 %v2749
    %v2775 = vunpack.c.l.b16 %v2750
    %v2776 = vunpack.c.h.b16 %v2750
    %v2777 = vpack.c.b16 %v2771, %v2769
    %v2778 = vpack.c.b16 %v2772, %v2770
    %v2779 = vpack.c.b16 %v2775, %v2773
    %v2780 = vpack.c.b16 %v2776, %v2774
    %v2786 = vsel %vm1394, %v2751, 0
    %2788 = vmatprep.subr.bf16.mxu0 %v2778
    %2789 = vmatpush1.bf16.msra.mxu0 %v2777
    %2790 = vmatprep.subr.bf16.mxu0 %v2780
    %2791 = vmatpush1.bf16.msra.mxu0 %v2779
    %2792 = vmatprep.subr.bf16.mxu0 0
    %2793 = vmatpush1.bf16.msra.mxu0 0
    %2794 = vmatprep.subr.bf16.mxu0 0
    %2795 = vmatpush1.bf16.msra.mxu0 0
    %2796 = vmatprep.subr.bf16.mxu0 0
    %2797 = vmatpush1.bf16.msra.mxu0 0
    %2798 = vmatprep.subr.bf16.mxu0 0
    %2799 = vmatpush1.bf16.msra.mxu0 0
    %2800 = vmatprep.subr.bf16.mxu0 0
    %2801 = vmatpush1.bf16.msra.mxu0 0
    %2802 = vmatprep.subr.bf16.mxu0 0
    %2803 = vmatpush1.bf16.msra.mxu0 0
    %2804 = vmatprep.subr.bf16.mxu0 0
    %2805 = vmatpush1.bf16.msra.mxu0 0
    %2806 = vmatprep.subr.bf16.mxu0 0
    %2807 = vmatpush1.bf16.msra.mxu0 0
    %2808 = vmatprep.subr.bf16.mxu0 0
    %2809 = vmatpush1.bf16.msra.mxu0 0
    %2810 = vmatprep.subr.bf16.mxu0 0
    %2811 = vmatpush1.bf16.msra.mxu0 0
    %2812 = vmatprep.subr.bf16.mxu0 0
    %2813 = vmatpush1.bf16.msra.mxu0 0
    %2814 = vmatprep.subr.bf16.mxu0 0
    %2815 = vmatpush1.bf16.msra.mxu0 0
    %2816 = vmatprep.subr.bf16.mxu0 0
    %2817 = vmatpush1.bf16.msra.mxu0 0
    %2818 = vmatprep.subr.bf16.mxu0 0
    %2819 = vmatpush1.bf16.msra.mxu0 0
    %2820 = vmatprep.mubr.bf16.mxu0 0
    %2821 = vmatmul.mubr.bf16.gmra.mrb[0].mxu0 %v2786
    %v2822 = vpop.f32.mrb[0].mxu0
    %v2823 = vadd.f32 %v2758, %v2822
    %v2824 = vpop.f32.mrb[0].mxu0
    %v2825 = vadd.f32 %v2762, %v2824
    %v2826 = vpop.f32.mrb[0].mxu0
    %v2827 = vadd.f32 %v2758, %v2826
    %v2828 = vpop.f32.mrb[0].mxu0
    %v2829 = vadd.f32 %v2762, %v2828
    %2830 = vdwg.mxu0
    %v2831 = vmul.f32 %v2823, 0.5
    %v2832 = vmul.f32 %v2825, 0.5
    %v2833 = vmul.f32 %v2827, 0.5
    %v2834 = vmul.f32 %v2829, 0.5
    %v2835 = vmul.f32 %v2823, 0.70710677
    %v2836 = vmul.f32 %v2825, 0.70710677
    %v2837 = vmul.f32 %v2827, 0.70710677
    %v2838 = vmul.f32 %v2829, 0.70710677
    %v2839 = verf.f32.pop %v2835
    %v2840 = verf.f32.pop %v2836
    %v2841 = verf.f32.pop %v2837
    %v2842 = verf.f32.pop %v2838
    %v2843 = vadd.f32 %v2839, 1.0
    %v2844 = vadd.f32 %v2840, 1.0
    %v2845 = vadd.f32 %v2841, 1.0
    %v2846 = vadd.f32 %v2842, 1.0
    %v2847 = vmul.f32 %v2831, %v2843
    %v2848 = vmul.f32 %v2832, %v2844
    %v2849 = vmul.f32 %v2833, %v2845
    %v2850 = vmul.f32 %v2834, %v2846
    %v2851 = vld [vmem:[#allocation2 + $0x360] sm:$0xf]
    %v2852 = vld [vmem:[#allocation2 + $0x368] sm:$0xf]
    %v2853 = vld [vmem:[#allocation2 + $0x370] sm:$0xf]
    %v2854 = vld [vmem:[#allocation2 + $0x378] sm:$0xf]
    %v2855 = vld [vmem:[#allocation2 + $0x380] sm:$0xf]
    %v2856 = vld [vmem:[#allocation2 + $0x388] sm:$0xf]
    %v2857 = vld [vmem:[#allocation2 + $0x390] sm:$0xf]
    %v2858 = vld [vmem:[#allocation2 + $0x398] sm:$0xf]
    %v2859 = vld [vmem:[#allocation2 + $0x3a0] sm:$0xf]
    %v2860 = vld [vmem:[#allocation2 + $0x3a8] sm:$0xf]
    %v2861 = vld [vmem:[#allocation2 + $0x3b0] sm:$0xf]
    %v2862 = vld [vmem:[#allocation2 + $0x3b8] sm:$0xf]
    %v2863 = vld [vmem:[#allocation2 + $0x3c0] sm:$0xf]
    %v2864 = vld [vmem:[#allocation2 + $0x3c8] sm:$0xf]
    %v2865 = vld [vmem:[#allocation2 + $0x3d0] sm:$0xf]
    %v2866 = vld [vmem:[#allocation2 + $0x3d8] sm:$0xf]
    %v2867 = vpack.c.bf16 %v2850, %v2848
    %v2868 = vld [vmem:[%s2 + $0x12] ss:$0 sm:$0xff]
    %v2885 = vunpack.c.l.b16 %v2851
    %v2886 = vunpack.c.l.b16 %v2852
    %v2887 = vunpack.c.l.b16 %v2853
    %v2888 = vunpack.c.l.b16 %v2854
    %v2889 = vunpack.c.l.b16 %v2855
    %v2890 = vunpack.c.l.b16 %v2856
    %v2891 = vunpack.c.l.b16 %v2857
    %v2892 = vunpack.c.l.b16 %v2858
    %v2893 = vunpack.c.l.b16 %v2859
    %v2894 = vunpack.c.l.b16 %v2860
    %v2895 = vunpack.c.l.b16 %v2861
    %v2896 = vunpack.c.l.b16 %v2862
    %v2897 = vunpack.c.l.b16 %v2863
    %v2898 = vunpack.c.l.b16 %v2864
    %v2899 = vunpack.c.l.b16 %v2865
    %v2900 = vunpack.c.l.b16 %v2866
    %v2901 = vpack.c.b16 %v2886, %v2885
    %v2902 = vpack.c.b16 %v2888, %v2887
    %v2903 = vpack.c.b16 %v2890, %v2889
    %v2904 = vpack.c.b16 %v2892, %v2891
    %v2905 = vpack.c.b16 %v2894, %v2893
    %v2906 = vpack.c.b16 %v2896, %v2895
    %v2907 = vpack.c.b16 %v2898, %v2897
    %v2908 = vpack.c.b16 %v2900, %v2899
    %2917 = vmatprep.subr.bf16.mxu0 0
    %2918 = vmatpush1.bf16.msra.mxu0 %v2901
    %2919 = vmatprep.subr.bf16.mxu0 0
    %2920 = vmatpush1.bf16.msra.mxu0 %v2902
    %2921 = vmatprep.subr.bf16.mxu0 0
    %2922 = vmatpush1.bf16.msra.mxu0 %v2903
    %2923 = vmatprep.subr.bf16.mxu0 0
    %2924 = vmatpush1.bf16.msra.mxu0 %v2904
    %2925 = vmatprep.subr.bf16.mxu0 0
    %2926 = vmatpush1.bf16.msra.mxu0 %v2905
    %2927 = vmatprep.subr.bf16.mxu0 0
    %2928 = vmatpush1.bf16.msra.mxu0 %v2906
    %2929 = vmatprep.subr.bf16.mxu0 0
    %2930 = vmatpush1.bf16.msra.mxu0 %v2907
    %2931 = vmatprep.subr.bf16.mxu0 0
    %2932 = vmatpush1.bf16.msra.mxu0 %v2908
    %2933 = vmatprep.subr.bf16.mxu0 0
    %2934 = vmatpush1.bf16.msra.mxu0 0
    %2935 = vmatprep.subr.bf16.mxu0 0
    %2936 = vmatpush1.bf16.msra.mxu0 0
    %2937 = vmatprep.subr.bf16.mxu0 0
    %2938 = vmatpush1.bf16.msra.mxu0 0
    %2939 = vmatprep.subr.bf16.mxu0 0
    %2940 = vmatpush1.bf16.msra.mxu0 0
    %2941 = vmatprep.subr.bf16.mxu0 0
    %2942 = vmatpush1.bf16.msra.mxu0 0
    %2943 = vmatprep.subr.bf16.mxu0 0
    %2944 = vmatpush1.bf16.msra.mxu0 0
    %2945 = vmatprep.subr.bf16.mxu0 0
    %2946 = vmatpush1.bf16.msra.mxu0 0
    %2947 = vmatprep.subr.bf16.mxu0 0
    %2948 = vmatpush1.bf16.msra.mxu0 0
    %2949 = vmatprep.mubr.bf16.mxu0 0
    %2950 = vmatmul.mubr.bf16.gmra.mrb[0].mxu0 %v2867
    %v2951 = vpop.f32.mrb[0].mxu0
    %v2952 = vadd.f32 %v2868, %v2951
    %v2953 = vpop.f32.mrb[0].mxu0
    %v2954 = vpop.f32.mrb[0].mxu0
    %v2955 = vadd.f32 %v2868, %v2954
    %v2956 = vpop.f32.mrb[0].mxu0
    %2957 = vdwg.mxu0
    %vm2958 = vcmask 7168
    %v2959 = vsel %vm2958, %v2952, -inf
    %v2960 = vrot.slane %v2959, 4
    %v2961 = vmax.f32 %v2959, %v2960
    %v2962 = vrot.slane %v2961, 2
    %v2963 = vmax.f32 %v2961, %v2962
    %v2964 = vrot.slane %v2963, 1
    %v2965 = vmax.f32 %v2963, %v2964
    %v2966 = vsel %vm2958, %v2955, -inf
    %v2967 = vrot.slane %v2966, 4
    %v2968 = vmax.f32 %v2966, %v2967
    %v2969 = vrot.slane %v2968, 2
    %v2970 = vmax.f32 %v2968, %v2969
    %v2971 = vrot.slane %v2970, 1
    %v2972 = vmax.f32 %v2970, %v2971
    %v2973 = vsub.f32 %v2952, %v2965
    %v2974 = vsub.f32 %v2955, %v2972
    %v2975 = vmul.f32 %v2973, 1.442695
    %v2976 = vpow.pop %v2975
    %v2977 = vmul.f32 %v2974, 1.442695
    %v2978 = vpow.pop %v2977
    %v2979 = vsel %vm2958, %v2976, 0.0
    %v2980 = vrot.slane %v2979, 4
    %v2981 = vadd.f32 %v2979, %v2980
    %v2982 = vrot.slane %v2981, 2
    %v2983 = vadd.f32 %v2981, %v2982
    %v2984 = vrot.slane %v2983, 1
    %v2985 = vadd.f32 %v2983, %v2984
    %v2986 = vsel %vm2958, %v2978, 0.0
    %v2987 = vrot.slane %v2986, 4
    %v2988 = vadd.f32 %v2986, %v2987
    %v2989 = vrot.slane %v2988, 2
    %v2990 = vadd.f32 %v2988, %v2989
    %v2991 = vrot.slane %v2990, 1
    %v2992 = vadd.f32 %v2990, %v2991
    %v2993 = vrcp.pop %v2985
    %v2994 = vmul.f32 %v2976, %v2993
    %v2995 = vrcp.pop %v2992
    %v2996 = vmul.f32 %v2978, %v2995
    %2998 = vset.pattern.permute.xlu0 0
    %2999 = vperm.xlu0 %2998, %v2994
    %v3000 = vpop.permute.xlu0 %2999
    %3003 = vset.pattern.permute.xlu0 0
    %3004 = vperm.xlu0 %3003, %v2996
    %v3005 = vpop.permute.xlu0 %3004
    %v3007 = vmul.f32 %v3000, %v2745
    %v3008 = vmul.f32 %v3005, %v2746
    %v3009 = vsel %vm1394, %v3007, 0.0
    %v3010 = vrot.slane %v3009, 4
    %v3011 = vadd.f32 %v3009, %v3010
    %v3012 = vrot.slane %v3011, 2
    %v3013 = vadd.f32 %v3011, %v3012
    %v3014 = vrot.slane %v3013, 1
    %v3015 = vadd.f32 %v3013, %v3014
    %v3016 = vsel %vm1394, %v3008, 0.0
    %v3017 = vrot.slane %v3016, 4
    %v3018 = vadd.f32 %v3016, %v3017
    %v3019 = vrot.slane %v3018, 2
    %v3020 = vadd.f32 %v3018, %v3019
    %v3021 = vrot.slane %v3020, 1
    %v3022 = vadd.f32 %v3020, %v3021
    %v3023 = vld [vmem:[#allocation2 + $0x240] sm:$0xf]
    %v3024 = vld [vmem:[#allocation2 + $0x248] sm:$0xf]
    %v3025 = vld [vmem:[#allocation2 + $0x250] sm:$0xf]
    %v3026 = vld [vmem:[#allocation2 + $0x258] sm:$0xf]
    %v3027 = vpack.c.bf16 %v3015, %v3015
    %v3028 = vpack.c.bf16 %v3022, %v3022
    %v3029 = vld [vmem:[%s2 + $0x7] ss:$0 sm:$0xff]
    %v3032 = vunpack.c.l.b16 %v3027
    %v3033 = vunpack.c.l.b16 %v3028
    %v3034 = vsel %vm971, %v3033, %v3032
    %v3035 = vpack.c.b16 %v3034, %v3034
    %v3040 = vunpack.c.l.b16 %v3023
    %v3041 = vunpack.c.l.b16 %v3024
    %v3042 = vunpack.c.l.b16 %v3025
    %v3043 = vunpack.c.l.b16 %v3026
    %v3044 = vpack.c.b16 %v3041, %v3040
    %v3045 = vpack.c.b16 %v3043, %v3042
    %v3049 = vsel %vm1394, %v3035, 0
    %3051 = vmatprep.subr.bf16.mxu0 0
    %3052 = vmatpush1.bf16.msra.mxu0 %v3044
    %3053 = vmatprep.subr.bf16.mxu0 0
    %3054 = vmatpush1.bf16.msra.mxu0 %v3045
    %3055 = vmatprep.subr.bf16.mxu0 0
    %3056 = vmatpush1.bf16.msra.mxu0 0
    %3057 = vmatprep.subr.bf16.mxu0 0
    %3058 = vmatpush1.bf16.msra.mxu0 0
    %3059 = vmatprep.subr.bf16.mxu0 0
    %3060 = vmatpush1.bf16.msra.mxu0 0
    %3061 = vmatprep.subr.bf16.mxu0 0
    %3062 = vmatpush1.bf16.msra.mxu0 0
    %3063 = vmatprep.subr.bf16.mxu0 0
    %3064 = vmatpush1.bf16.msra.mxu0 0
    %3065 = vmatprep.subr.bf16.mxu0 0
    %3066 = vmatpush1.bf16.msra.mxu0 0
    %3067 = vmatprep.subr.bf16.mxu0 0
    %3068 = vmatpush1.bf16.msra.mxu0 0
    %3069 = vmatprep.subr.bf16.mxu0 0
    %3070 = vmatpush1.bf16.msra.mxu0 0
    %3071 = vmatprep.subr.bf16.mxu0 0
    %3072 = vmatpush1.bf16.msra.mxu0 0
    %3073 = vmatprep.subr.bf16.mxu0 0
    %3074 = vmatpush1.bf16.msra.mxu0 0
    %3075 = vmatprep.subr.bf16.mxu0 0
    %3076 = vmatpush1.bf16.msra.mxu0 0
    %3077 = vmatprep.subr.bf16.mxu0 0
    %3078 = vmatpush1.bf16.msra.mxu0 0
    %3079 = vmatprep.subr.bf16.mxu0 0
    %3080 = vmatpush1.bf16.msra.mxu0 0
    %3081 = vmatprep.subr.bf16.mxu0 0
    %3082 = vmatpush1.bf16.msra.mxu0 0
    %3083 = vmatprep.mubr.bf16.mxu0 0
    %3084 = vmatmul.mubr.bf16.gmra.mrb[0].mxu0 %v3049
    %v3085 = vpop.f32.mrb[0].mxu0
    %v3086 = vadd.f32 %v3029, %v3085
    %v3087 = vpop.f32.mrb[0].mxu0
    %v3088 = vpop.f32.mrb[0].mxu0
    %v3089 = vpop.f32.mrb[0].mxu0
    %3090 = vdwg.mxu0
    %v3091 = vmul.f32 %v3086, 0.5
    %v3092 = vmul.f32 %v3086, 0.70710677
    %v3093 = verf.f32.pop %v3092
    %v3094 = vadd.f32 %v3093, 1.0
    %v3095 = vmul.f32 %v3091, %v3094
    %v3096 = vld [vmem:[#allocation2 + $0x260] sm:$0xf]
    %v3097 = vld [vmem:[#allocation2 + $0x268] sm:$0xf]
    %v3098 = vld [vmem:[#allocation2 + $0x270] sm:$0xf]
    %v3099 = vld [vmem:[#allocation2 + $0x278] sm:$0xf]
    %v3100 = vld [vmem:[#allocation2 + $0x280] sm:$0xf]
    %v3101 = vld [vmem:[#allocation2 + $0x288] sm:$0xf]
    %v3102 = vld [vmem:[#allocation2 + $0x290] sm:$0xf]
    %v3103 = vld [vmem:[#allocation2 + $0x298] sm:$0xf]
    %v3104 = vld [vmem:[#allocation2 + $0x2a0] sm:$0xf]
    %v3105 = vld [vmem:[#allocation2 + $0x2a8] sm:$0xf]
    %v3106 = vld [vmem:[#allocation2 + $0x2b0] sm:$0xf]
    %v3107 = vld [vmem:[#allocation2 + $0x2b8] sm:$0xf]
    %v3108 = vld [vmem:[#allocation2 + $0x2c0] sm:$0xf]
    %v3109 = vld [vmem:[#allocation2 + $0x2c8] sm:$0xf]
    %v3110 = vld [vmem:[#allocation2 + $0x2d0] sm:$0xf]
    %v3111 = vld [vmem:[#allocation2 + $0x2d8] sm:$0xf]
    %v3112 = vpack.c.bf16 %v3095, %v3095
    %v3113 = vld [vmem:[%s2 + $0x10] ss:$0 sm:$0xff]
    %v3130 = vunpack.c.l.b16 %v3096
    %v3131 = vunpack.c.l.b16 %v3097
    %v3132 = vunpack.c.l.b16 %v3098
    %v3133 = vunpack.c.l.b16 %v3099
    %v3134 = vunpack.c.l.b16 %v3100
    %v3135 = vunpack.c.l.b16 %v3101
    %v3136 = vunpack.c.l.b16 %v3102
    %v3137 = vunpack.c.l.b16 %v3103
    %v3138 = vunpack.c.l.b16 %v3104
    %v3139 = vunpack.c.l.b16 %v3105
    %v3140 = vunpack.c.l.b16 %v3106
    %v3141 = vunpack.c.l.b16 %v3107
    %v3142 = vunpack.c.l.b16 %v3108
    %v3143 = vunpack.c.l.b16 %v3109
    %v3144 = vunpack.c.l.b16 %v3110
    %v3145 = vunpack.c.l.b16 %v3111
    %v3146 = vpack.c.b16 %v3131, %v3130
    %v3147 = vpack.c.b16 %v3133, %v3132
    %v3148 = vpack.c.b16 %v3135, %v3134
    %v3149 = vpack.c.b16 %v3137, %v3136
    %v3150 = vpack.c.b16 %v3139, %v3138
    %v3151 = vpack.c.b16 %v3141, %v3140
    %v3152 = vpack.c.b16 %v3143, %v3142
    %v3153 = vpack.c.b16 %v3145, %v3144
    %3162 = vmatprep.subr.bf16.mxu0 0
    %3163 = vmatpush1.bf16.msra.mxu0 %v3146
    %3164 = vmatprep.subr.bf16.mxu0 0
    %3165 = vmatpush1.bf16.msra.mxu0 %v3147
    %3166 = vmatprep.subr.bf16.mxu0 0
    %3167 = vmatpush1.bf16.msra.mxu0 %v3148
    %3168 = vmatprep.subr.bf16.mxu0 0
    %3169 = vmatpush1.bf16.msra.mxu0 %v3149
    %3170 = vmatprep.subr.bf16.mxu0 0
    %3171 = vmatpush1.bf16.msra.mxu0 %v3150
    %3172 = vmatprep.subr.bf16.mxu0 0
    %3173 = vmatpush1.bf16.msra.mxu0 %v3151
    %3174 = vmatprep.subr.bf16.mxu0 0
    %3175 = vmatpush1.bf16.msra.mxu0 %v3152
    %3176 = vmatprep.subr.bf16.mxu0 0
    %3177 = vmatpush1.bf16.msra.mxu0 %v3153
    %3178 = vmatprep.subr.bf16.mxu0 0
    %3179 = vmatpush1.bf16.msra.mxu0 0
    %3180 = vmatprep.subr.bf16.mxu0 0
    %3181 = vmatpush1.bf16.msra.mxu0 0
    %3182 = vmatprep.subr.bf16.mxu0 0
    %3183 = vmatpush1.bf16.msra.mxu0 0
    %3184 = vmatprep.subr.bf16.mxu0 0
    %3185 = vmatpush1.bf16.msra.mxu0 0
    %3186 = vmatprep.subr.bf16.mxu0 0
    %3187 = vmatpush1.bf16.msra.mxu0 0
    %3188 = vmatprep.subr.bf16.mxu0 0
    %3189 = vmatpush1.bf16.msra.mxu0 0
    %3190 = vmatprep.subr.bf16.mxu0 0
    %3191 = vmatpush1.bf16.msra.mxu0 0
    %3192 = vmatprep.subr.bf16.mxu0 0
    %3193 = vmatpush1.bf16.msra.mxu0 0
    %3194 = vmatprep.mubr.bf16.mxu0 0
    %3195 = vmatmul.mubr.bf16.gmra.mrb[0].mxu0 %v3112
    %v3196 = vpop.f32.mrb[0].mxu0
    %v3197 = vadd.f32 %v3113, %v3196
    %v3198 = vpop.f32.mrb[0].mxu0
    %v3199 = vpop.f32.mrb[0].mxu0
    %v3200 = vpop.f32.mrb[0].mxu0
    %3201 = vdwg.mxu0
    %v3202 = vmul.f32 %v3197, 0.5
    %v3203 = vmul.f32 %v3197, 0.70710677
    %v3204 = verf.f32.pop %v3203
    %v3205 = vadd.f32 %v3204, 1.0
    %v3206 = vmul.f32 %v3202, %v3205
    %v3207 = vld [vmem:[#allocation2 + $0x2e0] sm:$0xf]
    %v3208 = vld [vmem:[#allocation2 + $0x2e8] sm:$0xf]
    %v3209 = vld [vmem:[#allocation2 + $0x2f0] sm:$0xf]
    %v3210 = vld [vmem:[#allocation2 + $0x2f8] sm:$0xf]
    %v3211 = vld [vmem:[#allocation2 + $0x300] sm:$0xf]
    %v3212 = vld [vmem:[#allocation2 + $0x308] sm:$0xf]
    %v3213 = vld [vmem:[#allocation2 + $0x310] sm:$0xf]
    %v3214 = vld [vmem:[#allocation2 + $0x318] sm:$0xf]
    %v3215 = vld [vmem:[#allocation2 + $0x320] sm:$0xf]
    %v3216 = vld [vmem:[#allocation2 + $0x328] sm:$0xf]
    %v3217 = vld [vmem:[#allocation2 + $0x330] sm:$0xf]
    %v3218 = vld [vmem:[#allocation2 + $0x338] sm:$0xf]
    %v3219 = vld [vmem:[#allocation2 + $0x340] sm:$0xf]
    %v3220 = vld [vmem:[#allocation2 + $0x348] sm:$0xf]
    %v3221 = vld [vmem:[#allocation2 + $0x350] sm:$0xf]
    %v3222 = vld [vmem:[#allocation2 + $0x358] sm:$0xf]
    %v3223 = vpack.c.bf16 %v3206, %v3206
    %v3224 = vld [vmem:[%s2 + $0x11] ss:$0 sm:$0xff]
    %v3241 = vunpack.c.l.b16 %v3207
    %v3242 = vunpack.c.l.b16 %v3208
    %v3243 = vunpack.c.l.b16 %v3209
    %v3244 = vunpack.c.l.b16 %v3210
    %v3245 = vunpack.c.l.b16 %v3211
    %v3246 = vunpack.c.l.b16 %v3212
    %v3247 = vunpack.c.l.b16 %v3213
    %v3248 = vunpack.c.l.b16 %v3214
    %v3249 = vunpack.c.l.b16 %v3215
    %v3250 = vunpack.c.l.b16 %v3216
    %v3251 = vunpack.c.l.b16 %v3217
    %v3252 = vunpack.c.l.b16 %v3218
    %v3253 = vunpack.c.l.b16 %v3219
    %v3254 = vunpack.c.l.b16 %v3220
    %v3255 = vunpack.c.l.b16 %v3221
    %v3256 = vunpack.c.l.b16 %v3222
    %v3257 = vpack.c.b16 %v3242, %v3241
    %v3258 = vpack.c.b16 %v3244, %v3243
    %v3259 = vpack.c.b16 %v3246, %v3245
    %v3260 = vpack.c.b16 %v3248, %v3247
    %v3261 = vpack.c.b16 %v3250, %v3249
    %v3262 = vpack.c.b16 %v3252, %v3251
    %v3263 = vpack.c.b16 %v3254, %v3253
    %v3264 = vpack.c.b16 %v3256, %v3255
    %3273 = vmatprep.subr.bf16.mxu0 0
    %3274 = vmatpush1.bf16.msra.mxu0 %v3257
    %3275 = vmatprep.subr.bf16.mxu0 0
    %3276 = vmatpush1.bf16.msra.mxu0 %v3258
    %3277 = vmatprep.subr.bf16.mxu0 0
    %3278 = vmatpush1.bf16.msra.mxu0 %v3259
    %3279 = vmatprep.subr.bf16.mxu0 0
    %3280 = vmatpush1.bf16.msra.mxu0 %v3260
    %3281 = vmatprep.subr.bf16.mxu0 0
    %3282 = vmatpush1.bf16.msra.mxu0 %v3261
    %3283 = vmatprep.subr.bf16.mxu0 0
    %3284 = vmatpush1.bf16.msra.mxu0 %v3262
    %3285 = vmatprep.subr.bf16.mxu0 0
    %3286 = vmatpush1.bf16.msra.mxu0 %v3263
    %3287 = vmatprep.subr.bf16.mxu0 0
    %3288 = vmatpush1.bf16.msra.mxu0 %v3264
    %3289 = vmatprep.subr.bf16.mxu0 0
    %3290 = vmatpush1.bf16.msra.mxu0 0
    %3291 = vmatprep.subr.bf16.mxu0 0
    %3292 = vmatpush1.bf16.msra.mxu0 0
    %3293 = vmatprep.subr.bf16.mxu0 0
    %3294 = vmatpush1.bf16.msra.mxu0 0
    %3295 = vmatprep.subr.bf16.mxu0 0
    %3296 = vmatpush1.bf16.msra.mxu0 0
    %3297 = vmatprep.subr.bf16.mxu0 0
    %3298 = vmatpush1.bf16.msra.mxu0 0
    %3299 = vmatprep.subr.bf16.mxu0 0
    %3300 = vmatpush1.bf16.msra.mxu0 0
    %3301 = vmatprep.subr.bf16.mxu0 0
    %3302 = vmatpush1.bf16.msra.mxu0 0
    %3303 = vmatprep.subr.bf16.mxu0 0
    %3304 = vmatpush1.bf16.msra.mxu0 0
    %3305 = vmatprep.mubr.bf16.mxu0 0
    %3306 = vmatmul.mubr.bf16.gmra.mrb[0].mxu0 %v3223
    %v3307 = vpop.f32.mrb[0].mxu0
    %v3308 = vadd.f32 %v3224, %v3307
    %v3309 = vpop.f32.mrb[0].mxu0
    %v3310 = vpop.f32.mrb[0].mxu0
    %v3311 = vpop.f32.mrb[0].mxu0
    %3312 = vdwg.mxu0
    %v3313 = vld [vmem:[#allocation2 + $0x140] sm:$0xf]
    %v3314 = vld [vmem:[#allocation2 + $0x148] sm:$0xf]
    %v3315 = vld [vmem:[#allocation2 + $0x150] sm:$0xf]
    %v3316 = vld [vmem:[#allocation2 + $0x158] sm:$0xf]
    %v3317 = vld [vmem:[#allocation2 + $0x160] sm:$0xf]
    %v3318 = vld [vmem:[#allocation2 + $0x168] sm:$0xf]
    %v3319 = vld [vmem:[#allocation2 + $0x170] sm:$0xf]
    %v3320 = vld [vmem:[#allocation2 + $0x178] sm:$0xf]
    %v3321 = vld [vmem:[#allocation2 + $0x180] sm:$0xf]
    %v3322 = vld [vmem:[#allocation2 + $0x188] sm:$0xf]
    %v3323 = vld [vmem:[#allocation2 + $0x190] sm:$0xf]
    %v3324 = vld [vmem:[#allocation2 + $0x198] sm:$0xf]
    %v3325 = vld [vmem:[#allocation2 + $0x1a0] sm:$0xf]
    %v3326 = vld [vmem:[#allocation2 + $0x1a8] sm:$0xf]
    %v3327 = vld [vmem:[#allocation2 + $0x1b0] sm:$0xf]
    %v3328 = vld [vmem:[#allocation2 + $0x1b8] sm:$0xf]
    %v3329 = vpack.c.bf16 %v2849, %v2847
    %v3330 = vld [vmem:[%s2 + $0x5] ss:$0 sm:$0xff]
    %v3347 = vunpack.c.l.b16 %v3313
    %v3348 = vunpack.c.l.b16 %v3314
    %v3349 = vunpack.c.l.b16 %v3315
    %v3350 = vunpack.c.l.b16 %v3316
    %v3351 = vunpack.c.l.b16 %v3317
    %v3352 = vunpack.c.l.b16 %v3318
    %v3353 = vunpack.c.l.b16 %v3319
    %v3354 = vunpack.c.l.b16 %v3320
    %v3355 = vunpack.c.l.b16 %v3321
    %v3356 = vunpack.c.l.b16 %v3322
    %v3357 = vunpack.c.l.b16 %v3323
    %v3358 = vunpack.c.l.b16 %v3324
    %v3359 = vunpack.c.l.b16 %v3325
    %v3360 = vunpack.c.l.b16 %v3326
    %v3361 = vunpack.c.l.b16 %v3327
    %v3362 = vunpack.c.l.b16 %v3328
    %v3363 = vpack.c.b16 %v3348, %v3347
    %v3364 = vpack.c.b16 %v3350, %v3349
    %v3365 = vpack.c.b16 %v3352, %v3351
    %v3366 = vpack.c.b16 %v3354, %v3353
    %v3367 = vpack.c.b16 %v3356, %v3355
    %v3368 = vpack.c.b16 %v3358, %v3357
    %v3369 = vpack.c.b16 %v3360, %v3359
    %v3370 = vpack.c.b16 %v3362, %v3361
    %3379 = vmatprep.subr.bf16.mxu0 0
    %3380 = vmatpush1.bf16.msra.mxu0 %v3363
    %3381 = vmatprep.subr.bf16.mxu0 0
    %3382 = vmatpush1.bf16.msra.mxu0 %v3364
    %3383 = vmatprep.subr.bf16.mxu0 0
    %3384 = vmatpush1.bf16.msra.mxu0 %v3365
    %3385 = vmatprep.subr.bf16.mxu0 0
    %3386 = vmatpush1.bf16.msra.mxu0 %v3366
    %3387 = vmatprep.subr.bf16.mxu0 0
    %3388 = vmatpush1.bf16.msra.mxu0 %v3367
    %3389 = vmatprep.subr.bf16.mxu0 0
    %3390 = vmatpush1.bf16.msra.mxu0 %v3368
    %3391 = vmatprep.subr.bf16.mxu0 0
    %3392 = vmatpush1.bf16.msra.mxu0 %v3369
    %3393 = vmatprep.subr.bf16.mxu0 0
    %3394 = vmatpush1.bf16.msra.mxu0 %v3370
    %3395 = vmatprep.subr.bf16.mxu0 0
    %3396 = vmatpush1.bf16.msra.mxu0 0
    %3397 = vmatprep.subr.bf16.mxu0 0
    %3398 = vmatpush1.bf16.msra.mxu0 0
    %3399 = vmatprep.subr.bf16.mxu0 0
    %3400 = vmatpush1.bf16.msra.mxu0 0
    %3401 = vmatprep.subr.bf16.mxu0 0
    %3402 = vmatpush1.bf16.msra.mxu0 0
    %3403 = vmatprep.subr.bf16.mxu0 0
    %3404 = vmatpush1.bf16.msra.mxu0 0
    %3405 = vmatprep.subr.bf16.mxu0 0
    %3406 = vmatpush1.bf16.msra.mxu0 0
    %3407 = vmatprep.subr.bf16.mxu0 0
    %3408 = vmatpush1.bf16.msra.mxu0 0
    %3409 = vmatprep.subr.bf16.mxu0 0
    %3410 = vmatpush1.bf16.msra.mxu0 0
    %3411 = vmatprep.mubr.bf16.mxu0 0
    %3412 = vmatmul.mubr.bf16.gmra.mrb[0].mxu0 %v3329
    %v3413 = vpop.f32.mrb[0].mxu0
    %v3414 = vadd.f32 %v3330, %v3413
    %v3415 = vpop.f32.mrb[0].mxu0
    %v3416 = vpop.f32.mrb[0].mxu0
    %v3417 = vadd.f32 %v3330, %v3416
    %v3418 = vpop.f32.mrb[0].mxu0
    %3419 = vdwg.mxu0
    %v3420 = vmul.f32 %v3414, 0.5
    %v3421 = vmul.f32 %v3417, 0.5
    %v3422 = vmul.f32 %v3414, 0.70710677
    %v3423 = vmul.f32 %v3417, 0.70710677
    %v3424 = verf.f32.pop %v3422
    %v3425 = verf.f32.pop %v3423
    %v3426 = vadd.f32 %v3424, 1.0
    %v3427 = vadd.f32 %v3425, 1.0
    %v3428 = vmul.f32 %v3420, %v3426
    %v3429 = vmul.f32 %v3421, %v3427
    %v3430 = vld [vmem:[#allocation2 + $0x1c0] sm:$0xf]
    %v3431 = vld [vmem:[#allocation2 + $0x1c8] sm:$0xf]
    %v3432 = vld [vmem:[#allocation2 + $0x1d0] sm:$0xf]
    %v3433 = vld [vmem:[#allocation2 + $0x1d8] sm:$0xf]
    %v3434 = vld [vmem:[#allocation2 + $0x1e0] sm:$0xf]
    %v3435 = vld [vmem:[#allocation2 + $0x1e8] sm:$0xf]
    %v3436 = vld [vmem:[#allocation2 + $0x1f0] sm:$0xf]
    %v3437 = vld [vmem:[#allocation2 + $0x1f8] sm:$0xf]
    %v3438 = vld [vmem:[#allocation2 + $0x200] sm:$0xf]
    %v3439 = vld [vmem:[#allocation2 + $0x208] sm:$0xf]
    %v3440 = vld [vmem:[#allocation2 + $0x210] sm:$0xf]
    %v3441 = vld [vmem:[#allocation2 + $0x218] sm:$0xf]
    %v3442 = vld [vmem:[#allocation2 + $0x220] sm:$0xf]
    %v3443 = vld [vmem:[#allocation2 + $0x228] sm:$0xf]
    %v3444 = vld [vmem:[#allocation2 + $0x230] sm:$0xf]
    %v3445 = vld [vmem:[#allocation2 + $0x238] sm:$0xf]
    %v3446 = vpack.c.bf16 %v3429, %v3428
    %v3447 = vld [vmem:[%s2 + $0x6] ss:$0 sm:$0xff]
    %v3464 = vunpack.c.l.b16 %v3430
    %v3465 = vunpack.c.l.b16 %v3431
    %v3466 = vunpack.c.l.b16 %v3432
    %v3467 = vunpack.c.l.b16 %v3433
    %v3468 = vunpack.c.l.b16 %v3434
    %v3469 = vunpack.c.l.b16 %v3435
    %v3470 = vunpack.c.l.b16 %v3436
    %v3471 = vunpack.c.l.b16 %v3437
    %v3472 = vunpack.c.l.b16 %v3438
    %v3473 = vunpack.c.l.b16 %v3439
    %v3474 = vunpack.c.l.b16 %v3440
    %v3475 = vunpack.c.l.b16 %v3441
    %v3476 = vunpack.c.l.b16 %v3442
    %v3477 = vunpack.c.l.b16 %v3443
    %v3478 = vunpack.c.l.b16 %v3444
    %v3479 = vunpack.c.l.b16 %v3445
    %v3480 = vpack.c.b16 %v3465, %v3464
    %v3481 = vpack.c.b16 %v3467, %v3466
    %v3482 = vpack.c.b16 %v3469, %v3468
    %v3483 = vpack.c.b16 %v3471, %v3470
    %v3484 = vpack.c.b16 %v3473, %v3472
    %v3485 = vpack.c.b16 %v3475, %v3474
    %v3486 = vpack.c.b16 %v3477, %v3476
    %v3487 = vpack.c.b16 %v3479, %v3478
    %3496 = vmatprep.subr.bf16.mxu0 0
    %3497 = vmatpush1.bf16.msra.mxu0 %v3480
    %3498 = vmatprep.subr.bf16.mxu0 0
    %3499 = vmatpush1.bf16.msra.mxu0 %v3481
    %3500 = vmatprep.subr.bf16.mxu0 0
    %3501 = vmatpush1.bf16.msra.mxu0 %v3482
    %3502 = vmatprep.subr.bf16.mxu0 0
    %3503 = vmatpush1.bf16.msra.mxu0 %v3483
    %3504 = vmatprep.subr.bf16.mxu0 0
    %3505 = vmatpush1.bf16.msra.mxu0 %v3484
    %3506 = vmatprep.subr.bf16.mxu0 0
    %3507 = vmatpush1.bf16.msra.mxu0 %v3485
    %3508 = vmatprep.subr.bf16.mxu0 0
    %3509 = vmatpush1.bf16.msra.mxu0 %v3486
    %3510 = vmatprep.subr.bf16.mxu0 0
    %3511 = vmatpush1.bf16.msra.mxu0 %v3487
    %3512 = vmatprep.subr.bf16.mxu0 0
    %3513 = vmatpush1.bf16.msra.mxu0 0
    %3514 = vmatprep.subr.bf16.mxu0 0
    %3515 = vmatpush1.bf16.msra.mxu0 0
    %3516 = vmatprep.subr.bf16.mxu0 0
    %3517 = vmatpush1.bf16.msra.mxu0 0
    %3518 = vmatprep.subr.bf16.mxu0 0
    %3519 = vmatpush1.bf16.msra.mxu0 0
    %3520 = vmatprep.subr.bf16.mxu0 0
    %3521 = vmatpush1.bf16.msra.mxu0 0
    %3522 = vmatprep.subr.bf16.mxu0 0
    %3523 = vmatpush1.bf16.msra.mxu0 0
    %3524 = vmatprep.subr.bf16.mxu0 0
    %3525 = vmatpush1.bf16.msra.mxu0 0
    %3526 = vmatprep.subr.bf16.mxu0 0
    %3527 = vmatpush1.bf16.msra.mxu0 0
    %3528 = vmatprep.mubr.bf16.mxu0 0
    %3529 = vmatmul.mubr.bf16.gmra.mrb[0].mxu0 %v3446
    %v3530 = vpop.f32.mrb[0].mxu0
    %v3531 = vadd.f32 %v3447, %v3530
    %v3532 = vpop.f32.mrb[0].mxu0
    %v3533 = vpop.f32.mrb[0].mxu0
    %v3534 = vadd.f32 %v3447, %v3533
    %v3535 = vpop.f32.mrb[0].mxu0
    %3536 = vdwg.mxu0
    %vm3537 = vcmask 1041408
    %v3538 = vsel %vm3537, %v3308, 0.0
    %3539 = vst [vmem:[%s3] sm:$0xff] %v3531
    %3540 = vst [vmem:[%s3 + $0x8] sm:$0xff] %v3534
    %3541 = vst [vmem:[%s3 + $0x10] sm:$0xff] %v3538
    // Predicated region
    $region18: #{actor_critic_forward.1} parent=1 // pred_check
      _
    $region19: #{actor_critic_forward.1} parent=1 // pred_check_branch
      %3543 = sbr.rel (0) target = $region21
    $region20: #{actor_critic_forward.1} parent=1 // pred_region
      _
    $region21: #{actor_critic_forward.1} parent=1 // pred_fallthru
      _
    // Predicated region
    $region22: #{actor_critic_forward.1} parent=1 // pred_check
      _
    $region23: #{actor_critic_forward.1} parent=1 // pred_check_branch
      %3545 = sbr.rel (0) target = $region25
    $region24: #{actor_critic_forward.1} parent=1 // pred_region
      _
    $region25: #{actor_critic_forward.1} parent=1 // pred_fallthru
      _
    %3546 = vsyncpa [#allocation3], 1

</llo_original>
